<compile_context>
chip_gen: v7x
topology: tpu7x:2x2x1
jax: 0.10.0
libtpu: 0.0.40
codegen_flags: <defaults>
</compile_context>

<pallas_src>
import jax
import jax.numpy as jnp
from jax import lax
from jax.experimental import pallas as pl
from jax.experimental.pallas import tpu as pltpu

NUM_LABELS = 30
LANE = 128   # per-gate / per-projection column padding (one vreg lane group)
LPAD = 128   # lane-dense padded logits width


def _gelu(x):
    # TODO(synk): tanh-approx GELU; exact erf GELU of some HF backbones differs slightly.
    return 0.5 * x * (1.0 + jnp.tanh(0.7978845608028654 * (x + 0.044715 * x * x * x)))


def _dot(a, b):
    # bf16 MXU operands, f32 accumulate
    return jnp.dot(a.astype(jnp.bfloat16), b.astype(jnp.bfloat16),
                   preferred_element_type=jnp.float32)


def _dot_t(a, b):
    # contract last dim of both: (M, D) x (N, D) -> (M, N) (attention scores)
    return lax.dot_general(a.astype(jnp.bfloat16), b.astype(jnp.bfloat16),
                           (((1,), (1,)), ((), ())),
                           preferred_element_type=jnp.float32)


# ----------------------------------------------------------------------------
# Fused kernel: encoder layer -> bi-GRU (final hidden states) -> FC, per batch block.
# ----------------------------------------------------------------------------
def make_fused_kernel(Bb, S):
    def fused_kernel(x_ref, mbias_ref,
                     wqkv_ref, bqkv_ref, wo_ref, bo_ref,
                     ln1_g_ref, ln1_b_ref, w1_ref, b1_ref, w2_ref, b2_ref,
                     ln2_g_ref, ln2_b_ref,
                     wi_ref, bi_ref, whbd_ref, bh_ref,
                     wfc_ref, bfc_ref,
                     out_ref):
        G = LANE
        x = x_ref[...]              # (Bb*S, H) f32, batch-major rows (b*S + t)
        bias = mbias_ref[0]         # (Bb*S, Bb*S) additive mask (cross-batch + key padding)

        # ---------------- encoder layer (synthetic backbone stand-in) ----------------
        qkv = _dot(x, wqkv_ref[...]) + bqkv_ref[...]           # (M, 3*128); scale folded into q
        q = qkv[:, 0:G]
        k = qkv[:, G:2 * G]
        v = qkv[:, 2 * G:3 * G]

        scores = _dot_t(q, k) + bias                           # (M, M)
        m = jnp.max(scores, axis=-1, keepdims=True)
        p = jnp.exp(scores - m)
        attn = p * pl.reciprocal(jnp.sum(p, axis=-1, keepdims=True), approx=True)
        ctx = _dot(attn, v)                                    # (M, 128)
        attn_out = _dot(ctx, wo_ref[...]) + bo_ref[...]        # (M, H)

        def layer_norm(y, g, b):
            mu = jnp.mean(y, axis=-1, keepdims=True)
            var = jnp.mean((y - mu) ** 2, axis=-1, keepdims=True)
            return (y - mu) * lax.rsqrt(var + 1e-12) * g + b

        x1 = layer_norm(x + attn_out, ln1_g_ref[...], ln1_b_ref[...])
        h1 = _gelu(_dot(x1, w1_ref[...]) + b1_ref[...])
        ffn = _dot(h1, w2_ref[...]) + b2_ref[...]
        hidden = layer_norm(x1 + ffn, ln2_g_ref[...], ln2_b_ref[...])     # (M, H)

        # ---------------- bidirectional GRU ----------------
        # Hoisted input projections, both directions, gates lane-aligned:
        # columns [fwd r | fwd z | fwd n | bwd r | bwd z | bwd n], 128 lanes per gate.
        xproj = _dot(hidden, wi_ref[...]) + bi_ref[...]        # (Bb*S, 6*128)

        # Per-timestep (Bb, 6*128) slabs. Depend only on xproj -> off the serial
        # h-dependency critical path; the compiler overlaps them with the recurrence.
        xps = [jnp.concatenate(
                   [xproj[b * S + t:b * S + t + 1, :] for b in range(Bb)], axis=0)
               for t in range(S)]

        whbd = whbd_ref[...]        # (2*128, 6*128) block-diagonal [fwd | bwd]
        bh = bh_ref[...]

        # state: lanes [0:128) = h_fwd, lanes [128:256) = h_bwd (first H lanes used each)
        h_cat = jnp.zeros((Bb, 2 * G), jnp.float32)
        for t in range(S):          # fully unrolled (S static and small)
            hp = _dot(h_cat, whbd) + bh                        # one fused hidden matmul, (Bb, 6*128)
            xf = xps[t]                                        # fwd consumes timestep t
            xb = xps[S - 1 - t]                                # bwd consumes timestep S-1-t
            rf = jax.nn.sigmoid(xf[:, 0:G] + hp[:, 0:G])
            zf = jax.nn.sigmoid(xf[:, G:2 * G] + hp[:, G:2 * G])
            nf = jnp.tanh(xf[:, 2 * G:3 * G] + rf * hp[:, 2 * G:3 * G])
            rb = jax.nn.sigmoid(xb[:, 3 * G:4 * G] + hp[:, 3 * G:4 * G])
            zb = jax.nn.sigmoid(xb[:, 4 * G:5 * G] + hp[:, 4 * G:5 * G])
            nb = jnp.tanh(xb[:, 5 * G:6 * G] + rb * hp[:, 5 * G:6 * G])
            hf = (1.0 - zf) * nf + zf * h_cat[:, 0:G]
            hb = (1.0 - zb) * nb + zb * h_cat[:, G:2 * G]
            h_cat = jnp.concatenate([hf, hb], axis=1)          # whole-vreg pieces, no lane shuffle

        # ---------------- concat-free FC head, lane-dense (Bb, 128) ----------------
        logits = _dot(h_cat, wfc_ref[...]) + bfc_ref[...]
        out_ref[0] = logits.astype(out_ref.dtype)

    return fused_kernel


# ----------------------------------------------------------------------------
# Wrapper
# ----------------------------------------------------------------------------
def model_forward(input_ids, attention_mask, params, *, num_blocks=None):
    B, S = input_ids.shape
    H = params["emb"].shape[1]
    if num_blocks is None:
        # v7x has 2 TensorCores -> 2 parallel blocks. On single-TC parts (v5e/v6e)
        # pass num_blocks=1 to collapse the grid into one block.
        num_blocks = 2 if B % 2 == 0 else 1
    assert B % num_blocks == 0
    Bb = B // num_blocks
    BS = Bb * S

    # embedding lookup is glue; everything else runs inside one fused Pallas kernel
    x = (params["emb"][input_ids] + params["pos"][None, :S, :]).astype(jnp.float32)
    x_flat = x.reshape(B * S, H)                                      # batch-major rows

    # additive attention bias per block: blocks cross-batch attention within the
    # flattened (Bb*S) rows and applies the key-side padding mask.
    idx = jnp.arange(BS)
    same_batch = (idx[:, None] // S) == (idx[None, :] // S)           # (BS, BS)
    key_valid = attention_mask.reshape(num_blocks, BS) > 0            # (nblk, BS)
    mbias = jnp.where(same_batch[None, :, :] & key_valid[:, None, :],
                      0.0, -1e9).astype(jnp.float32)                  # (nblk, BS, BS)

    weights = list(params["enc"]) + list(params["gru"]) + [params["wfc"], params["bfc"]]

    def full_spec(a):
        nd = a.ndim
        return pl.BlockSpec(a.shape, (lambda nd_: (lambda b: (0,) * nd_))(nd))

    in_specs = ([pl.BlockSpec((BS, H), lambda b: (b, 0)),
                 pl.BlockSpec((1, BS, BS), lambda b: (b, 0, 0))]
                + [full_spec(w) for w in weights])

    out = pl.pallas_call(
        make_fused_kernel(Bb, S),
        out_shape=jax.ShapeDtypeStruct((num_blocks, Bb, LPAD), jnp.float32),
        grid=(num_blocks,),
        in_specs=in_specs,
        out_specs=pl.BlockSpec((1, Bb, LPAD), lambda b: (b, 0, 0)),
        compiler_params=pltpu.CompilerParams(dimension_semantics=("parallel",)),
    )(x_flat, mbias, *weights)

    return {"logits": out.reshape(B, LPAD)[:, :NUM_LABELS]}


# ----------------------------------------------------------------------------
# Deterministic synthetic parameters (lane-aligned / padded layouts)
# ----------------------------------------------------------------------------
def init_params(key, vocab, max_s, H, F, L):
    keys = jax.random.split(key, 40)
    std = 0.02
    nrm = lambda k, s: jax.random.normal(k, s, jnp.float32) * std
    zeros = lambda s: jnp.zeros(s, jnp.float32)
    ones = lambda s: jnp.ones(s, jnp.float32)
    bf16 = jnp.bfloat16
    G = LANE

    def lane_pad(a, width):
        return jnp.pad(a, ((0, 0), (0, width - a.shape[-1])))

    def blockify(mats, width=G):
        # each matrix gets its own `width`-lane column block (whole-vreg slices in kernel)
        return jnp.concatenate([lane_pad(m, width) for m in mats], axis=1)

    # ---- synthetic encoder layer (backbone stand-in) ----
    scale = H ** -0.5                        # attention scale folded into the q projection
    wq = nrm(keys[2], (H, H)) * scale
    wk = nrm(keys[3], (H, H))
    wv = nrm(keys[4], (H, H))
    enc = [
        blockify([wq, wk, wv]).astype(bf16),                                 # wqkv (H, 3*128)
        zeros((1, 3 * G)),                                                   # bqkv
        jnp.pad(nrm(keys[5], (H, H)), ((0, G - H), (0, 0))).astype(bf16),    # wo (128, H)
        zeros((1, H)),                                                       # bo
        ones((1, H)), zeros((1, H)),                                         # ln1 gamma/beta
        nrm(keys[6], (H, F)).astype(bf16), zeros((1, F)),                    # w1, b1
        nrm(keys[7], (F, H)).astype(bf16), zeros((1, H)),                    # w2, b2
        ones((1, H)), zeros((1, H)),                                         # ln2 gamma/beta
    ]

    # ---- bidirectional GRU, gates lane-aligned to their own 128-lane column block ----
    # column order: [fwd r | fwd z | fwd n | bwd r | bwd z | bwd n]
    # TODO(synk): real nn.GRU checkpoints store (3H, H) weight_ih/hh; loading would transpose.
    wi = blockify([nrm(keys[8 + g], (H, H)) for g in range(6)]).astype(bf16)   # (H, 6*128)
    bi = blockify([nrm(keys[14 + g], (1, H)) for g in range(6)])               # (1, 6*128)
    wh_f = blockify([nrm(keys[20 + g], (H, H)) for g in range(3)])             # (H, 3*128)
    wh_b = blockify([nrm(keys[23 + g], (H, H)) for g in range(3)])             # (H, 3*128)
    z3 = jnp.zeros((H, 3 * G), jnp.float32)
    whbd = jnp.concatenate(
        [jnp.pad(jnp.concatenate([wh_f, z3], axis=1), ((0, G - H), (0, 0))),
         jnp.pad(jnp.concatenate([z3, wh_b], axis=1), ((0, G - H), (0, 0)))],
        axis=0).astype(bf16)                                                   # (2*128, 6*128)
    bh = blockify([nrm(keys[26 + g], (1, H)) for g in range(6)])               # (1, 6*128)
    gru = [wi, bi, whbd, bh]

    # ---- FC head: fwd/bwd halves stacked along rows (concat-free), lane-padded logits ----
    wfc_f = lane_pad(nrm(keys[32], (H, L)), LPAD)
    wfc_b = lane_pad(nrm(keys[33], (H, L)), LPAD)
    wfc = jnp.concatenate([jnp.pad(wfc_f, ((0, G - H), (0, 0))),
                           jnp.pad(wfc_b, ((0, G - H), (0, 0)))], axis=0).astype(bf16)  # (256, 128)
    bfc = lane_pad(zeros((1, L)), LPAD)

    return {
        "emb": nrm(keys[0], (vocab, H)),
        "pos": nrm(keys[1], (max_s, H)),
        "enc": enc,
        "gru": gru,
        "wfc": wfc,
        "bfc": bfc,
    }


if __name__ == "__main__":
    B, S, H, F, VOCAB, L = 8, 8, 32, 64, 100, NUM_LABELS
    key = jax.random.PRNGKey(0)
    k_ids, k_param = jax.random.split(key)

    input_ids = jax.random.randint(k_ids, (B, S), 0, VOCAB, dtype=jnp.int32)
    attention_mask = jnp.ones((B, S), jnp.int32).at[1, 6:].set(0).at[5, 5:].set(0)

    params = init_params(k_param, VOCAB, S, H, F, L)

    out = model_forward(input_ids, attention_mask, params)
    logits = jax.block_until_ready(out["logits"])

    assert logits.shape == (B, L), logits.shape
    assert bool(jnp.all(jnp.isfinite(logits)))
    print("KERNEL_OK")
</pallas_src>

<mosaic_0001>
module attributes {stable_mosaic.version = 11 : i64} {
  func.func @fused_kernel(%arg0: i32, %arg1: memref<32x32xf32, #tpu.memory_space<vmem>>, %arg2: memref<1x32x32xf32, #tpu.memory_space<vmem>>, %arg3: memref<32x384xbf16, #tpu.memory_space<vmem>>, %arg4: memref<1x384xf32, #tpu.memory_space<vmem>>, %arg5: memref<128x32xbf16, #tpu.memory_space<vmem>>, %arg6: memref<1x32xf32, #tpu.memory_space<vmem>>, %arg7: memref<1x32xf32, #tpu.memory_space<vmem>>, %arg8: memref<1x32xf32, #tpu.memory_space<vmem>>, %arg9: memref<32x64xbf16, #tpu.memory_space<vmem>>, %arg10: memref<1x64xf32, #tpu.memory_space<vmem>>, %arg11: memref<64x32xbf16, #tpu.memory_space<vmem>>, %arg12: memref<1x32xf32, #tpu.memory_space<vmem>>, %arg13: memref<1x32xf32, #tpu.memory_space<vmem>>, %arg14: memref<1x32xf32, #tpu.memory_space<vmem>>, %arg15: memref<32x768xbf16, #tpu.memory_space<vmem>>, %arg16: memref<1x768xf32, #tpu.memory_space<vmem>>, %arg17: memref<256x768xbf16, #tpu.memory_space<vmem>>, %arg18: memref<1x768xf32, #tpu.memory_space<vmem>>, %arg19: memref<256x128xbf16, #tpu.memory_space<vmem>>, %arg20: memref<1x128xf32, #tpu.memory_space<vmem>>, %arg21: memref<1x4x128xf32, #tpu.memory_space<vmem>>) attributes {dimension_semantics = [#tpu.dimension_semantics<parallel>], iteration_bounds = array<i64: 2>, scalar_prefetch = 0 : i64, scratch_operands = 0 : i64, tpu.core_type = #tpu.core_type<tc>, window_params = [{transform_indices = @transform_0, window_bounds = array<i64: 32, 32>}, {transform_indices = @transform_1, window_bounds = array<i64: 1, 32, 32>}, {pipeline_mode = #tpu.pipeline_mode<synchronous>, transform_indices = @transform_2, window_bounds = array<i64: 32, 384>}, {pipeline_mode = #tpu.pipeline_mode<synchronous>, transform_indices = @transform_3, window_bounds = array<i64: 1, 384>}, {pipeline_mode = #tpu.pipeline_mode<synchronous>, transform_indices = @transform_4, window_bounds = array<i64: 128, 32>}, {pipeline_mode = #tpu.pipeline_mode<synchronous>, transform_indices = @transform_5, window_bounds = array<i64: 1, 32>}, {pipeline_mode = #tpu.pipeline_mode<synchronous>, transform_indices = @transform_6, window_bounds = array<i64: 1, 32>}, {pipeline_mode = #tpu.pipeline_mode<synchronous>, transform_indices = @transform_7, window_bounds = array<i64: 1, 32>}, {pipeline_mode = #tpu.pipeline_mode<synchronous>, transform_indices = @transform_8, window_bounds = array<i64: 32, 64>}, {pipeline_mode = #tpu.pipeline_mode<synchronous>, transform_indices = @transform_9, window_bounds = array<i64: 1, 64>}, {pipeline_mode = #tpu.pipeline_mode<synchronous>, transform_indices = @transform_10, window_bounds = array<i64: 64, 32>}, {pipeline_mode = #tpu.pipeline_mode<synchronous>, transform_indices = @transform_11, window_bounds = array<i64: 1, 32>}, {pipeline_mode = #tpu.pipeline_mode<synchronous>, transform_indices = @transform_12, window_bounds = array<i64: 1, 32>}, {pipeline_mode = #tpu.pipeline_mode<synchronous>, transform_indices = @transform_13, window_bounds = array<i64: 1, 32>}, {pipeline_mode = #tpu.pipeline_mode<synchronous>, transform_indices = @transform_14, window_bounds = array<i64: 32, 768>}, {pipeline_mode = #tpu.pipeline_mode<synchronous>, transform_indices = @transform_15, window_bounds = array<i64: 1, 768>}, {pipeline_mode = #tpu.pipeline_mode<synchronous>, transform_indices = @transform_16, window_bounds = array<i64: 256, 768>}, {pipeline_mode = #tpu.pipeline_mode<synchronous>, transform_indices = @transform_17, window_bounds = array<i64: 1, 768>}, {pipeline_mode = #tpu.pipeline_mode<synchronous>, transform_indices = @transform_18, window_bounds = array<i64: 256, 128>}, {pipeline_mode = #tpu.pipeline_mode<synchronous>, transform_indices = @transform_19, window_bounds = array<i64: 1, 128>}, {transform_indices = @transform_20, window_bounds = array<i64: 1, 4, 128>}]} {
    %c0 = arith.constant 0 : index
    %c0_0 = arith.constant 0 : index
    %0 = vector.load %arg1[%c0, %c0_0] : memref<32x32xf32, #tpu.memory_space<vmem>>, vector<32x32xf32>
    %c0_1 = arith.constant 0 : index
    %c0_2 = arith.constant 0 : index
    %c0_3 = arith.constant 0 : index
    %1 = vector.load %arg2[%c0_1, %c0_2, %c0_3] : memref<1x32x32xf32, #tpu.memory_space<vmem>>, vector<1x32x32xf32>
    %2 = vector.shape_cast %1 : vector<1x32x32xf32> to vector<32x32xf32>
    %c0_4 = arith.constant 0 : index
    %c0_5 = arith.constant 0 : index
    %3 = vector.load %arg3[%c0_4, %c0_5] : memref<32x384xbf16, #tpu.memory_space<vmem>>, vector<32x384xbf16>
    %4 = arith.truncf %0 : vector<32x32xf32> to vector<32x32xbf16>
    %cst = arith.constant dense<0.000000e+00> : vector<32x384xf32>
    %5 = tpu.matmul %4, %3, %cst {dimension_numbers = #tpu.dot_dimension_numbers<[1], [0], [0], [1], [0, 0, 1, 1], [], []>} : vector<32x32xbf16>, vector<32x384xbf16>, vector<32x384xf32> -> vector<32x384xf32>
    %c0_6 = arith.constant 0 : index
    %c0_7 = arith.constant 0 : index
    %6 = vector.load %arg4[%c0_6, %c0_7] : memref<1x384xf32, #tpu.memory_space<vmem>>, vector<1x384xf32>
    %7 = vector.broadcast %6 : vector<1x384xf32> to vector<32x384xf32>
    %8 = arith.addf %5, %7 : vector<32x384xf32>
    %9 = vector.extract_strided_slice %8 {offsets = [0, 0], sizes = [32, 128], strides = [1, 1]} : vector<32x384xf32> to vector<32x128xf32>
    %10 = vector.extract_strided_slice %8 {offsets = [0, 128], sizes = [32, 128], strides = [1, 1]} : vector<32x384xf32> to vector<32x128xf32>
    %11 = vector.extract_strided_slice %8 {offsets = [0, 256], sizes = [32, 128], strides = [1, 1]} : vector<32x384xf32> to vector<32x128xf32>
    %12 = arith.truncf %9 : vector<32x128xf32> to vector<32x128xbf16>
    %13 = arith.truncf %10 : vector<32x128xf32> to vector<32x128xbf16>
    %cst_8 = arith.constant dense<0.000000e+00> : vector<32x32xf32>
    %14 = tpu.matmul %12, %13, %cst_8 {dimension_numbers = #tpu.dot_dimension_numbers<[1], [1], [0], [0], [0, 0, 1, 0], [], []>} : vector<32x128xbf16>, vector<32x128xbf16>, vector<32x32xf32> -> vector<32x32xf32>
    %15 = arith.addf %14, %2 : vector<32x32xf32>
    %cst_9 = arith.constant dense<0xFF800000> : vector<32xf32>
    %16 = vector.multi_reduction <maximumf>, %15, %cst_9 [1] : vector<32x32xf32> to vector<32xf32>
    %17 = vector.shape_cast %16 : vector<32xf32> to vector<32x1xf32>
    %18 = vector.broadcast %17 : vector<32x1xf32> to vector<32x32xf32>
    %19 = arith.subf %15, %18 : vector<32x32xf32>
    %20 = math.exp %19 : vector<32x32xf32>
    %cst_10 = arith.constant dense<0.000000e+00> : vector<32xf32>
    %21 = vector.multi_reduction <add>, %20, %cst_10 [1] : vector<32x32xf32> to vector<32xf32>
    %22 = vector.shape_cast %21 : vector<32xf32> to vector<32x1xf32>
    %23 = tpu.reciprocal %22 {approx = true} : vector<32x1xf32> -> vector<32x1xf32>
    %24 = vector.broadcast %23 : vector<32x1xf32> to vector<32x32xf32>
    %25 = arith.mulf %20, %24 : vector<32x32xf32>
    %26 = arith.truncf %25 : vector<32x32xf32> to vector<32x32xbf16>
    %27 = arith.truncf %11 : vector<32x128xf32> to vector<32x128xbf16>
    %cst_11 = arith.constant dense<0.000000e+00> : vector<32x128xf32>
    %28 = tpu.matmul %26, %27, %cst_11 {dimension_numbers = #tpu.dot_dimension_numbers<[1], [0], [0], [1], [0, 0, 1, 1], [], []>} : vector<32x32xbf16>, vector<32x128xbf16>, vector<32x128xf32> -> vector<32x128xf32>
    %c0_12 = arith.constant 0 : index
    %c0_13 = arith.constant 0 : index
    %29 = vector.load %arg5[%c0_12, %c0_13] : memref<128x32xbf16, #tpu.memory_space<vmem>>, vector<128x32xbf16>
    %30 = arith.truncf %28 : vector<32x128xf32> to vector<32x128xbf16>
    %cst_14 = arith.constant dense<0.000000e+00> : vector<32x32xf32>
    %31 = tpu.matmul %30, %29, %cst_14 {dimension_numbers = #tpu.dot_dimension_numbers<[1], [0], [0], [1], [0, 0, 1, 1], [], []>} : vector<32x128xbf16>, vector<128x32xbf16>, vector<32x32xf32> -> vector<32x32xf32>
    %c0_15 = arith.constant 0 : index
    %c0_16 = arith.constant 0 : index
    %32 = vector.load %arg6[%c0_15, %c0_16] : memref<1x32xf32, #tpu.memory_space<vmem>>, vector<1x32xf32>
    %33 = vector.broadcast %32 : vector<1x32xf32> to vector<32x32xf32>
    %34 = arith.addf %31, %33 : vector<32x32xf32>
    %35 = arith.addf %0, %34 : vector<32x32xf32>
    %c0_17 = arith.constant 0 : index
    %c0_18 = arith.constant 0 : index
    %36 = vector.load %arg7[%c0_17, %c0_18] : memref<1x32xf32, #tpu.memory_space<vmem>>, vector<1x32xf32>
    %c0_19 = arith.constant 0 : index
    %c0_20 = arith.constant 0 : index
    %37 = vector.load %arg8[%c0_19, %c0_20] : memref<1x32xf32, #tpu.memory_space<vmem>>, vector<1x32xf32>
    %cst_21 = arith.constant dense<0.000000e+00> : vector<32xf32>
    %38 = vector.multi_reduction <add>, %35, %cst_21 [1] : vector<32x32xf32> to vector<32xf32>
    %39 = vector.shape_cast %38 : vector<32xf32> to vector<32x1xf32>
    %cst_22 = arith.constant 3.200000e+01 : f32
    %40 = vector.broadcast %cst_22 : f32 to vector<32x1xf32>
    %41 = arith.divf %39, %40 : vector<32x1xf32>
    %42 = vector.broadcast %41 : vector<32x1xf32> to vector<32x32xf32>
    %43 = arith.subf %35, %42 : vector<32x32xf32>
    %44 = arith.mulf %43, %43 : vector<32x32xf32>
    %cst_23 = arith.constant dense<0.000000e+00> : vector<32xf32>
    %45 = vector.multi_reduction <add>, %44, %cst_23 [1] : vector<32x32xf32> to vector<32xf32>
    %46 = vector.shape_cast %45 : vector<32xf32> to vector<32x1xf32>
    %cst_24 = arith.constant 3.200000e+01 : f32
    %47 = vector.broadcast %cst_24 : f32 to vector<32x1xf32>
    %48 = arith.divf %46, %47 : vector<32x1xf32>
    %49 = vector.broadcast %41 : vector<32x1xf32> to vector<32x32xf32>
    %50 = arith.subf %35, %49 : vector<32x32xf32>
    %cst_25 = arith.constant 9.99999996E-13 : f32
    %51 = vector.broadcast %cst_25 : f32 to vector<32x1xf32>
    %52 = arith.addf %48, %51 : vector<32x1xf32>
    %53 = math.rsqrt %52 : vector<32x1xf32>
    %54 = vector.broadcast %53 : vector<32x1xf32> to vector<32x32xf32>
    %55 = arith.mulf %50, %54 : vector<32x32xf32>
    %56 = vector.broadcast %36 : vector<1x32xf32> to vector<32x32xf32>
    %57 = arith.mulf %55, %56 : vector<32x32xf32>
    %58 = vector.broadcast %37 : vector<1x32xf32> to vector<32x32xf32>
    %59 = arith.addf %57, %58 : vector<32x32xf32>
    %c0_26 = arith.constant 0 : index
    %c0_27 = arith.constant 0 : index
    %60 = vector.load %arg9[%c0_26, %c0_27] : memref<32x64xbf16, #tpu.memory_space<vmem>>, vector<32x64xbf16>
    %61 = arith.truncf %59 : vector<32x32xf32> to vector<32x32xbf16>
    %cst_28 = arith.constant dense<0.000000e+00> : vector<32x64xf32>
    %62 = tpu.matmul %61, %60, %cst_28 {dimension_numbers = #tpu.dot_dimension_numbers<[1], [0], [0], [1], [0, 0, 1, 1], [], []>} : vector<32x32xbf16>, vector<32x64xbf16>, vector<32x64xf32> -> vector<32x64xf32>
    %c0_29 = arith.constant 0 : index
    %c0_30 = arith.constant 0 : index
    %63 = vector.load %arg10[%c0_29, %c0_30] : memref<1x64xf32, #tpu.memory_space<vmem>>, vector<1x64xf32>
    %64 = vector.broadcast %63 : vector<1x64xf32> to vector<32x64xf32>
    %65 = arith.addf %62, %64 : vector<32x64xf32>
    %cst_31 = arith.constant 5.000000e-01 : f32
    %66 = vector.broadcast %cst_31 : f32 to vector<32x64xf32>
    %67 = arith.mulf %66, %65 : vector<32x64xf32>
    %cst_32 = arith.constant 4.471500e-02 : f32
    %68 = vector.broadcast %cst_32 : f32 to vector<32x64xf32>
    %69 = arith.mulf %68, %65 : vector<32x64xf32>
    %70 = arith.mulf %69, %65 : vector<32x64xf32>
    %71 = arith.mulf %70, %65 : vector<32x64xf32>
    %72 = arith.addf %65, %71 : vector<32x64xf32>
    %cst_33 = arith.constant 0.797884583 : f32
    %73 = vector.broadcast %cst_33 : f32 to vector<32x64xf32>
    %74 = arith.mulf %73, %72 : vector<32x64xf32>
    %75 = math.tanh %74 : vector<32x64xf32>
    %cst_34 = arith.constant 1.000000e+00 : f32
    %76 = vector.broadcast %cst_34 : f32 to vector<32x64xf32>
    %77 = arith.addf %76, %75 : vector<32x64xf32>
    %78 = arith.mulf %67, %77 : vector<32x64xf32>
    %c0_35 = arith.constant 0 : index
    %c0_36 = arith.constant 0 : index
    %79 = vector.load %arg11[%c0_35, %c0_36] : memref<64x32xbf16, #tpu.memory_space<vmem>>, vector<64x32xbf16>
    %80 = arith.truncf %78 : vector<32x64xf32> to vector<32x64xbf16>
    %cst_37 = arith.constant dense<0.000000e+00> : vector<32x32xf32>
    %81 = tpu.matmul %80, %79, %cst_37 {dimension_numbers = #tpu.dot_dimension_numbers<[1], [0], [0], [1], [0, 0, 1, 1], [], []>} : vector<32x64xbf16>, vector<64x32xbf16>, vector<32x32xf32> -> vector<32x32xf32>
    %c0_38 = arith.constant 0 : index
    %c0_39 = arith.constant 0 : index
    %82 = vector.load %arg12[%c0_38, %c0_39] : memref<1x32xf32, #tpu.memory_space<vmem>>, vector<1x32xf32>
    %83 = vector.broadcast %82 : vector<1x32xf32> to vector<32x32xf32>
    %84 = arith.addf %81, %83 : vector<32x32xf32>
    %85 = arith.addf %59, %84 : vector<32x32xf32>
    %c0_40 = arith.constant 0 : index
    %c0_41 = arith.constant 0 : index
    %86 = vector.load %arg13[%c0_40, %c0_41] : memref<1x32xf32, #tpu.memory_space<vmem>>, vector<1x32xf32>
    %c0_42 = arith.constant 0 : index
    %c0_43 = arith.constant 0 : index
    %87 = vector.load %arg14[%c0_42, %c0_43] : memref<1x32xf32, #tpu.memory_space<vmem>>, vector<1x32xf32>
    %cst_44 = arith.constant dense<0.000000e+00> : vector<32xf32>
    %88 = vector.multi_reduction <add>, %85, %cst_44 [1] : vector<32x32xf32> to vector<32xf32>
    %89 = vector.shape_cast %88 : vector<32xf32> to vector<32x1xf32>
    %cst_45 = arith.constant 3.200000e+01 : f32
    %90 = vector.broadcast %cst_45 : f32 to vector<32x1xf32>
    %91 = arith.divf %89, %90 : vector<32x1xf32>
    %92 = vector.broadcast %91 : vector<32x1xf32> to vector<32x32xf32>
    %93 = arith.subf %85, %92 : vector<32x32xf32>
    %94 = arith.mulf %93, %93 : vector<32x32xf32>
    %cst_46 = arith.constant dense<0.000000e+00> : vector<32xf32>
    %95 = vector.multi_reduction <add>, %94, %cst_46 [1] : vector<32x32xf32> to vector<32xf32>
    %96 = vector.shape_cast %95 : vector<32xf32> to vector<32x1xf32>
    %cst_47 = arith.constant 3.200000e+01 : f32
    %97 = vector.broadcast %cst_47 : f32 to vector<32x1xf32>
    %98 = arith.divf %96, %97 : vector<32x1xf32>
    %99 = vector.broadcast %91 : vector<32x1xf32> to vector<32x32xf32>
    %100 = arith.subf %85, %99 : vector<32x32xf32>
    %cst_48 = arith.constant 9.99999996E-13 : f32
    %101 = vector.broadcast %cst_48 : f32 to vector<32x1xf32>
    %102 = arith.addf %98, %101 : vector<32x1xf32>
    %103 = math.rsqrt %102 : vector<32x1xf32>
    %104 = vector.broadcast %103 : vector<32x1xf32> to vector<32x32xf32>
    %105 = arith.mulf %100, %104 : vector<32x32xf32>
    %106 = vector.broadcast %86 : vector<1x32xf32> to vector<32x32xf32>
    %107 = arith.mulf %105, %106 : vector<32x32xf32>
    %108 = vector.broadcast %87 : vector<1x32xf32> to vector<32x32xf32>
    %109 = arith.addf %107, %108 : vector<32x32xf32>
    %c0_49 = arith.constant 0 : index
    %c0_50 = arith.constant 0 : index
    %110 = vector.load %arg15[%c0_49, %c0_50] : memref<32x768xbf16, #tpu.memory_space<vmem>>, vector<32x768xbf16>
    %111 = arith.truncf %109 : vector<32x32xf32> to vector<32x32xbf16>
    %cst_51 = arith.constant dense<0.000000e+00> : vector<32x768xf32>
    %112 = tpu.matmul %111, %110, %cst_51 {dimension_numbers = #tpu.dot_dimension_numbers<[1], [0], [0], [1], [0, 0, 1, 1], [], []>} : vector<32x32xbf16>, vector<32x768xbf16>, vector<32x768xf32> -> vector<32x768xf32>
    %c0_52 = arith.constant 0 : index
    %c0_53 = arith.constant 0 : index
    %113 = vector.load %arg16[%c0_52, %c0_53] : memref<1x768xf32, #tpu.memory_space<vmem>>, vector<1x768xf32>
    %114 = vector.broadcast %113 : vector<1x768xf32> to vector<32x768xf32>
    %115 = arith.addf %112, %114 : vector<32x768xf32>
    %116 = vector.extract_strided_slice %115 {offsets = [0, 0], sizes = [1, 768], strides = [1, 1]} : vector<32x768xf32> to vector<1x768xf32>
    %117 = vector.extract_strided_slice %115 {offsets = [8, 0], sizes = [1, 768], strides = [1, 1]} : vector<32x768xf32> to vector<1x768xf32>
    %118 = vector.extract_strided_slice %115 {offsets = [16, 0], sizes = [1, 768], strides = [1, 1]} : vector<32x768xf32> to vector<1x768xf32>
    %119 = vector.extract_strided_slice %115 {offsets = [24, 0], sizes = [1, 768], strides = [1, 1]} : vector<32x768xf32> to vector<1x768xf32>
    %120 = tpu.concatenate %116, %117, %118, %119 in 0 : vector<1x768xf32>, vector<1x768xf32>, vector<1x768xf32>, vector<1x768xf32> -> vector<4x768xf32>
    %121 = vector.extract_strided_slice %115 {offsets = [1, 0], sizes = [1, 768], strides = [1, 1]} : vector<32x768xf32> to vector<1x768xf32>
    %122 = vector.extract_strided_slice %115 {offsets = [9, 0], sizes = [1, 768], strides = [1, 1]} : vector<32x768xf32> to vector<1x768xf32>
    %123 = vector.extract_strided_slice %115 {offsets = [17, 0], sizes = [1, 768], strides = [1, 1]} : vector<32x768xf32> to vector<1x768xf32>
    %124 = vector.extract_strided_slice %115 {offsets = [25, 0], sizes = [1, 768], strides = [1, 1]} : vector<32x768xf32> to vector<1x768xf32>
    %125 = tpu.concatenate %121, %122, %123, %124 in 0 : vector<1x768xf32>, vector<1x768xf32>, vector<1x768xf32>, vector<1x768xf32> -> vector<4x768xf32>
    %126 = vector.extract_strided_slice %115 {offsets = [2, 0], sizes = [1, 768], strides = [1, 1]} : vector<32x768xf32> to vector<1x768xf32>
    %127 = vector.extract_strided_slice %115 {offsets = [10, 0], sizes = [1, 768], strides = [1, 1]} : vector<32x768xf32> to vector<1x768xf32>
    %128 = vector.extract_strided_slice %115 {offsets = [18, 0], sizes = [1, 768], strides = [1, 1]} : vector<32x768xf32> to vector<1x768xf32>
    %129 = vector.extract_strided_slice %115 {offsets = [26, 0], sizes = [1, 768], strides = [1, 1]} : vector<32x768xf32> to vector<1x768xf32>
    %130 = tpu.concatenate %126, %127, %128, %129 in 0 : vector<1x768xf32>, vector<1x768xf32>, vector<1x768xf32>, vector<1x768xf32> -> vector<4x768xf32>
    %131 = vector.extract_strided_slice %115 {offsets = [3, 0], sizes = [1, 768], strides = [1, 1]} : vector<32x768xf32> to vector<1x768xf32>
    %132 = vector.extract_strided_slice %115 {offsets = [11, 0], sizes = [1, 768], strides = [1, 1]} : vector<32x768xf32> to vector<1x768xf32>
    %133 = vector.extract_strided_slice %115 {offsets = [19, 0], sizes = [1, 768], strides = [1, 1]} : vector<32x768xf32> to vector<1x768xf32>
    %134 = vector.extract_strided_slice %115 {offsets = [27, 0], sizes = [1, 768], strides = [1, 1]} : vector<32x768xf32> to vector<1x768xf32>
    %135 = tpu.concatenate %131, %132, %133, %134 in 0 : vector<1x768xf32>, vector<1x768xf32>, vector<1x768xf32>, vector<1x768xf32> -> vector<4x768xf32>
    %136 = vector.extract_strided_slice %115 {offsets = [4, 0], sizes = [1, 768], strides = [1, 1]} : vector<32x768xf32> to vector<1x768xf32>
    %137 = vector.extract_strided_slice %115 {offsets = [12, 0], sizes = [1, 768], strides = [1, 1]} : vector<32x768xf32> to vector<1x768xf32>
    %138 = vector.extract_strided_slice %115 {offsets = [20, 0], sizes = [1, 768], strides = [1, 1]} : vector<32x768xf32> to vector<1x768xf32>
    %139 = vector.extract_strided_slice %115 {offsets = [28, 0], sizes = [1, 768], strides = [1, 1]} : vector<32x768xf32> to vector<1x768xf32>
    %140 = tpu.concatenate %136, %137, %138, %139 in 0 : vector<1x768xf32>, vector<1x768xf32>, vector<1x768xf32>, vector<1x768xf32> -> vector<4x768xf32>
    %141 = vector.extract_strided_slice %115 {offsets = [5, 0], sizes = [1, 768], strides = [1, 1]} : vector<32x768xf32> to vector<1x768xf32>
    %142 = vector.extract_strided_slice %115 {offsets = [13, 0], sizes = [1, 768], strides = [1, 1]} : vector<32x768xf32> to vector<1x768xf32>
    %143 = vector.extract_strided_slice %115 {offsets = [21, 0], sizes = [1, 768], strides = [1, 1]} : vector<32x768xf32> to vector<1x768xf32>
    %144 = vector.extract_strided_slice %115 {offsets = [29, 0], sizes = [1, 768], strides = [1, 1]} : vector<32x768xf32> to vector<1x768xf32>
    %145 = tpu.concatenate %141, %142, %143, %144 in 0 : vector<1x768xf32>, vector<1x768xf32>, vector<1x768xf32>, vector<1x768xf32> -> vector<4x768xf32>
    %146 = vector.extract_strided_slice %115 {offsets = [6, 0], sizes = [1, 768], strides = [1, 1]} : vector<32x768xf32> to vector<1x768xf32>
    %147 = vector.extract_strided_slice %115 {offsets = [14, 0], sizes = [1, 768], strides = [1, 1]} : vector<32x768xf32> to vector<1x768xf32>
    %148 = vector.extract_strided_slice %115 {offsets = [22, 0], sizes = [1, 768], strides = [1, 1]} : vector<32x768xf32> to vector<1x768xf32>
    %149 = vector.extract_strided_slice %115 {offsets = [30, 0], sizes = [1, 768], strides = [1, 1]} : vector<32x768xf32> to vector<1x768xf32>
    %150 = tpu.concatenate %146, %147, %148, %149 in 0 : vector<1x768xf32>, vector<1x768xf32>, vector<1x768xf32>, vector<1x768xf32> -> vector<4x768xf32>
    %151 = vector.extract_strided_slice %115 {offsets = [7, 0], sizes = [1, 768], strides = [1, 1]} : vector<32x768xf32> to vector<1x768xf32>
    %152 = vector.extract_strided_slice %115 {offsets = [15, 0], sizes = [1, 768], strides = [1, 1]} : vector<32x768xf32> to vector<1x768xf32>
    %153 = vector.extract_strided_slice %115 {offsets = [23, 0], sizes = [1, 768], strides = [1, 1]} : vector<32x768xf32> to vector<1x768xf32>
    %154 = vector.extract_strided_slice %115 {offsets = [31, 0], sizes = [1, 768], strides = [1, 1]} : vector<32x768xf32> to vector<1x768xf32>
    %155 = tpu.concatenate %151, %152, %153, %154 in 0 : vector<1x768xf32>, vector<1x768xf32>, vector<1x768xf32>, vector<1x768xf32> -> vector<4x768xf32>
    %c0_54 = arith.constant 0 : index
    %c0_55 = arith.constant 0 : index
    %156 = vector.load %arg17[%c0_54, %c0_55] : memref<256x768xbf16, #tpu.memory_space<vmem>>, vector<256x768xbf16>
    %c0_56 = arith.constant 0 : index
    %c0_57 = arith.constant 0 : index
    %157 = vector.load %arg18[%c0_56, %c0_57] : memref<1x768xf32, #tpu.memory_space<vmem>>, vector<1x768xf32>
    %cst_58 = arith.constant 0.000000e+00 : f32
    %158 = vector.broadcast %cst_58 : f32 to vector<4x256xf32>
    %159 = arith.truncf %158 : vector<4x256xf32> to vector<4x256xbf16>
    %cst_59 = arith.constant dense<0.000000e+00> : vector<4x768xf32>
    %160 = tpu.matmul %159, %156, %cst_59 {dimension_numbers = #tpu.dot_dimension_numbers<[1], [0], [0], [1], [0, 0, 1, 1], [], []>} : vector<4x256xbf16>, vector<256x768xbf16>, vector<4x768xf32> -> vector<4x768xf32>
    %161 = vector.broadcast %157 : vector<1x768xf32> to vector<4x768xf32>
    %162 = arith.addf %160, %161 : vector<4x768xf32>
    %163 = vector.extract_strided_slice %120 {offsets = [0, 0], sizes = [4, 128], strides = [1, 1]} : vector<4x768xf32> to vector<4x128xf32>
    %164 = vector.extract_strided_slice %162 {offsets = [0, 0], sizes = [4, 128], strides = [1, 1]} : vector<4x768xf32> to vector<4x128xf32>
    %165 = arith.addf %163, %164 : vector<4x128xf32>
    %166 = arith.negf %165 : vector<4x128xf32>
    %167 = math.exp %166 : vector<4x128xf32>
    %cst_60 = arith.constant 1.000000e+00 : f32
    %168 = vector.broadcast %cst_60 : f32 to vector<4x128xf32>
    %169 = arith.addf %168, %167 : vector<4x128xf32>
    %170 = arith.divf %168, %169 : vector<4x128xf32>
    %171 = vector.extract_strided_slice %120 {offsets = [0, 128], sizes = [4, 128], strides = [1, 1]} : vector<4x768xf32> to vector<4x128xf32>
    %172 = vector.extract_strided_slice %162 {offsets = [0, 128], sizes = [4, 128], strides = [1, 1]} : vector<4x768xf32> to vector<4x128xf32>
    %173 = arith.addf %171, %172 : vector<4x128xf32>
    %174 = arith.negf %173 : vector<4x128xf32>
    %175 = math.exp %174 : vector<4x128xf32>
    %cst_61 = arith.constant 1.000000e+00 : f32
    %176 = vector.broadcast %cst_61 : f32 to vector<4x128xf32>
    %177 = arith.addf %176, %175 : vector<4x128xf32>
    %178 = arith.divf %176, %177 : vector<4x128xf32>
    %179 = vector.extract_strided_slice %120 {offsets = [0, 256], sizes = [4, 128], strides = [1, 1]} : vector<4x768xf32> to vector<4x128xf32>
    %180 = vector.extract_strided_slice %162 {offsets = [0, 256], sizes = [4, 128], strides = [1, 1]} : vector<4x768xf32> to vector<4x128xf32>
    %181 = arith.mulf %170, %180 : vector<4x128xf32>
    %182 = arith.addf %179, %181 : vector<4x128xf32>
    %183 = math.tanh %182 : vector<4x128xf32>
    %184 = vector.extract_strided_slice %155 {offsets = [0, 384], sizes = [4, 128], strides = [1, 1]} : vector<4x768xf32> to vector<4x128xf32>
    %185 = vector.extract_strided_slice %162 {offsets = [0, 384], sizes = [4, 128], strides = [1, 1]} : vector<4x768xf32> to vector<4x128xf32>
    %186 = arith.addf %184, %185 : vector<4x128xf32>
    %187 = arith.negf %186 : vector<4x128xf32>
    %188 = math.exp %187 : vector<4x128xf32>
    %cst_62 = arith.constant 1.000000e+00 : f32
    %189 = vector.broadcast %cst_62 : f32 to vector<4x128xf32>
    %190 = arith.addf %189, %188 : vector<4x128xf32>
    %191 = arith.divf %189, %190 : vector<4x128xf32>
    %192 = vector.extract_strided_slice %155 {offsets = [0, 512], sizes = [4, 128], strides = [1, 1]} : vector<4x768xf32> to vector<4x128xf32>
    %193 = vector.extract_strided_slice %162 {offsets = [0, 512], sizes = [4, 128], strides = [1, 1]} : vector<4x768xf32> to vector<4x128xf32>
    %194 = arith.addf %192, %193 : vector<4x128xf32>
    %195 = arith.negf %194 : vector<4x128xf32>
    %196 = math.exp %195 : vector<4x128xf32>
    %cst_63 = arith.constant 1.000000e+00 : f32
    %197 = vector.broadcast %cst_63 : f32 to vector<4x128xf32>
    %198 = arith.addf %197, %196 : vector<4x128xf32>
    %199 = arith.divf %197, %198 : vector<4x128xf32>
    %200 = vector.extract_strided_slice %155 {offsets = [0, 640], sizes = [4, 128], strides = [1, 1]} : vector<4x768xf32> to vector<4x128xf32>
    %201 = vector.extract_strided_slice %162 {offsets = [0, 640], sizes = [4, 128], strides = [1, 1]} : vector<4x768xf32> to vector<4x128xf32>
    %202 = arith.mulf %191, %201 : vector<4x128xf32>
    %203 = arith.addf %200, %202 : vector<4x128xf32>
    %204 = math.tanh %203 : vector<4x128xf32>
    %cst_64 = arith.constant 1.000000e+00 : f32
    %205 = vector.broadcast %cst_64 : f32 to vector<4x128xf32>
    %206 = arith.subf %205, %178 : vector<4x128xf32>
    %207 = arith.mulf %206, %183 : vector<4x128xf32>
    %208 = vector.extract_strided_slice %158 {offsets = [0, 0], sizes = [4, 128], strides = [1, 1]} : vector<4x256xf32> to vector<4x128xf32>
    %209 = arith.mulf %178, %208 : vector<4x128xf32>
    %210 = arith.addf %207, %209 : vector<4x128xf32>
    %cst_65 = arith.constant 1.000000e+00 : f32
    %211 = vector.broadcast %cst_65 : f32 to vector<4x128xf32>
    %212 = arith.subf %211, %199 : vector<4x128xf32>
    %213 = arith.mulf %212, %204 : vector<4x128xf32>
    %214 = vector.extract_strided_slice %158 {offsets = [0, 128], sizes = [4, 128], strides = [1, 1]} : vector<4x256xf32> to vector<4x128xf32>
    %215 = arith.mulf %199, %214 : vector<4x128xf32>
    %216 = arith.addf %213, %215 : vector<4x128xf32>
    %217 = tpu.concatenate %210, %216 in 1 : vector<4x128xf32>, vector<4x128xf32> -> vector<4x256xf32>
    %218 = arith.truncf %217 : vector<4x256xf32> to vector<4x256xbf16>
    %cst_66 = arith.constant dense<0.000000e+00> : vector<4x768xf32>
    %219 = tpu.matmul %218, %156, %cst_66 {dimension_numbers = #tpu.dot_dimension_numbers<[1], [0], [0], [1], [0, 0, 1, 1], [], []>} : vector<4x256xbf16>, vector<256x768xbf16>, vector<4x768xf32> -> vector<4x768xf32>
    %220 = vector.broadcast %157 : vector<1x768xf32> to vector<4x768xf32>
    %221 = arith.addf %219, %220 : vector<4x768xf32>
    %222 = vector.extract_strided_slice %125 {offsets = [0, 0], sizes = [4, 128], strides = [1, 1]} : vector<4x768xf32> to vector<4x128xf32>
    %223 = vector.extract_strided_slice %221 {offsets = [0, 0], sizes = [4, 128], strides = [1, 1]} : vector<4x768xf32> to vector<4x128xf32>
    %224 = arith.addf %222, %223 : vector<4x128xf32>
    %225 = arith.negf %224 : vector<4x128xf32>
    %226 = math.exp %225 : vector<4x128xf32>
    %cst_67 = arith.constant 1.000000e+00 : f32
    %227 = vector.broadcast %cst_67 : f32 to vector<4x128xf32>
    %228 = arith.addf %227, %226 : vector<4x128xf32>
    %229 = arith.divf %227, %228 : vector<4x128xf32>
    %230 = vector.extract_strided_slice %125 {offsets = [0, 128], sizes = [4, 128], strides = [1, 1]} : vector<4x768xf32> to vector<4x128xf32>
    %231 = vector.extract_strided_slice %221 {offsets = [0, 128], sizes = [4, 128], strides = [1, 1]} : vector<4x768xf32> to vector<4x128xf32>
    %232 = arith.addf %230, %231 : vector<4x128xf32>
    %233 = arith.negf %232 : vector<4x128xf32>
    %234 = math.exp %233 : vector<4x128xf32>
    %cst_68 = arith.constant 1.000000e+00 : f32
    %235 = vector.broadcast %cst_68 : f32 to vector<4x128xf32>
    %236 = arith.addf %235, %234 : vector<4x128xf32>
    %237 = arith.divf %235, %236 : vector<4x128xf32>
    %238 = vector.extract_strided_slice %125 {offsets = [0, 256], sizes = [4, 128], strides = [1, 1]} : vector<4x768xf32> to vector<4x128xf32>
    %239 = vector.extract_strided_slice %221 {offsets = [0, 256], sizes = [4, 128], strides = [1, 1]} : vector<4x768xf32> to vector<4x128xf32>
    %240 = arith.mulf %229, %239 : vector<4x128xf32>
    %241 = arith.addf %238, %240 : vector<4x128xf32>
    %242 = math.tanh %241 : vector<4x128xf32>
    %243 = vector.extract_strided_slice %150 {offsets = [0, 384], sizes = [4, 128], strides = [1, 1]} : vector<4x768xf32> to vector<4x128xf32>
    %244 = vector.extract_strided_slice %221 {offsets = [0, 384], sizes = [4, 128], strides = [1, 1]} : vector<4x768xf32> to vector<4x128xf32>
    %245 = arith.addf %243, %244 : vector<4x128xf32>
    %246 = arith.negf %245 : vector<4x128xf32>
    %247 = math.exp %246 : vector<4x128xf32>
    %cst_69 = arith.constant 1.000000e+00 : f32
    %248 = vector.broadcast %cst_69 : f32 to vector<4x128xf32>
    %249 = arith.addf %248, %247 : vector<4x128xf32>
    %250 = arith.divf %248, %249 : vector<4x128xf32>
    %251 = vector.extract_strided_slice %150 {offsets = [0, 512], sizes = [4, 128], strides = [1, 1]} : vector<4x768xf32> to vector<4x128xf32>
    %252 = vector.extract_strided_slice %221 {offsets = [0, 512], sizes = [4, 128], strides = [1, 1]} : vector<4x768xf32> to vector<4x128xf32>
    %253 = arith.addf %251, %252 : vector<4x128xf32>
    %254 = arith.negf %253 : vector<4x128xf32>
    %255 = math.exp %254 : vector<4x128xf32>
    %cst_70 = arith.constant 1.000000e+00 : f32
    %256 = vector.broadcast %cst_70 : f32 to vector<4x128xf32>
    %257 = arith.addf %256, %255 : vector<4x128xf32>
    %258 = arith.divf %256, %257 : vector<4x128xf32>
    %259 = vector.extract_strided_slice %150 {offsets = [0, 640], sizes = [4, 128], strides = [1, 1]} : vector<4x768xf32> to vector<4x128xf32>
    %260 = vector.extract_strided_slice %221 {offsets = [0, 640], sizes = [4, 128], strides = [1, 1]} : vector<4x768xf32> to vector<4x128xf32>
    %261 = arith.mulf %250, %260 : vector<4x128xf32>
    %262 = arith.addf %259, %261 : vector<4x128xf32>
    %263 = math.tanh %262 : vector<4x128xf32>
    %cst_71 = arith.constant 1.000000e+00 : f32
    %264 = vector.broadcast %cst_71 : f32 to vector<4x128xf32>
    %265 = arith.subf %264, %237 : vector<4x128xf32>
    %266 = arith.mulf %265, %242 : vector<4x128xf32>
    %267 = vector.extract_strided_slice %217 {offsets = [0, 0], sizes = [4, 128], strides = [1, 1]} : vector<4x256xf32> to vector<4x128xf32>
    %268 = arith.mulf %237, %267 : vector<4x128xf32>
    %269 = arith.addf %266, %268 : vector<4x128xf32>
    %cst_72 = arith.constant 1.000000e+00 : f32
    %270 = vector.broadcast %cst_72 : f32 to vector<4x128xf32>
    %271 = arith.subf %270, %258 : vector<4x128xf32>
    %272 = arith.mulf %271, %263 : vector<4x128xf32>
    %273 = vector.extract_strided_slice %217 {offsets = [0, 128], sizes = [4, 128], strides = [1, 1]} : vector<4x256xf32> to vector<4x128xf32>
    %274 = arith.mulf %258, %273 : vector<4x128xf32>
    %275 = arith.addf %272, %274 : vector<4x128xf32>
    %276 = tpu.concatenate %269, %275 in 1 : vector<4x128xf32>, vector<4x128xf32> -> vector<4x256xf32>
    %277 = arith.truncf %276 : vector<4x256xf32> to vector<4x256xbf16>
    %cst_73 = arith.constant dense<0.000000e+00> : vector<4x768xf32>
    %278 = tpu.matmul %277, %156, %cst_73 {dimension_numbers = #tpu.dot_dimension_numbers<[1], [0], [0], [1], [0, 0, 1, 1], [], []>} : vector<4x256xbf16>, vector<256x768xbf16>, vector<4x768xf32> -> vector<4x768xf32>
    %279 = vector.broadcast %157 : vector<1x768xf32> to vector<4x768xf32>
    %280 = arith.addf %278, %279 : vector<4x768xf32>
    %281 = vector.extract_strided_slice %130 {offsets = [0, 0], sizes = [4, 128], strides = [1, 1]} : vector<4x768xf32> to vector<4x128xf32>
    %282 = vector.extract_strided_slice %280 {offsets = [0, 0], sizes = [4, 128], strides = [1, 1]} : vector<4x768xf32> to vector<4x128xf32>
    %283 = arith.addf %281, %282 : vector<4x128xf32>
    %284 = arith.negf %283 : vector<4x128xf32>
    %285 = math.exp %284 : vector<4x128xf32>
    %cst_74 = arith.constant 1.000000e+00 : f32
    %286 = vector.broadcast %cst_74 : f32 to vector<4x128xf32>
    %287 = arith.addf %286, %285 : vector<4x128xf32>
    %288 = arith.divf %286, %287 : vector<4x128xf32>
    %289 = vector.extract_strided_slice %130 {offsets = [0, 128], sizes = [4, 128], strides = [1, 1]} : vector<4x768xf32> to vector<4x128xf32>
    %290 = vector.extract_strided_slice %280 {offsets = [0, 128], sizes = [4, 128], strides = [1, 1]} : vector<4x768xf32> to vector<4x128xf32>
    %291 = arith.addf %289, %290 : vector<4x128xf32>
    %292 = arith.negf %291 : vector<4x128xf32>
    %293 = math.exp %292 : vector<4x128xf32>
    %cst_75 = arith.constant 1.000000e+00 : f32
    %294 = vector.broadcast %cst_75 : f32 to vector<4x128xf32>
    %295 = arith.addf %294, %293 : vector<4x128xf32>
    %296 = arith.divf %294, %295 : vector<4x128xf32>
    %297 = vector.extract_strided_slice %130 {offsets = [0, 256], sizes = [4, 128], strides = [1, 1]} : vector<4x768xf32> to vector<4x128xf32>
    %298 = vector.extract_strided_slice %280 {offsets = [0, 256], sizes = [4, 128], strides = [1, 1]} : vector<4x768xf32> to vector<4x128xf32>
    %299 = arith.mulf %288, %298 : vector<4x128xf32>
    %300 = arith.addf %297, %299 : vector<4x128xf32>
    %301 = math.tanh %300 : vector<4x128xf32>
    %302 = vector.extract_strided_slice %145 {offsets = [0, 384], sizes = [4, 128], strides = [1, 1]} : vector<4x768xf32> to vector<4x128xf32>
    %303 = vector.extract_strided_slice %280 {offsets = [0, 384], sizes = [4, 128], strides = [1, 1]} : vector<4x768xf32> to vector<4x128xf32>
    %304 = arith.addf %302, %303 : vector<4x128xf32>
    %305 = arith.negf %304 : vector<4x128xf32>
    %306 = math.exp %305 : vector<4x128xf32>
    %cst_76 = arith.constant 1.000000e+00 : f32
    %307 = vector.broadcast %cst_76 : f32 to vector<4x128xf32>
    %308 = arith.addf %307, %306 : vector<4x128xf32>
    %309 = arith.divf %307, %308 : vector<4x128xf32>
    %310 = vector.extract_strided_slice %145 {offsets = [0, 512], sizes = [4, 128], strides = [1, 1]} : vector<4x768xf32> to vector<4x128xf32>
    %311 = vector.extract_strided_slice %280 {offsets = [0, 512], sizes = [4, 128], strides = [1, 1]} : vector<4x768xf32> to vector<4x128xf32>
    %312 = arith.addf %310, %311 : vector<4x128xf32>
    %313 = arith.negf %312 : vector<4x128xf32>
    %314 = math.exp %313 : vector<4x128xf32>
    %cst_77 = arith.constant 1.000000e+00 : f32
    %315 = vector.broadcast %cst_77 : f32 to vector<4x128xf32>
    %316 = arith.addf %315, %314 : vector<4x128xf32>
    %317 = arith.divf %315, %316 : vector<4x128xf32>
    %318 = vector.extract_strided_slice %145 {offsets = [0, 640], sizes = [4, 128], strides = [1, 1]} : vector<4x768xf32> to vector<4x128xf32>
    %319 = vector.extract_strided_slice %280 {offsets = [0, 640], sizes = [4, 128], strides = [1, 1]} : vector<4x768xf32> to vector<4x128xf32>
    %320 = arith.mulf %309, %319 : vector<4x128xf32>
    %321 = arith.addf %318, %320 : vector<4x128xf32>
    %322 = math.tanh %321 : vector<4x128xf32>
    %cst_78 = arith.constant 1.000000e+00 : f32
    %323 = vector.broadcast %cst_78 : f32 to vector<4x128xf32>
    %324 = arith.subf %323, %296 : vector<4x128xf32>
    %325 = arith.mulf %324, %301 : vector<4x128xf32>
    %326 = vector.extract_strided_slice %276 {offsets = [0, 0], sizes = [4, 128], strides = [1, 1]} : vector<4x256xf32> to vector<4x128xf32>
    %327 = arith.mulf %296, %326 : vector<4x128xf32>
    %328 = arith.addf %325, %327 : vector<4x128xf32>
    %cst_79 = arith.constant 1.000000e+00 : f32
    %329 = vector.broadcast %cst_79 : f32 to vector<4x128xf32>
    %330 = arith.subf %329, %317 : vector<4x128xf32>
    %331 = arith.mulf %330, %322 : vector<4x128xf32>
    %332 = vector.extract_strided_slice %276 {offsets = [0, 128], sizes = [4, 128], strides = [1, 1]} : vector<4x256xf32> to vector<4x128xf32>
    %333 = arith.mulf %317, %332 : vector<4x128xf32>
    %334 = arith.addf %331, %333 : vector<4x128xf32>
    %335 = tpu.concatenate %328, %334 in 1 : vector<4x128xf32>, vector<4x128xf32> -> vector<4x256xf32>
    %336 = arith.truncf %335 : vector<4x256xf32> to vector<4x256xbf16>
    %cst_80 = arith.constant dense<0.000000e+00> : vector<4x768xf32>
    %337 = tpu.matmul %336, %156, %cst_80 {dimension_numbers = #tpu.dot_dimension_numbers<[1], [0], [0], [1], [0, 0, 1, 1], [], []>} : vector<4x256xbf16>, vector<256x768xbf16>, vector<4x768xf32> -> vector<4x768xf32>
    %338 = vector.broadcast %157 : vector<1x768xf32> to vector<4x768xf32>
    %339 = arith.addf %337, %338 : vector<4x768xf32>
    %340 = vector.extract_strided_slice %135 {offsets = [0, 0], sizes = [4, 128], strides = [1, 1]} : vector<4x768xf32> to vector<4x128xf32>
    %341 = vector.extract_strided_slice %339 {offsets = [0, 0], sizes = [4, 128], strides = [1, 1]} : vector<4x768xf32> to vector<4x128xf32>
    %342 = arith.addf %340, %341 : vector<4x128xf32>
    %343 = arith.negf %342 : vector<4x128xf32>
    %344 = math.exp %343 : vector<4x128xf32>
    %cst_81 = arith.constant 1.000000e+00 : f32
    %345 = vector.broadcast %cst_81 : f32 to vector<4x128xf32>
    %346 = arith.addf %345, %344 : vector<4x128xf32>
    %347 = arith.divf %345, %346 : vector<4x128xf32>
    %348 = vector.extract_strided_slice %135 {offsets = [0, 128], sizes = [4, 128], strides = [1, 1]} : vector<4x768xf32> to vector<4x128xf32>
    %349 = vector.extract_strided_slice %339 {offsets = [0, 128], sizes = [4, 128], strides = [1, 1]} : vector<4x768xf32> to vector<4x128xf32>
    %350 = arith.addf %348, %349 : vector<4x128xf32>
    %351 = arith.negf %350 : vector<4x128xf32>
    %352 = math.exp %351 : vector<4x128xf32>
    %cst_82 = arith.constant 1.000000e+00 : f32
    %353 = vector.broadcast %cst_82 : f32 to vector<4x128xf32>
    %354 = arith.addf %353, %352 : vector<4x128xf32>
    %355 = arith.divf %353, %354 : vector<4x128xf32>
    %356 = vector.extract_strided_slice %135 {offsets = [0, 256], sizes = [4, 128], strides = [1, 1]} : vector<4x768xf32> to vector<4x128xf32>
    %357 = vector.extract_strided_slice %339 {offsets = [0, 256], sizes = [4, 128], strides = [1, 1]} : vector<4x768xf32> to vector<4x128xf32>
    %358 = arith.mulf %347, %357 : vector<4x128xf32>
    %359 = arith.addf %356, %358 : vector<4x128xf32>
    %360 = math.tanh %359 : vector<4x128xf32>
    %361 = vector.extract_strided_slice %140 {offsets = [0, 384], sizes = [4, 128], strides = [1, 1]} : vector<4x768xf32> to vector<4x128xf32>
    %362 = vector.extract_strided_slice %339 {offsets = [0, 384], sizes = [4, 128], strides = [1, 1]} : vector<4x768xf32> to vector<4x128xf32>
    %363 = arith.addf %361, %362 : vector<4x128xf32>
    %364 = arith.negf %363 : vector<4x128xf32>
    %365 = math.exp %364 : vector<4x128xf32>
    %cst_83 = arith.constant 1.000000e+00 : f32
    %366 = vector.broadcast %cst_83 : f32 to vector<4x128xf32>
    %367 = arith.addf %366, %365 : vector<4x128xf32>
    %368 = arith.divf %366, %367 : vector<4x128xf32>
    %369 = vector.extract_strided_slice %140 {offsets = [0, 512], sizes = [4, 128], strides = [1, 1]} : vector<4x768xf32> to vector<4x128xf32>
    %370 = vector.extract_strided_slice %339 {offsets = [0, 512], sizes = [4, 128], strides = [1, 1]} : vector<4x768xf32> to vector<4x128xf32>
    %371 = arith.addf %369, %370 : vector<4x128xf32>
    %372 = arith.negf %371 : vector<4x128xf32>
    %373 = math.exp %372 : vector<4x128xf32>
    %cst_84 = arith.constant 1.000000e+00 : f32
    %374 = vector.broadcast %cst_84 : f32 to vector<4x128xf32>
    %375 = arith.addf %374, %373 : vector<4x128xf32>
    %376 = arith.divf %374, %375 : vector<4x128xf32>
    %377 = vector.extract_strided_slice %140 {offsets = [0, 640], sizes = [4, 128], strides = [1, 1]} : vector<4x768xf32> to vector<4x128xf32>
    %378 = vector.extract_strided_slice %339 {offsets = [0, 640], sizes = [4, 128], strides = [1, 1]} : vector<4x768xf32> to vector<4x128xf32>
    %379 = arith.mulf %368, %378 : vector<4x128xf32>
    %380 = arith.addf %377, %379 : vector<4x128xf32>
    %381 = math.tanh %380 : vector<4x128xf32>
    %cst_85 = arith.constant 1.000000e+00 : f32
    %382 = vector.broadcast %cst_85 : f32 to vector<4x128xf32>
    %383 = arith.subf %382, %355 : vector<4x128xf32>
    %384 = arith.mulf %383, %360 : vector<4x128xf32>
    %385 = vector.extract_strided_slice %335 {offsets = [0, 0], sizes = [4, 128], strides = [1, 1]} : vector<4x256xf32> to vector<4x128xf32>
    %386 = arith.mulf %355, %385 : vector<4x128xf32>
    %387 = arith.addf %384, %386 : vector<4x128xf32>
    %cst_86 = arith.constant 1.000000e+00 : f32
    %388 = vector.broadcast %cst_86 : f32 to vector<4x128xf32>
    %389 = arith.subf %388, %376 : vector<4x128xf32>
    %390 = arith.mulf %389, %381 : vector<4x128xf32>
    %391 = vector.extract_strided_slice %335 {offsets = [0, 128], sizes = [4, 128], strides = [1, 1]} : vector<4x256xf32> to vector<4x128xf32>
    %392 = arith.mulf %376, %391 : vector<4x128xf32>
    %393 = arith.addf %390, %392 : vector<4x128xf32>
    %394 = tpu.concatenate %387, %393 in 1 : vector<4x128xf32>, vector<4x128xf32> -> vector<4x256xf32>
    %395 = arith.truncf %394 : vector<4x256xf32> to vector<4x256xbf16>
    %cst_87 = arith.constant dense<0.000000e+00> : vector<4x768xf32>
    %396 = tpu.matmul %395, %156, %cst_87 {dimension_numbers = #tpu.dot_dimension_numbers<[1], [0], [0], [1], [0, 0, 1, 1], [], []>} : vector<4x256xbf16>, vector<256x768xbf16>, vector<4x768xf32> -> vector<4x768xf32>
    %397 = vector.broadcast %157 : vector<1x768xf32> to vector<4x768xf32>
    %398 = arith.addf %396, %397 : vector<4x768xf32>
    %399 = vector.extract_strided_slice %140 {offsets = [0, 0], sizes = [4, 128], strides = [1, 1]} : vector<4x768xf32> to vector<4x128xf32>
    %400 = vector.extract_strided_slice %398 {offsets = [0, 0], sizes = [4, 128], strides = [1, 1]} : vector<4x768xf32> to vector<4x128xf32>
    %401 = arith.addf %399, %400 : vector<4x128xf32>
    %402 = arith.negf %401 : vector<4x128xf32>
    %403 = math.exp %402 : vector<4x128xf32>
    %cst_88 = arith.constant 1.000000e+00 : f32
    %404 = vector.broadcast %cst_88 : f32 to vector<4x128xf32>
    %405 = arith.addf %404, %403 : vector<4x128xf32>
    %406 = arith.divf %404, %405 : vector<4x128xf32>
    %407 = vector.extract_strided_slice %140 {offsets = [0, 128], sizes = [4, 128], strides = [1, 1]} : vector<4x768xf32> to vector<4x128xf32>
    %408 = vector.extract_strided_slice %398 {offsets = [0, 128], sizes = [4, 128], strides = [1, 1]} : vector<4x768xf32> to vector<4x128xf32>
    %409 = arith.addf %407, %408 : vector<4x128xf32>
    %410 = arith.negf %409 : vector<4x128xf32>
    %411 = math.exp %410 : vector<4x128xf32>
    %cst_89 = arith.constant 1.000000e+00 : f32
    %412 = vector.broadcast %cst_89 : f32 to vector<4x128xf32>
    %413 = arith.addf %412, %411 : vector<4x128xf32>
    %414 = arith.divf %412, %413 : vector<4x128xf32>
    %415 = vector.extract_strided_slice %140 {offsets = [0, 256], sizes = [4, 128], strides = [1, 1]} : vector<4x768xf32> to vector<4x128xf32>
    %416 = vector.extract_strided_slice %398 {offsets = [0, 256], sizes = [4, 128], strides = [1, 1]} : vector<4x768xf32> to vector<4x128xf32>
    %417 = arith.mulf %406, %416 : vector<4x128xf32>
    %418 = arith.addf %415, %417 : vector<4x128xf32>
    %419 = math.tanh %418 : vector<4x128xf32>
    %420 = vector.extract_strided_slice %135 {offsets = [0, 384], sizes = [4, 128], strides = [1, 1]} : vector<4x768xf32> to vector<4x128xf32>
    %421 = vector.extract_strided_slice %398 {offsets = [0, 384], sizes = [4, 128], strides = [1, 1]} : vector<4x768xf32> to vector<4x128xf32>
    %422 = arith.addf %420, %421 : vector<4x128xf32>
    %423 = arith.negf %422 : vector<4x128xf32>
    %424 = math.exp %423 : vector<4x128xf32>
    %cst_90 = arith.constant 1.000000e+00 : f32
    %425 = vector.broadcast %cst_90 : f32 to vector<4x128xf32>
    %426 = arith.addf %425, %424 : vector<4x128xf32>
    %427 = arith.divf %425, %426 : vector<4x128xf32>
    %428 = vector.extract_strided_slice %135 {offsets = [0, 512], sizes = [4, 128], strides = [1, 1]} : vector<4x768xf32> to vector<4x128xf32>
    %429 = vector.extract_strided_slice %398 {offsets = [0, 512], sizes = [4, 128], strides = [1, 1]} : vector<4x768xf32> to vector<4x128xf32>
    %430 = arith.addf %428, %429 : vector<4x128xf32>
    %431 = arith.negf %430 : vector<4x128xf32>
    %432 = math.exp %431 : vector<4x128xf32>
    %cst_91 = arith.constant 1.000000e+00 : f32
    %433 = vector.broadcast %cst_91 : f32 to vector<4x128xf32>
    %434 = arith.addf %433, %432 : vector<4x128xf32>
    %435 = arith.divf %433, %434 : vector<4x128xf32>
    %436 = vector.extract_strided_slice %135 {offsets = [0, 640], sizes = [4, 128], strides = [1, 1]} : vector<4x768xf32> to vector<4x128xf32>
    %437 = vector.extract_strided_slice %398 {offsets = [0, 640], sizes = [4, 128], strides = [1, 1]} : vector<4x768xf32> to vector<4x128xf32>
    %438 = arith.mulf %427, %437 : vector<4x128xf32>
    %439 = arith.addf %436, %438 : vector<4x128xf32>
    %440 = math.tanh %439 : vector<4x128xf32>
    %cst_92 = arith.constant 1.000000e+00 : f32
    %441 = vector.broadcast %cst_92 : f32 to vector<4x128xf32>
    %442 = arith.subf %441, %414 : vector<4x128xf32>
    %443 = arith.mulf %442, %419 : vector<4x128xf32>
    %444 = vector.extract_strided_slice %394 {offsets = [0, 0], sizes = [4, 128], strides = [1, 1]} : vector<4x256xf32> to vector<4x128xf32>
    %445 = arith.mulf %414, %444 : vector<4x128xf32>
    %446 = arith.addf %443, %445 : vector<4x128xf32>
    %cst_93 = arith.constant 1.000000e+00 : f32
    %447 = vector.broadcast %cst_93 : f32 to vector<4x128xf32>
    %448 = arith.subf %447, %435 : vector<4x128xf32>
    %449 = arith.mulf %448, %440 : vector<4x128xf32>
    %450 = vector.extract_strided_slice %394 {offsets = [0, 128], sizes = [4, 128], strides = [1, 1]} : vector<4x256xf32> to vector<4x128xf32>
    %451 = arith.mulf %435, %450 : vector<4x128xf32>
    %452 = arith.addf %449, %451 : vector<4x128xf32>
    %453 = tpu.concatenate %446, %452 in 1 : vector<4x128xf32>, vector<4x128xf32> -> vector<4x256xf32>
    %454 = arith.truncf %453 : vector<4x256xf32> to vector<4x256xbf16>
    %cst_94 = arith.constant dense<0.000000e+00> : vector<4x768xf32>
    %455 = tpu.matmul %454, %156, %cst_94 {dimension_numbers = #tpu.dot_dimension_numbers<[1], [0], [0], [1], [0, 0, 1, 1], [], []>} : vector<4x256xbf16>, vector<256x768xbf16>, vector<4x768xf32> -> vector<4x768xf32>
    %456 = vector.broadcast %157 : vector<1x768xf32> to vector<4x768xf32>
    %457 = arith.addf %455, %456 : vector<4x768xf32>
    %458 = vector.extract_strided_slice %145 {offsets = [0, 0], sizes = [4, 128], strides = [1, 1]} : vector<4x768xf32> to vector<4x128xf32>
    %459 = vector.extract_strided_slice %457 {offsets = [0, 0], sizes = [4, 128], strides = [1, 1]} : vector<4x768xf32> to vector<4x128xf32>
    %460 = arith.addf %458, %459 : vector<4x128xf32>
    %461 = arith.negf %460 : vector<4x128xf32>
    %462 = math.exp %461 : vector<4x128xf32>
    %cst_95 = arith.constant 1.000000e+00 : f32
    %463 = vector.broadcast %cst_95 : f32 to vector<4x128xf32>
    %464 = arith.addf %463, %462 : vector<4x128xf32>
    %465 = arith.divf %463, %464 : vector<4x128xf32>
    %466 = vector.extract_strided_slice %145 {offsets = [0, 128], sizes = [4, 128], strides = [1, 1]} : vector<4x768xf32> to vector<4x128xf32>
    %467 = vector.extract_strided_slice %457 {offsets = [0, 128], sizes = [4, 128], strides = [1, 1]} : vector<4x768xf32> to vector<4x128xf32>
    %468 = arith.addf %466, %467 : vector<4x128xf32>
    %469 = arith.negf %468 : vector<4x128xf32>
    %470 = math.exp %469 : vector<4x128xf32>
    %cst_96 = arith.constant 1.000000e+00 : f32
    %471 = vector.broadcast %cst_96 : f32 to vector<4x128xf32>
    %472 = arith.addf %471, %470 : vector<4x128xf32>
    %473 = arith.divf %471, %472 : vector<4x128xf32>
    %474 = vector.extract_strided_slice %145 {offsets = [0, 256], sizes = [4, 128], strides = [1, 1]} : vector<4x768xf32> to vector<4x128xf32>
    %475 = vector.extract_strided_slice %457 {offsets = [0, 256], sizes = [4, 128], strides = [1, 1]} : vector<4x768xf32> to vector<4x128xf32>
    %476 = arith.mulf %465, %475 : vector<4x128xf32>
    %477 = arith.addf %474, %476 : vector<4x128xf32>
    %478 = math.tanh %477 : vector<4x128xf32>
    %479 = vector.extract_strided_slice %130 {offsets = [0, 384], sizes = [4, 128], strides = [1, 1]} : vector<4x768xf32> to vector<4x128xf32>
    %480 = vector.extract_strided_slice %457 {offsets = [0, 384], sizes = [4, 128], strides = [1, 1]} : vector<4x768xf32> to vector<4x128xf32>
    %481 = arith.addf %479, %480 : vector<4x128xf32>
    %482 = arith.negf %481 : vector<4x128xf32>
    %483 = math.exp %482 : vector<4x128xf32>
    %cst_97 = arith.constant 1.000000e+00 : f32
    %484 = vector.broadcast %cst_97 : f32 to vector<4x128xf32>
    %485 = arith.addf %484, %483 : vector<4x128xf32>
    %486 = arith.divf %484, %485 : vector<4x128xf32>
    %487 = vector.extract_strided_slice %130 {offsets = [0, 512], sizes = [4, 128], strides = [1, 1]} : vector<4x768xf32> to vector<4x128xf32>
    %488 = vector.extract_strided_slice %457 {offsets = [0, 512], sizes = [4, 128], strides = [1, 1]} : vector<4x768xf32> to vector<4x128xf32>
    %489 = arith.addf %487, %488 : vector<4x128xf32>
    %490 = arith.negf %489 : vector<4x128xf32>
    %491 = math.exp %490 : vector<4x128xf32>
    %cst_98 = arith.constant 1.000000e+00 : f32
    %492 = vector.broadcast %cst_98 : f32 to vector<4x128xf32>
    %493 = arith.addf %492, %491 : vector<4x128xf32>
    %494 = arith.divf %492, %493 : vector<4x128xf32>
    %495 = vector.extract_strided_slice %130 {offsets = [0, 640], sizes = [4, 128], strides = [1, 1]} : vector<4x768xf32> to vector<4x128xf32>
    %496 = vector.extract_strided_slice %457 {offsets = [0, 640], sizes = [4, 128], strides = [1, 1]} : vector<4x768xf32> to vector<4x128xf32>
    %497 = arith.mulf %486, %496 : vector<4x128xf32>
    %498 = arith.addf %495, %497 : vector<4x128xf32>
    %499 = math.tanh %498 : vector<4x128xf32>
    %cst_99 = arith.constant 1.000000e+00 : f32
    %500 = vector.broadcast %cst_99 : f32 to vector<4x128xf32>
    %501 = arith.subf %500, %473 : vector<4x128xf32>
    %502 = arith.mulf %501, %478 : vector<4x128xf32>
    %503 = vector.extract_strided_slice %453 {offsets = [0, 0], sizes = [4, 128], strides = [1, 1]} : vector<4x256xf32> to vector<4x128xf32>
    %504 = arith.mulf %473, %503 : vector<4x128xf32>
    %505 = arith.addf %502, %504 : vector<4x128xf32>
    %cst_100 = arith.constant 1.000000e+00 : f32
    %506 = vector.broadcast %cst_100 : f32 to vector<4x128xf32>
    %507 = arith.subf %506, %494 : vector<4x128xf32>
    %508 = arith.mulf %507, %499 : vector<4x128xf32>
    %509 = vector.extract_strided_slice %453 {offsets = [0, 128], sizes = [4, 128], strides = [1, 1]} : vector<4x256xf32> to vector<4x128xf32>
    %510 = arith.mulf %494, %509 : vector<4x128xf32>
    %511 = arith.addf %508, %510 : vector<4x128xf32>
    %512 = tpu.concatenate %505, %511 in 1 : vector<4x128xf32>, vector<4x128xf32> -> vector<4x256xf32>
    %513 = arith.truncf %512 : vector<4x256xf32> to vector<4x256xbf16>
    %cst_101 = arith.constant dense<0.000000e+00> : vector<4x768xf32>
    %514 = tpu.matmul %513, %156, %cst_101 {dimension_numbers = #tpu.dot_dimension_numbers<[1], [0], [0], [1], [0, 0, 1, 1], [], []>} : vector<4x256xbf16>, vector<256x768xbf16>, vector<4x768xf32> -> vector<4x768xf32>
    %515 = vector.broadcast %157 : vector<1x768xf32> to vector<4x768xf32>
    %516 = arith.addf %514, %515 : vector<4x768xf32>
    %517 = vector.extract_strided_slice %150 {offsets = [0, 0], sizes = [4, 128], strides = [1, 1]} : vector<4x768xf32> to vector<4x128xf32>
    %518 = vector.extract_strided_slice %516 {offsets = [0, 0], sizes = [4, 128], strides = [1, 1]} : vector<4x768xf32> to vector<4x128xf32>
    %519 = arith.addf %517, %518 : vector<4x128xf32>
    %520 = arith.negf %519 : vector<4x128xf32>
    %521 = math.exp %520 : vector<4x128xf32>
    %cst_102 = arith.constant 1.000000e+00 : f32
    %522 = vector.broadcast %cst_102 : f32 to vector<4x128xf32>
    %523 = arith.addf %522, %521 : vector<4x128xf32>
    %524 = arith.divf %522, %523 : vector<4x128xf32>
    %525 = vector.extract_strided_slice %150 {offsets = [0, 128], sizes = [4, 128], strides = [1, 1]} : vector<4x768xf32> to vector<4x128xf32>
    %526 = vector.extract_strided_slice %516 {offsets = [0, 128], sizes = [4, 128], strides = [1, 1]} : vector<4x768xf32> to vector<4x128xf32>
    %527 = arith.addf %525, %526 : vector<4x128xf32>
    %528 = arith.negf %527 : vector<4x128xf32>
    %529 = math.exp %528 : vector<4x128xf32>
    %cst_103 = arith.constant 1.000000e+00 : f32
    %530 = vector.broadcast %cst_103 : f32 to vector<4x128xf32>
    %531 = arith.addf %530, %529 : vector<4x128xf32>
    %532 = arith.divf %530, %531 : vector<4x128xf32>
    %533 = vector.extract_strided_slice %150 {offsets = [0, 256], sizes = [4, 128], strides = [1, 1]} : vector<4x768xf32> to vector<4x128xf32>
    %534 = vector.extract_strided_slice %516 {offsets = [0, 256], sizes = [4, 128], strides = [1, 1]} : vector<4x768xf32> to vector<4x128xf32>
    %535 = arith.mulf %524, %534 : vector<4x128xf32>
    %536 = arith.addf %533, %535 : vector<4x128xf32>
    %537 = math.tanh %536 : vector<4x128xf32>
    %538 = vector.extract_strided_slice %125 {offsets = [0, 384], sizes = [4, 128], strides = [1, 1]} : vector<4x768xf32> to vector<4x128xf32>
    %539 = vector.extract_strided_slice %516 {offsets = [0, 384], sizes = [4, 128], strides = [1, 1]} : vector<4x768xf32> to vector<4x128xf32>
    %540 = arith.addf %538, %539 : vector<4x128xf32>
    %541 = arith.negf %540 : vector<4x128xf32>
    %542 = math.exp %541 : vector<4x128xf32>
    %cst_104 = arith.constant 1.000000e+00 : f32
    %543 = vector.broadcast %cst_104 : f32 to vector<4x128xf32>
    %544 = arith.addf %543, %542 : vector<4x128xf32>
    %545 = arith.divf %543, %544 : vector<4x128xf32>
    %546 = vector.extract_strided_slice %125 {offsets = [0, 512], sizes = [4, 128], strides = [1, 1]} : vector<4x768xf32> to vector<4x128xf32>
    %547 = vector.extract_strided_slice %516 {offsets = [0, 512], sizes = [4, 128], strides = [1, 1]} : vector<4x768xf32> to vector<4x128xf32>
    %548 = arith.addf %546, %547 : vector<4x128xf32>
    %549 = arith.negf %548 : vector<4x128xf32>
    %550 = math.exp %549 : vector<4x128xf32>
    %cst_105 = arith.constant 1.000000e+00 : f32
    %551 = vector.broadcast %cst_105 : f32 to vector<4x128xf32>
    %552 = arith.addf %551, %550 : vector<4x128xf32>
    %553 = arith.divf %551, %552 : vector<4x128xf32>
    %554 = vector.extract_strided_slice %125 {offsets = [0, 640], sizes = [4, 128], strides = [1, 1]} : vector<4x768xf32> to vector<4x128xf32>
    %555 = vector.extract_strided_slice %516 {offsets = [0, 640], sizes = [4, 128], strides = [1, 1]} : vector<4x768xf32> to vector<4x128xf32>
    %556 = arith.mulf %545, %555 : vector<4x128xf32>
    %557 = arith.addf %554, %556 : vector<4x128xf32>
    %558 = math.tanh %557 : vector<4x128xf32>
    %cst_106 = arith.constant 1.000000e+00 : f32
    %559 = vector.broadcast %cst_106 : f32 to vector<4x128xf32>
    %560 = arith.subf %559, %532 : vector<4x128xf32>
    %561 = arith.mulf %560, %537 : vector<4x128xf32>
    %562 = vector.extract_strided_slice %512 {offsets = [0, 0], sizes = [4, 128], strides = [1, 1]} : vector<4x256xf32> to vector<4x128xf32>
    %563 = arith.mulf %532, %562 : vector<4x128xf32>
    %564 = arith.addf %561, %563 : vector<4x128xf32>
    %cst_107 = arith.constant 1.000000e+00 : f32
    %565 = vector.broadcast %cst_107 : f32 to vector<4x128xf32>
    %566 = arith.subf %565, %553 : vector<4x128xf32>
    %567 = arith.mulf %566, %558 : vector<4x128xf32>
    %568 = vector.extract_strided_slice %512 {offsets = [0, 128], sizes = [4, 128], strides = [1, 1]} : vector<4x256xf32> to vector<4x128xf32>
    %569 = arith.mulf %553, %568 : vector<4x128xf32>
    %570 = arith.addf %567, %569 : vector<4x128xf32>
    %571 = tpu.concatenate %564, %570 in 1 : vector<4x128xf32>, vector<4x128xf32> -> vector<4x256xf32>
    %572 = arith.truncf %571 : vector<4x256xf32> to vector<4x256xbf16>
    %cst_108 = arith.constant dense<0.000000e+00> : vector<4x768xf32>
    %573 = tpu.matmul %572, %156, %cst_108 {dimension_numbers = #tpu.dot_dimension_numbers<[1], [0], [0], [1], [0, 0, 1, 1], [], []>} : vector<4x256xbf16>, vector<256x768xbf16>, vector<4x768xf32> -> vector<4x768xf32>
    %574 = vector.broadcast %157 : vector<1x768xf32> to vector<4x768xf32>
    %575 = arith.addf %573, %574 : vector<4x768xf32>
    %576 = vector.extract_strided_slice %155 {offsets = [0, 0], sizes = [4, 128], strides = [1, 1]} : vector<4x768xf32> to vector<4x128xf32>
    %577 = vector.extract_strided_slice %575 {offsets = [0, 0], sizes = [4, 128], strides = [1, 1]} : vector<4x768xf32> to vector<4x128xf32>
    %578 = arith.addf %576, %577 : vector<4x128xf32>
    %579 = arith.negf %578 : vector<4x128xf32>
    %580 = math.exp %579 : vector<4x128xf32>
    %cst_109 = arith.constant 1.000000e+00 : f32
    %581 = vector.broadcast %cst_109 : f32 to vector<4x128xf32>
    %582 = arith.addf %581, %580 : vector<4x128xf32>
    %583 = arith.divf %581, %582 : vector<4x128xf32>
    %584 = vector.extract_strided_slice %155 {offsets = [0, 128], sizes = [4, 128], strides = [1, 1]} : vector<4x768xf32> to vector<4x128xf32>
    %585 = vector.extract_strided_slice %575 {offsets = [0, 128], sizes = [4, 128], strides = [1, 1]} : vector<4x768xf32> to vector<4x128xf32>
    %586 = arith.addf %584, %585 : vector<4x128xf32>
    %587 = arith.negf %586 : vector<4x128xf32>
    %588 = math.exp %587 : vector<4x128xf32>
    %cst_110 = arith.constant 1.000000e+00 : f32
    %589 = vector.broadcast %cst_110 : f32 to vector<4x128xf32>
    %590 = arith.addf %589, %588 : vector<4x128xf32>
    %591 = arith.divf %589, %590 : vector<4x128xf32>
    %592 = vector.extract_strided_slice %155 {offsets = [0, 256], sizes = [4, 128], strides = [1, 1]} : vector<4x768xf32> to vector<4x128xf32>
    %593 = vector.extract_strided_slice %575 {offsets = [0, 256], sizes = [4, 128], strides = [1, 1]} : vector<4x768xf32> to vector<4x128xf32>
    %594 = arith.mulf %583, %593 : vector<4x128xf32>
    %595 = arith.addf %592, %594 : vector<4x128xf32>
    %596 = math.tanh %595 : vector<4x128xf32>
    %597 = vector.extract_strided_slice %120 {offsets = [0, 384], sizes = [4, 128], strides = [1, 1]} : vector<4x768xf32> to vector<4x128xf32>
    %598 = vector.extract_strided_slice %575 {offsets = [0, 384], sizes = [4, 128], strides = [1, 1]} : vector<4x768xf32> to vector<4x128xf32>
    %599 = arith.addf %597, %598 : vector<4x128xf32>
    %600 = arith.negf %599 : vector<4x128xf32>
    %601 = math.exp %600 : vector<4x128xf32>
    %cst_111 = arith.constant 1.000000e+00 : f32
    %602 = vector.broadcast %cst_111 : f32 to vector<4x128xf32>
    %603 = arith.addf %602, %601 : vector<4x128xf32>
    %604 = arith.divf %602, %603 : vector<4x128xf32>
    %605 = vector.extract_strided_slice %120 {offsets = [0, 512], sizes = [4, 128], strides = [1, 1]} : vector<4x768xf32> to vector<4x128xf32>
    %606 = vector.extract_strided_slice %575 {offsets = [0, 512], sizes = [4, 128], strides = [1, 1]} : vector<4x768xf32> to vector<4x128xf32>
    %607 = arith.addf %605, %606 : vector<4x128xf32>
    %608 = arith.negf %607 : vector<4x128xf32>
    %609 = math.exp %608 : vector<4x128xf32>
    %cst_112 = arith.constant 1.000000e+00 : f32
    %610 = vector.broadcast %cst_112 : f32 to vector<4x128xf32>
    %611 = arith.addf %610, %609 : vector<4x128xf32>
    %612 = arith.divf %610, %611 : vector<4x128xf32>
    %613 = vector.extract_strided_slice %120 {offsets = [0, 640], sizes = [4, 128], strides = [1, 1]} : vector<4x768xf32> to vector<4x128xf32>
    %614 = vector.extract_strided_slice %575 {offsets = [0, 640], sizes = [4, 128], strides = [1, 1]} : vector<4x768xf32> to vector<4x128xf32>
    %615 = arith.mulf %604, %614 : vector<4x128xf32>
    %616 = arith.addf %613, %615 : vector<4x128xf32>
    %617 = math.tanh %616 : vector<4x128xf32>
    %cst_113 = arith.constant 1.000000e+00 : f32
    %618 = vector.broadcast %cst_113 : f32 to vector<4x128xf32>
    %619 = arith.subf %618, %591 : vector<4x128xf32>
    %620 = arith.mulf %619, %596 : vector<4x128xf32>
    %621 = vector.extract_strided_slice %571 {offsets = [0, 0], sizes = [4, 128], strides = [1, 1]} : vector<4x256xf32> to vector<4x128xf32>
    %622 = arith.mulf %591, %621 : vector<4x128xf32>
    %623 = arith.addf %620, %622 : vector<4x128xf32>
    %cst_114 = arith.constant 1.000000e+00 : f32
    %624 = vector.broadcast %cst_114 : f32 to vector<4x128xf32>
    %625 = arith.subf %624, %612 : vector<4x128xf32>
    %626 = arith.mulf %625, %617 : vector<4x128xf32>
    %627 = vector.extract_strided_slice %571 {offsets = [0, 128], sizes = [4, 128], strides = [1, 1]} : vector<4x256xf32> to vector<4x128xf32>
    %628 = arith.mulf %612, %627 : vector<4x128xf32>
    %629 = arith.addf %626, %628 : vector<4x128xf32>
    %630 = tpu.concatenate %623, %629 in 1 : vector<4x128xf32>, vector<4x128xf32> -> vector<4x256xf32>
    %c0_115 = arith.constant 0 : index
    %c0_116 = arith.constant 0 : index
    %631 = vector.load %arg19[%c0_115, %c0_116] : memref<256x128xbf16, #tpu.memory_space<vmem>>, vector<256x128xbf16>
    %632 = arith.truncf %630 : vector<4x256xf32> to vector<4x256xbf16>
    %cst_117 = arith.constant dense<0.000000e+00> : vector<4x128xf32>
    %633 = tpu.matmul %632, %631, %cst_117 {dimension_numbers = #tpu.dot_dimension_numbers<[1], [0], [0], [1], [0, 0, 1, 1], [], []>} : vector<4x256xbf16>, vector<256x128xbf16>, vector<4x128xf32> -> vector<4x128xf32>
    %c0_118 = arith.constant 0 : index
    %c0_119 = arith.constant 0 : index
    %634 = vector.load %arg20[%c0_118, %c0_119] : memref<1x128xf32, #tpu.memory_space<vmem>>, vector<1x128xf32>
    %635 = vector.broadcast %634 : vector<1x128xf32> to vector<4x128xf32>
    %636 = arith.addf %633, %635 : vector<4x128xf32>
    %c0_120 = arith.constant 0 : index
    %c0_121 = arith.constant 0 : index
    %c0_122 = arith.constant 0 : index
    %637 = vector.load %arg21[%c0_120, %c0_121, %c0_122] : memref<1x4x128xf32, #tpu.memory_space<vmem>>, vector<1x4x128xf32>
    %638 = vector.shape_cast %637 : vector<1x4x128xf32> to vector<4x128xf32>
    %639 = vector.shape_cast %636 : vector<4x128xf32> to vector<1x4x128xf32>
    tpu.vector_store %arg21[%c0_120, %c0_121, %c0_122], %639 {strides = array<i32>} : memref<1x4x128xf32, #tpu.memory_space<vmem>>, vector<1x4x128xf32>,
    return
  }
  func.func @transform_0(%arg0: i32) -> (i32, i32) {
    %c0_i32 = arith.constant 0 : i32
    %c0_i32_0 = arith.constant 0 : i32
    return %arg0, %c0_i32 : i32, i32
  }
  func.func @transform_1(%arg0: i32) -> (i32, i32, i32) {
    %c0_i32 = arith.constant 0 : i32
    %c0_i32_0 = arith.constant 0 : i32
    %c0_i32_1 = arith.constant 0 : i32
    return %arg0, %c0_i32, %c0_i32_0 : i32, i32, i32
  }
  func.func @transform_2(%arg0: i32) -> (i32, i32) {
    %c0_i32 = arith.constant 0 : i32
    %c0_i32_0 = arith.constant 0 : i32
    %c0_i32_1 = arith.constant 0 : i32
    return %c0_i32, %c0_i32_0 : i32, i32
  }
  func.func @transform_3(%arg0: i32) -> (i32, i32) {
    %c0_i32 = arith.constant 0 : i32
    %c0_i32_0 = arith.constant 0 : i32
    %c0_i32_1 = arith.constant 0 : i32
    return %c0_i32, %c0_i32_0 : i32, i32
  }
  func.func @transform_4(%arg0: i32) -> (i32, i32) {
    %c0_i32 = arith.constant 0 : i32
    %c0_i32_0 = arith.constant 0 : i32
    %c0_i32_1 = arith.constant 0 : i32
    return %c0_i32, %c0_i32_0 : i32, i32
  }
  func.func @transform_5(%arg0: i32) -> (i32, i32) {
    %c0_i32 = arith.constant 0 : i32
    %c0_i32_0 = arith.constant 0 : i32
    %c0_i32_1 = arith.constant 0 : i32
    return %c0_i32, %c0_i32_0 : i32, i32
  }
  func.func @transform_6(%arg0: i32) -> (i32, i32) {
    %c0_i32 = arith.constant 0 : i32
    %c0_i32_0 = arith.constant 0 : i32
    %c0_i32_1 = arith.constant 0 : i32
    return %c0_i32, %c0_i32_0 : i32, i32
  }
  func.func @transform_7(%arg0: i32) -> (i32, i32) {
    %c0_i32 = arith.constant 0 : i32
    %c0_i32_0 = arith.constant 0 : i32
    %c0_i32_1 = arith.constant 0 : i32
    return %c0_i32, %c0_i32_0 : i32, i32
  }
  func.func @transform_8(%arg0: i32) -> (i32, i32) {
    %c0_i32 = arith.constant 0 : i32
    %c0_i32_0 = arith.constant 0 : i32
    %c0_i32_1 = arith.constant 0 : i32
    return %c0_i32, %c0_i32_0 : i32, i32
  }
  func.func @transform_9(%arg0: i32) -> (i32, i32) {
    %c0_i32 = arith.constant 0 : i32
    %c0_i32_0 = arith.constant 0 : i32
    %c0_i32_1 = arith.constant 0 : i32
    return %c0_i32, %c0_i32_0 : i32, i32
  }
  func.func @transform_10(%arg0: i32) -> (i32, i32) {
    %c0_i32 = arith.constant 0 : i32
    %c0_i32_0 = arith.constant 0 : i32
    %c0_i32_1 = arith.constant 0 : i32
    return %c0_i32, %c0_i32_0 : i32, i32
  }
  func.func @transform_11(%arg0: i32) -> (i32, i32) {
    %c0_i32 = arith.constant 0 : i32
    %c0_i32_0 = arith.constant 0 : i32
    %c0_i32_1 = arith.constant 0 : i32
    return %c0_i32, %c0_i32_0 : i32, i32
  }
  func.func @transform_12(%arg0: i32) -> (i32, i32) {
    %c0_i32 = arith.constant 0 : i32
    %c0_i32_0 = arith.constant 0 : i32
    %c0_i32_1 = arith.constant 0 : i32
    return %c0_i32, %c0_i32_0 : i32, i32
  }
  func.func @transform_13(%arg0: i32) -> (i32, i32) {
    %c0_i32 = arith.constant 0 : i32
    %c0_i32_0 = arith.constant 0 : i32
    %c0_i32_1 = arith.constant 0 : i32
    return %c0_i32, %c0_i32_0 : i32, i32
  }
  func.func @transform_14(%arg0: i32) -> (i32, i32) {
    %c0_i32 = arith.constant 0 : i32
    %c0_i32_0 = arith.constant 0 : i32
    %c0_i32_1 = arith.constant 0 : i32
    return %c0_i32, %c0_i32_0 : i32, i32
  }
  func.func @transform_15(%arg0: i32) -> (i32, i32) {
    %c0_i32 = arith.constant 0 : i32
    %c0_i32_0 = arith.constant 0 : i32
    %c0_i32_1 = arith.constant 0 : i32
    return %c0_i32, %c0_i32_0 : i32, i32
  }
  func.func @transform_16(%arg0: i32) -> (i32, i32) {
    %c0_i32 = arith.constant 0 : i32
    %c0_i32_0 = arith.constant 0 : i32
    %c0_i32_1 = arith.constant 0 : i32
    return %c0_i32, %c0_i32_0 : i32, i32
  }
  func.func @transform_17(%arg0: i32) -> (i32, i32) {
    %c0_i32 = arith.constant 0 : i32
    %c0_i32_0 = arith.constant 0 : i32
    %c0_i32_1 = arith.constant 0 : i32
    return %c0_i32, %c0_i32_0 : i32, i32
  }
  func.func @transform_18(%arg0: i32) -> (i32, i32) {
    %c0_i32 = arith.constant 0 : i32
    %c0_i32_0 = arith.constant 0 : i32
    %c0_i32_1 = arith.constant 0 : i32
    return %c0_i32, %c0_i32_0 : i32, i32
  }
  func.func @transform_19(%arg0: i32) -> (i32, i32) {
    %c0_i32 = arith.constant 0 : i32
    %c0_i32_0 = arith.constant 0 : i32
    %c0_i32_1 = arith.constant 0 : i32
    return %c0_i32, %c0_i32_0 : i32, i32
  }
  func.func @transform_20(%arg0: i32) -> (i32, i32, i32) {
    %c0_i32 = arith.constant 0 : i32
    %c0_i32_0 = arith.constant 0 : i32
    %c0_i32_1 = arith.constant 0 : i32
    return %arg0, %c0_i32, %c0_i32_0 : i32, i32, i32
  }
}

</mosaic_0001>

<llo_original>
// kernel: tpu_custom_call.1
$region0: #{tpu_custom_call.1}
  #allocation0 [shape = 'u32[]', space=smem, size = 0x4, offset = 0x4, fixed_abs, tag = 'smem constant byte address 0x4 - core index']
  #allocation1 [shape = 'u32[144,128]{1,0:T(1,128)}', space=vmem, size = 0x12000, scoped, tag = 'internal scratch']
  %s0 = inlined_call_operand.vmem [shape: f32[64,32], index: 0, kind: input, shape index: {}]
  %s1 = inlined_call_operand.hbm [shape: f32[2,32,32], index: 1, kind: input, shape index: {}]
  %s2 = inlined_call_operand.hbm [shape: bf16[32,384], index: 2, kind: input, shape index: {}]
  %s3 = inlined_call_operand.hbm [shape: f32[1,384], index: 3, kind: input, shape index: {}]
  %s4 = inlined_call_operand.vmem [shape: bf16[128,32], index: 4, kind: input, shape index: {}]
  %s5 = inlined_call_operand.vmem [shape: f32[1,32], index: 5, kind: input, shape index: {}]
  %s6 = inlined_call_operand.hbm [shape: f32[1,32], index: 6, kind: input, shape index: {}]
  %s7 = inlined_call_operand.hbm [shape: f32[1,32], index: 7, kind: input, shape index: {}]
  %s8 = inlined_call_operand.vmem [shape: bf16[32,64], index: 8, kind: input, shape index: {}]
  %s9 = inlined_call_operand.hbm [shape: f32[1,64], index: 9, kind: input, shape index: {}]
  %s10 = inlined_call_operand.vmem [shape: bf16[64,32], index: 10, kind: input, shape index: {}]
  %s11 = inlined_call_operand.hbm [shape: f32[1,32], index: 11, kind: input, shape index: {}]
  %s12 = inlined_call_operand.hbm [shape: f32[1,32], index: 12, kind: input, shape index: {}]
  %s13 = inlined_call_operand.vmem [shape: f32[1,32], index: 13, kind: input, shape index: {}]
  %s14 = inlined_call_operand.vmem [shape: bf16[32,768], index: 14, kind: input, shape index: {}]
  %s15 = inlined_call_operand.vmem [shape: f32[1,768], index: 15, kind: input, shape index: {}]
  %s16 = inlined_call_operand.hbm [shape: bf16[256,768], index: 16, kind: input, shape index: {}]
  %s17 = inlined_call_operand.vmem [shape: f32[1,768], index: 17, kind: input, shape index: {}]
  %s18 = inlined_call_operand.vmem [shape: bf16[256,128], index: 18, kind: input, shape index: {}]
  %s19 = inlined_call_operand.vmem [shape: f32[1,128], index: 19, kind: input, shape index: {}]
  %s20 = inlined_call_operand.hbm [shape: f32[2,4,128], index: 20, kind: output, shape index: {}]
  %s21 = sld [smem:[#allocation0]]
  $region149: #{tpu_custom_call.1} parent=0
    _
  %s23 = ssub.s32 1, %s21
  %s24 = scalar_select 0, %s23, %s21
  $region1: #{tpu_custom_call.1} parent=0
    #allocation2 [shape = 'u8[32768]{0}', space=vmem, size = 0x8000, scoped, tag = 'input window, operand 1']
    #allocation3 [shape = 's32[2]{0}', space=sflag, size = 0x8, scoped, tag = 'scoped memory for tpu_custom_call.1']
    #allocation4 [shape = 's32[2]{0}', space=sflag, size = 0x8, scoped, tag = 'scoped memory for tpu_custom_call.1']
    #allocation5 [shape = 'u8[24576]{0}', space=vmem, size = 0x6000, scoped, tag = 'input window, operand 2, single buffered']
    #allocation6 [shape = 's32[1]{0}', space=sflag, size = 0x4, scoped, tag = 'scoped memory for tpu_custom_call.1']
    #allocation7 [shape = 'u8[1536]{0}', space=vmem, size = 0x800, scoped, tag = 'input window, operand 3, single buffered']
    #allocation8 [shape = 'u8[512]{0}', space=vmem, size = 0x400, scoped, tag = 'input window, operand 6, single buffered']
    #allocation9 [shape = 's32[1]{0}', space=sflag, size = 0x4, scoped, tag = 'scoped memory for tpu_custom_call.1']
    #allocation10 [shape = 'u8[512]{0}', space=vmem, size = 0x400, scoped, tag = 'input window, operand 7, single buffered']
    #allocation11 [shape = 'u8[512]{0}', space=vmem, size = 0x400, scoped, tag = 'input window, operand 9, single buffered']
    #allocation12 [shape = 's32[1]{0}', space=sflag, size = 0x4, scoped, tag = 'scoped memory for tpu_custom_call.1']
    #allocation13 [shape = 'u8[512]{0}', space=vmem, size = 0x400, scoped, tag = 'input window, operand 11, single buffered']
    #allocation14 [shape = 'u8[512]{0}', space=vmem, size = 0x400, scoped, tag = 'input window, operand 12, single buffered']
    #allocation15 [shape = 's32[1]{0}', space=sflag, size = 0x4, scoped, tag = 'scoped memory for tpu_custom_call.1']
    #allocation16 [shape = 'u8[393216]{0}', space=vmem, size = 0x60000, scoped, tag = 'input window, operand 16, single buffered']
    #allocation17 [shape = 'u8[4096]{0}', space=vmem, size = 0x1000, scoped, tag = 'output window, operand 0']
    %25 = vsyncpa [#allocation3], 0
    %s26 = scalar_lea.sflag [#allocation3], 1
    %27 = vsyncpa %s26, 0
    %28 = vsyncpa [#allocation6], 0
    %29 = vsyncpa [#allocation9], 0
    %30 = vsyncpa [#allocation12], 0
    %31 = vsyncpa [#allocation15], 0
    %32 = vsyncpa [#allocation4], 0
    %s33 = scalar_lea.sflag [#allocation4], 1
    %34 = vsyncpa %s33, 0
    loop: start=0, step=1, limit=4
    $region2: #{tpu_custom_call.1} parent=1 // loop_pre_header
      _
    $region3: #{tpu_custom_call.1} parent=1 // loop_header
      %s36 = sphi 0, %s40
      %p37 = scmp.ge.s32.totalorder %s36, 4
      %s46 = sphi 0, %s48
      %s49 = sphi 0, %s46
      %s50 = sphi 0, %s49
      %s66 = sphi 0, %s50
      %s72 = sphi 0, %s74
      %s75 = sphi 0, %s72
      %s76 = sphi 0, %s75
      %s92 = sphi 0, %s76
      %s96 = sphi 0, %s96
      %s98 = sphi 0, %s96
      %s99 = sphi 0, %s98
      %s113 = sphi 0, %s99
      %s117 = sphi 0, %s117
      %s119 = sphi 0, %s117
      %s120 = sphi 0, %s119
      %s134 = sphi 0, %s120
      %s138 = sphi 0, %s138
      %s140 = sphi 0, %s138
      %s141 = sphi 0, %s140
      %s155 = sphi 0, %s141
      %s159 = sphi 0, %s159
      %s161 = sphi 0, %s159
      %s162 = sphi 0, %s161
      %s176 = sphi 0, %s162
      %s180 = sphi 0, %s180
      %s182 = sphi 0, %s180
      %s183 = sphi 0, %s182
      %s197 = sphi 0, %s183
      %s201 = sphi 0, %s201
      %s203 = sphi 0, %s201
      %s204 = sphi 0, %s203
      %s218 = sphi 0, %s204
      %s222 = sphi 0, %s222
      %s224 = sphi 0, %s222
      %s225 = sphi 0, %s224
      %s239 = sphi 0, %s225
      %s243 = sphi 0, %s243
      %s245 = sphi 0, %s243
      %s246 = sphi 0, %s245
      %s260 = sphi 0, %s246
      %s264 = sphi 0, %s264
      %s266 = sphi 0, %s264
      %s267 = sphi 0, %s266
      %s281 = sphi 0, %s267
      %s285 = sphi 0, %s285
      %s287 = sphi 0, %s285
      %s288 = sphi 0, %s287
      %s302 = sphi 0, %s288
      %s306 = sphi 0, %s306
      %s308 = sphi 0, %s306
      %s309 = sphi 0, %s308
      %s323 = sphi 0, %s309
      %s327 = sphi 0, %s327
      %s329 = sphi 0, %s327
      %s330 = sphi 0, %s329
      %s344 = sphi 0, %s330
      %s348 = sphi 0, %s348
      %s350 = sphi 0, %s348
      %s351 = sphi 0, %s350
      %s365 = sphi 0, %s351
      %s369 = sphi 0, %s369
      %s371 = sphi 0, %s369
      %s372 = sphi 0, %s371
      %s386 = sphi 0, %s372
      %s390 = sphi 0, %s390
      %s392 = sphi 0, %s390
      %s393 = sphi 0, %s392
      %s407 = sphi 0, %s393
      %s411 = sphi 0, %s411
      %s413 = sphi 0, %s411
      %s414 = sphi 0, %s413
      %s428 = sphi 0, %s414
      %s432 = sphi 0, %s432
      %s434 = sphi 0, %s432
      %s435 = sphi 0, %s434
      %s449 = sphi 0, %s435
      %s453 = sphi 0, %s453
      %s455 = sphi 0, %s453
      %s456 = sphi 0, %s455
      %s470 = sphi 0, %s456
      %s476 = sphi 0, %s478
      %s479 = sphi 0, %s476
      %s480 = sphi 0, %s479
      %s496 = sphi 0, %s480
    $region4: #{tpu_custom_call.1} parent=1 // loop_header_branch
      %39 = sbr.rel (%p37) target = $region8
    $region5: #{tpu_custom_call.1} parent=1 // loop_body
      %s41 = ssub.s32 %s36, 1
      %s42 = ssub.s32 %s36, 2
      %s43 = sadd.s32 %s36, 1
      %s44 = ssub.s32 %s36, %s43
      %p45 = scmp.eq.s32.totalorder %s44, 0
      %s47 = sadd.s32 %s46, 1
      %s48 = scalar_select %p45, %s46, %s47
      %p51 = pneg %p45
      %p52 = scmp.eq.s32.totalorder %s36, 1
      %p53 = por %p51, %p52
      %p54 = scmp.ne.s32.totalorder %s46, %s49
      %p55 = scmp.eq.s32.totalorder %s36, 0
      %p56 = por %p54, %p55
      %p57 = scmp.ne.s32.totalorder %s46, %s49
      %p58 = scmp.eq.s32.totalorder %s41, 1
      %p59 = por %p57, %p58
      %p60 = scmp.ne.s32.totalorder %s49, %s50
      %p61 = scmp.eq.s32.totalorder %s41, 0
      %p62 = por %p60, %p61
      %p63 = scmp.ne.s32.totalorder %s49, %s50
      %p64 = scmp.eq.s32.totalorder %s42, 1
      %p65 = por %p63, %p64
      %p67 = scmp.ne.s32.totalorder %s50, %s66
      %p68 = scmp.eq.s32.totalorder %s42, 0
      %p69 = por %p67, %p68
      %s70 = ssub.s32 %s36, %s43
      %p71 = scmp.eq.s32.totalorder %s70, 0
      %s73 = sadd.s32 %s72, 1
      %s74 = scalar_select %p71, %s72, %s73
      %p77 = pneg %p71
      %p78 = scmp.eq.s32.totalorder %s36, 1
      %p79 = por %p77, %p78
      %p80 = scmp.ne.s32.totalorder %s72, %s75
      %p81 = scmp.eq.s32.totalorder %s36, 0
      %p82 = por %p80, %p81
      %p83 = scmp.ne.s32.totalorder %s72, %s75
      %p84 = scmp.eq.s32.totalorder %s41, 1
      %p85 = por %p83, %p84
      %p86 = scmp.ne.s32.totalorder %s75, %s76
      %p87 = scmp.eq.s32.totalorder %s41, 0
      %p88 = por %p86, %p87
      %p89 = scmp.ne.s32.totalorder %s75, %s76
      %p90 = scmp.eq.s32.totalorder %s42, 1
      %p91 = por %p89, %p90
      %p93 = scmp.ne.s32.totalorder %s76, %s92
      %p94 = scmp.eq.s32.totalorder %s42, 0
      %p95 = por %p93, %p94
      %s97 = sadd.s32 %s96, 1
      %p100 = scmp.eq.s32.totalorder %s36, 1
      %p101 = scmp.ne.s32.totalorder %s96, %s98
      %p102 = scmp.eq.s32.totalorder %s36, 0
      %p103 = por %p101, %p102
      %p104 = scmp.ne.s32.totalorder %s96, %s98
      %p105 = scmp.eq.s32.totalorder %s41, 1
      %p106 = por %p104, %p105
      %p107 = scmp.ne.s32.totalorder %s98, %s99
      %p108 = scmp.eq.s32.totalorder %s41, 0
      %p109 = por %p107, %p108
      %p110 = scmp.ne.s32.totalorder %s98, %s99
      %p111 = scmp.eq.s32.totalorder %s42, 1
      %p112 = por %p110, %p111
      %p114 = scmp.ne.s32.totalorder %s99, %s113
      %p115 = scmp.eq.s32.totalorder %s42, 0
      %p116 = por %p114, %p115
      %s118 = sadd.s32 %s117, 1
      %p121 = scmp.eq.s32.totalorder %s36, 1
      %p122 = scmp.ne.s32.totalorder %s117, %s119
      %p123 = scmp.eq.s32.totalorder %s36, 0
      %p124 = por %p122, %p123
      %p125 = scmp.ne.s32.totalorder %s117, %s119
      %p126 = scmp.eq.s32.totalorder %s41, 1
      %p127 = por %p125, %p126
      %p128 = scmp.ne.s32.totalorder %s119, %s120
      %p129 = scmp.eq.s32.totalorder %s41, 0
      %p130 = por %p128, %p129
      %p131 = scmp.ne.s32.totalorder %s119, %s120
      %p132 = scmp.eq.s32.totalorder %s42, 1
      %p133 = por %p131, %p132
      %p135 = scmp.ne.s32.totalorder %s120, %s134
      %p136 = scmp.eq.s32.totalorder %s42, 0
      %p137 = por %p135, %p136
      %s139 = sadd.s32 %s138, 1
      %p142 = scmp.eq.s32.totalorder %s36, 1
      %p143 = scmp.ne.s32.totalorder %s138, %s140
      %p144 = scmp.eq.s32.totalorder %s36, 0
      %p145 = por %p143, %p144
      %p146 = scmp.ne.s32.totalorder %s138, %s140
      %p147 = scmp.eq.s32.totalorder %s41, 1
      %p148 = por %p146, %p147
      %p149 = scmp.ne.s32.totalorder %s140, %s141
      %p150 = scmp.eq.s32.totalorder %s41, 0
      %p151 = por %p149, %p150
      %p152 = scmp.ne.s32.totalorder %s140, %s141
      %p153 = scmp.eq.s32.totalorder %s42, 1
      %p154 = por %p152, %p153
      %p156 = scmp.ne.s32.totalorder %s141, %s155
      %p157 = scmp.eq.s32.totalorder %s42, 0
      %p158 = por %p156, %p157
      %s160 = sadd.s32 %s159, 1
      %p163 = scmp.eq.s32.totalorder %s36, 1
      %p164 = scmp.ne.s32.totalorder %s159, %s161
      %p165 = scmp.eq.s32.totalorder %s36, 0
      %p166 = por %p164, %p165
      %p167 = scmp.ne.s32.totalorder %s159, %s161
      %p168 = scmp.eq.s32.totalorder %s41, 1
      %p169 = por %p167, %p168
      %p170 = scmp.ne.s32.totalorder %s161, %s162
      %p171 = scmp.eq.s32.totalorder %s41, 0
      %p172 = por %p170, %p171
      %p173 = scmp.ne.s32.totalorder %s161, %s162
      %p174 = scmp.eq.s32.totalorder %s42, 1
      %p175 = por %p173, %p174
      %p177 = scmp.ne.s32.totalorder %s162, %s176
      %p178 = scmp.eq.s32.totalorder %s42, 0
      %p179 = por %p177, %p178
      %s181 = sadd.s32 %s180, 1
      %p184 = scmp.eq.s32.totalorder %s36, 1
      %p185 = scmp.ne.s32.totalorder %s180, %s182
      %p186 = scmp.eq.s32.totalorder %s36, 0
      %p187 = por %p185, %p186
      %p188 = scmp.ne.s32.totalorder %s180, %s182
      %p189 = scmp.eq.s32.totalorder %s41, 1
      %p190 = por %p188, %p189
      %p191 = scmp.ne.s32.totalorder %s182, %s183
      %p192 = scmp.eq.s32.totalorder %s41, 0
      %p193 = por %p191, %p192
      %p194 = scmp.ne.s32.totalorder %s182, %s183
      %p195 = scmp.eq.s32.totalorder %s42, 1
      %p196 = por %p194, %p195
      %p198 = scmp.ne.s32.totalorder %s183, %s197
      %p199 = scmp.eq.s32.totalorder %s42, 0
      %p200 = por %p198, %p199
      %s202 = sadd.s32 %s201, 1
      %p205 = scmp.eq.s32.totalorder %s36, 1
      %p206 = scmp.ne.s32.totalorder %s201, %s203
      %p207 = scmp.eq.s32.totalorder %s36, 0
      %p208 = por %p206, %p207
      %p209 = scmp.ne.s32.totalorder %s201, %s203
      %p210 = scmp.eq.s32.totalorder %s41, 1
      %p211 = por %p209, %p210
      %p212 = scmp.ne.s32.totalorder %s203, %s204
      %p213 = scmp.eq.s32.totalorder %s41, 0
      %p214 = por %p212, %p213
      %p215 = scmp.ne.s32.totalorder %s203, %s204
      %p216 = scmp.eq.s32.totalorder %s42, 1
      %p217 = por %p215, %p216
      %p219 = scmp.ne.s32.totalorder %s204, %s218
      %p220 = scmp.eq.s32.totalorder %s42, 0
      %p221 = por %p219, %p220
      %s223 = sadd.s32 %s222, 1
      %p226 = scmp.eq.s32.totalorder %s36, 1
      %p227 = scmp.ne.s32.totalorder %s222, %s224
      %p228 = scmp.eq.s32.totalorder %s36, 0
      %p229 = por %p227, %p228
      %p230 = scmp.ne.s32.totalorder %s222, %s224
      %p231 = scmp.eq.s32.totalorder %s41, 1
      %p232 = por %p230, %p231
      %p233 = scmp.ne.s32.totalorder %s224, %s225
      %p234 = scmp.eq.s32.totalorder %s41, 0
      %p235 = por %p233, %p234
      %p236 = scmp.ne.s32.totalorder %s224, %s225
      %p237 = scmp.eq.s32.totalorder %s42, 1
      %p238 = por %p236, %p237
      %p240 = scmp.ne.s32.totalorder %s225, %s239
      %p241 = scmp.eq.s32.totalorder %s42, 0
      %p242 = por %p240, %p241
      %s244 = sadd.s32 %s243, 1
      %p247 = scmp.eq.s32.totalorder %s36, 1
      %p248 = scmp.ne.s32.totalorder %s243, %s245
      %p249 = scmp.eq.s32.totalorder %s36, 0
      %p250 = por %p248, %p249
      %p251 = scmp.ne.s32.totalorder %s243, %s245
      %p252 = scmp.eq.s32.totalorder %s41, 1
      %p253 = por %p251, %p252
      %p254 = scmp.ne.s32.totalorder %s245, %s246
      %p255 = scmp.eq.s32.totalorder %s41, 0
      %p256 = por %p254, %p255
      %p257 = scmp.ne.s32.totalorder %s245, %s246
      %p258 = scmp.eq.s32.totalorder %s42, 1
      %p259 = por %p257, %p258
      %p261 = scmp.ne.s32.totalorder %s246, %s260
      %p262 = scmp.eq.s32.totalorder %s42, 0
      %p263 = por %p261, %p262
      %s265 = sadd.s32 %s264, 1
      %p268 = scmp.eq.s32.totalorder %s36, 1
      %p269 = scmp.ne.s32.totalorder %s264, %s266
      %p270 = scmp.eq.s32.totalorder %s36, 0
      %p271 = por %p269, %p270
      %p272 = scmp.ne.s32.totalorder %s264, %s266
      %p273 = scmp.eq.s32.totalorder %s41, 1
      %p274 = por %p272, %p273
      %p275 = scmp.ne.s32.totalorder %s266, %s267
      %p276 = scmp.eq.s32.totalorder %s41, 0
      %p277 = por %p275, %p276
      %p278 = scmp.ne.s32.totalorder %s266, %s267
      %p279 = scmp.eq.s32.totalorder %s42, 1
      %p280 = por %p278, %p279
      %p282 = scmp.ne.s32.totalorder %s267, %s281
      %p283 = scmp.eq.s32.totalorder %s42, 0
      %p284 = por %p282, %p283
      %s286 = sadd.s32 %s285, 1
      %p289 = scmp.eq.s32.totalorder %s36, 1
      %p290 = scmp.ne.s32.totalorder %s285, %s287
      %p291 = scmp.eq.s32.totalorder %s36, 0
      %p292 = por %p290, %p291
      %p293 = scmp.ne.s32.totalorder %s285, %s287
      %p294 = scmp.eq.s32.totalorder %s41, 1
      %p295 = por %p293, %p294
      %p296 = scmp.ne.s32.totalorder %s287, %s288
      %p297 = scmp.eq.s32.totalorder %s41, 0
      %p298 = por %p296, %p297
      %p299 = scmp.ne.s32.totalorder %s287, %s288
      %p300 = scmp.eq.s32.totalorder %s42, 1
      %p301 = por %p299, %p300
      %p303 = scmp.ne.s32.totalorder %s288, %s302
      %p304 = scmp.eq.s32.totalorder %s42, 0
      %p305 = por %p303, %p304
      %s307 = sadd.s32 %s306, 1
      %p310 = scmp.eq.s32.totalorder %s36, 1
      %p311 = scmp.ne.s32.totalorder %s306, %s308
      %p312 = scmp.eq.s32.totalorder %s36, 0
      %p313 = por %p311, %p312
      %p314 = scmp.ne.s32.totalorder %s306, %s308
      %p315 = scmp.eq.s32.totalorder %s41, 1
      %p316 = por %p314, %p315
      %p317 = scmp.ne.s32.totalorder %s308, %s309
      %p318 = scmp.eq.s32.totalorder %s41, 0
      %p319 = por %p317, %p318
      %p320 = scmp.ne.s32.totalorder %s308, %s309
      %p321 = scmp.eq.s32.totalorder %s42, 1
      %p322 = por %p320, %p321
      %p324 = scmp.ne.s32.totalorder %s309, %s323
      %p325 = scmp.eq.s32.totalorder %s42, 0
      %p326 = por %p324, %p325
      %s328 = sadd.s32 %s327, 1
      %p331 = scmp.eq.s32.totalorder %s36, 1
      %p332 = scmp.ne.s32.totalorder %s327, %s329
      %p333 = scmp.eq.s32.totalorder %s36, 0
      %p334 = por %p332, %p333
      %p335 = scmp.ne.s32.totalorder %s327, %s329
      %p336 = scmp.eq.s32.totalorder %s41, 1
      %p337 = por %p335, %p336
      %p338 = scmp.ne.s32.totalorder %s329, %s330
      %p339 = scmp.eq.s32.totalorder %s41, 0
      %p340 = por %p338, %p339
      %p341 = scmp.ne.s32.totalorder %s329, %s330
      %p342 = scmp.eq.s32.totalorder %s42, 1
      %p343 = por %p341, %p342
      %p345 = scmp.ne.s32.totalorder %s330, %s344
      %p346 = scmp.eq.s32.totalorder %s42, 0
      %p347 = por %p345, %p346
      %s349 = sadd.s32 %s348, 1
      %p352 = scmp.eq.s32.totalorder %s36, 1
      %p353 = scmp.ne.s32.totalorder %s348, %s350
      %p354 = scmp.eq.s32.totalorder %s36, 0
      %p355 = por %p353, %p354
      %p356 = scmp.ne.s32.totalorder %s348, %s350
      %p357 = scmp.eq.s32.totalorder %s41, 1
      %p358 = por %p356, %p357
      %p359 = scmp.ne.s32.totalorder %s350, %s351
      %p360 = scmp.eq.s32.totalorder %s41, 0
      %p361 = por %p359, %p360
      %p362 = scmp.ne.s32.totalorder %s350, %s351
      %p363 = scmp.eq.s32.totalorder %s42, 1
      %p364 = por %p362, %p363
      %p366 = scmp.ne.s32.totalorder %s351, %s365
      %p367 = scmp.eq.s32.totalorder %s42, 0
      %p368 = por %p366, %p367
      %s370 = sadd.s32 %s369, 1
      %p373 = scmp.eq.s32.totalorder %s36, 1
      %p374 = scmp.ne.s32.totalorder %s369, %s371
      %p375 = scmp.eq.s32.totalorder %s36, 0
      %p376 = por %p374, %p375
      %p377 = scmp.ne.s32.totalorder %s369, %s371
      %p378 = scmp.eq.s32.totalorder %s41, 1
      %p379 = por %p377, %p378
      %p380 = scmp.ne.s32.totalorder %s371, %s372
      %p381 = scmp.eq.s32.totalorder %s41, 0
      %p382 = por %p380, %p381
      %p383 = scmp.ne.s32.totalorder %s371, %s372
      %p384 = scmp.eq.s32.totalorder %s42, 1
      %p385 = por %p383, %p384
      %p387 = scmp.ne.s32.totalorder %s372, %s386
      %p388 = scmp.eq.s32.totalorder %s42, 0
      %p389 = por %p387, %p388
      %s391 = sadd.s32 %s390, 1
      %p394 = scmp.eq.s32.totalorder %s36, 1
      %p395 = scmp.ne.s32.totalorder %s390, %s392
      %p396 = scmp.eq.s32.totalorder %s36, 0
      %p397 = por %p395, %p396
      %p398 = scmp.ne.s32.totalorder %s390, %s392
      %p399 = scmp.eq.s32.totalorder %s41, 1
      %p400 = por %p398, %p399
      %p401 = scmp.ne.s32.totalorder %s392, %s393
      %p402 = scmp.eq.s32.totalorder %s41, 0
      %p403 = por %p401, %p402
      %p404 = scmp.ne.s32.totalorder %s392, %s393
      %p405 = scmp.eq.s32.totalorder %s42, 1
      %p406 = por %p404, %p405
      %p408 = scmp.ne.s32.totalorder %s393, %s407
      %p409 = scmp.eq.s32.totalorder %s42, 0
      %p410 = por %p408, %p409
      %s412 = sadd.s32 %s411, 1
      %p415 = scmp.eq.s32.totalorder %s36, 1
      %p416 = scmp.ne.s32.totalorder %s411, %s413
      %p417 = scmp.eq.s32.totalorder %s36, 0
      %p418 = por %p416, %p417
      %p419 = scmp.ne.s32.totalorder %s411, %s413
      %p420 = scmp.eq.s32.totalorder %s41, 1
      %p421 = por %p419, %p420
      %p422 = scmp.ne.s32.totalorder %s413, %s414
      %p423 = scmp.eq.s32.totalorder %s41, 0
      %p424 = por %p422, %p423
      %p425 = scmp.ne.s32.totalorder %s413, %s414
      %p426 = scmp.eq.s32.totalorder %s42, 1
      %p427 = por %p425, %p426
      %p429 = scmp.ne.s32.totalorder %s414, %s428
      %p430 = scmp.eq.s32.totalorder %s42, 0
      %p431 = por %p429, %p430
      %s433 = sadd.s32 %s432, 1
      %p436 = scmp.eq.s32.totalorder %s36, 1
      %p437 = scmp.ne.s32.totalorder %s432, %s434
      %p438 = scmp.eq.s32.totalorder %s36, 0
      %p439 = por %p437, %p438
      %p440 = scmp.ne.s32.totalorder %s432, %s434
      %p441 = scmp.eq.s32.totalorder %s41, 1
      %p442 = por %p440, %p441
      %p443 = scmp.ne.s32.totalorder %s434, %s435
      %p444 = scmp.eq.s32.totalorder %s41, 0
      %p445 = por %p443, %p444
      %p446 = scmp.ne.s32.totalorder %s434, %s435
      %p447 = scmp.eq.s32.totalorder %s42, 1
      %p448 = por %p446, %p447
      %p450 = scmp.ne.s32.totalorder %s435, %s449
      %p451 = scmp.eq.s32.totalorder %s42, 0
      %p452 = por %p450, %p451
      %s454 = sadd.s32 %s453, 1
      %p457 = scmp.eq.s32.totalorder %s36, 1
      %p458 = scmp.ne.s32.totalorder %s453, %s455
      %p459 = scmp.eq.s32.totalorder %s36, 0
      %p460 = por %p458, %p459
      %p461 = scmp.ne.s32.totalorder %s453, %s455
      %p462 = scmp.eq.s32.totalorder %s41, 1
      %p463 = por %p461, %p462
      %p464 = scmp.ne.s32.totalorder %s455, %s456
      %p465 = scmp.eq.s32.totalorder %s41, 0
      %p466 = por %p464, %p465
      %p467 = scmp.ne.s32.totalorder %s455, %s456
      %p468 = scmp.eq.s32.totalorder %s42, 1
      %p469 = por %p467, %p468
      %p471 = scmp.ne.s32.totalorder %s456, %s470
      %p472 = scmp.eq.s32.totalorder %s42, 0
      %p473 = por %p471, %p472
      %s474 = ssub.s32 %s36, %s43
      %p475 = scmp.eq.s32.totalorder %s474, 0
      %s477 = sadd.s32 %s476, 1
      %s478 = scalar_select %p475, %s476, %s477
      %p481 = pneg %p475
      %p482 = scmp.eq.s32.totalorder %s36, 1
      %p483 = por %p481, %p482
      %p484 = scmp.ne.s32.totalorder %s476, %s479
      %p485 = scmp.eq.s32.totalorder %s36, 0
      %p486 = por %p484, %p485
      %p487 = scmp.ne.s32.totalorder %s476, %s479
      %p488 = scmp.eq.s32.totalorder %s41, 1
      %p489 = por %p487, %p488
      %p490 = scmp.ne.s32.totalorder %s479, %s480
      %p491 = scmp.eq.s32.totalorder %s41, 0
      %p492 = por %p490, %p491
      %p493 = scmp.ne.s32.totalorder %s479, %s480
      %p494 = scmp.eq.s32.totalorder %s42, 1
      %p495 = por %p493, %p494
      %p497 = scmp.ne.s32.totalorder %s480, %s496
      %p498 = scmp.eq.s32.totalorder %s42, 0
      %p499 = por %p497, %p498
      %p500 = scmp.le.s32.totalorder 1, %s36
      %p501 = scmp.lt.s32.totalorder %s36, 3
      %p502 = pnand %p500, %p501
      %p503 = pneg %p502
      // Predicated region
      $region9: #{tpu_custom_call.1} parent=5 // pred_check
        _
      $region10: #{tpu_custom_call.1} parent=5 // pred_check_branch
        %505 = sbr.rel (%p502) target = $region12
      $region11: #{tpu_custom_call.1} parent=5 // pred_region
        %s506 = ssub.s32 %s36, 1
        // Predicated region
        $region13: #{tpu_custom_call.1} parent=11 // pred_check
          %p507 = pneg %p109
        $region14: #{tpu_custom_call.1} parent=11 // pred_check_branch
          %509 = sbr.rel (%p507) target = $region16
        $region15: #{tpu_custom_call.1} parent=11 // pred_region
          %s511 = ssub.s32 768, 768
          %512 = vsyncadd [#allocation6], %s511
          %s513 = sshll.u32 [#allocation5], 4
          %s514 = int_to_ptr.vmem [resolvable:$true] %s513
          %519 = dma.hbm_to_vmem [thread:$0]  %s2, 768, %s514, [#allocation6], 192, 192, 12
        $region16: #{tpu_custom_call.1} parent=11 // pred_fallthru
          _
        // Predicated region
        $region17: #{tpu_custom_call.1} parent=11 // pred_check
          %p520 = pneg %p130
        $region18: #{tpu_custom_call.1} parent=11 // pred_check_branch
          %522 = sbr.rel (%p520) target = $region20
        $region19: #{tpu_custom_call.1} parent=11 // pred_region
          %s524 = ssub.s32 48, 48
          %525 = vsyncadd [#allocation6], %s524
          %s527 = sshll.u32 [#allocation7], 4
          %s528 = int_to_ptr.vmem [resolvable:$true] %s527
          %530 = dma.hbm_to_vmem [thread:$0]  %s3, 48, %s528, [#allocation6]
        $region20: #{tpu_custom_call.1} parent=11 // pred_fallthru
          _
        // Predicated region
        $region21: #{tpu_custom_call.1} parent=11 // pred_check
          %p531 = pneg %p151
        $region22: #{tpu_custom_call.1} parent=11 // pred_check_branch
          %533 = sbr.rel (%p531) target = $region24
        $region23: #{tpu_custom_call.1} parent=11 // pred_region
          _
        $region24: #{tpu_custom_call.1} parent=11 // pred_fallthru
          _
        // Predicated region
        $region25: #{tpu_custom_call.1} parent=11 // pred_check
          %p534 = pneg %p172
        $region26: #{tpu_custom_call.1} parent=11 // pred_check_branch
          %536 = sbr.rel (%p534) target = $region28
        $region27: #{tpu_custom_call.1} parent=11 // pred_region
          _
        $region28: #{tpu_custom_call.1} parent=11 // pred_fallthru
          _
        // Predicated region
        $region29: #{tpu_custom_call.1} parent=11 // pred_check
          %p537 = pneg %p193
        $region30: #{tpu_custom_call.1} parent=11 // pred_check_branch
          %539 = sbr.rel (%p537) target = $region32
        $region31: #{tpu_custom_call.1} parent=11 // pred_region
          %s541 = ssub.s32 16, 16
          %542 = vsyncadd [#allocation9], %s541
          %s544 = sshll.u32 [#allocation8], 4
          %s545 = int_to_ptr.vmem [resolvable:$true] %s544
          %547 = dma.hbm_to_vmem [thread:$0]  %s6, 16, %s545, [#allocation9]
        $region32: #{tpu_custom_call.1} parent=11 // pred_fallthru
          _
        // Predicated region
        $region33: #{tpu_custom_call.1} parent=11 // pred_check
          %p548 = pneg %p214
        $region34: #{tpu_custom_call.1} parent=11 // pred_check_branch
          %550 = sbr.rel (%p548) target = $region36
        $region35: #{tpu_custom_call.1} parent=11 // pred_region
          %s552 = ssub.s32 16, 16
          %553 = vsyncadd [#allocation9], %s552
          %s555 = sshll.u32 [#allocation10], 4
          %s556 = int_to_ptr.vmem [resolvable:$true] %s555
          %558 = dma.hbm_to_vmem [thread:$0]  %s7, 16, %s556, [#allocation9]
        $region36: #{tpu_custom_call.1} parent=11 // pred_fallthru
          _
        // Predicated region
        $region37: #{tpu_custom_call.1} parent=11 // pred_check
          %p559 = pneg %p235
        $region38: #{tpu_custom_call.1} parent=11 // pred_check_branch
          %561 = sbr.rel (%p559) target = $region40
        $region39: #{tpu_custom_call.1} parent=11 // pred_region
          _
        $region40: #{tpu_custom_call.1} parent=11 // pred_fallthru
          _
        // Predicated region
        $region41: #{tpu_custom_call.1} parent=11 // pred_check
          %p562 = pneg %p256
        $region42: #{tpu_custom_call.1} parent=11 // pred_check_branch
          %564 = sbr.rel (%p562) target = $region44
        $region43: #{tpu_custom_call.1} parent=11 // pred_region
          %s566 = ssub.s32 16, 16
          %567 = vsyncadd [#allocation12], %s566
          %s569 = sshll.u32 [#allocation11], 4
          %s570 = int_to_ptr.vmem [resolvable:$true] %s569
          %572 = dma.hbm_to_vmem [thread:$0]  %s9, 16, %s570, [#allocation12]
        $region44: #{tpu_custom_call.1} parent=11 // pred_fallthru
          _
        // Predicated region
        $region45: #{tpu_custom_call.1} parent=11 // pred_check
          %p573 = pneg %p277
        $region46: #{tpu_custom_call.1} parent=11 // pred_check_branch
          %575 = sbr.rel (%p573) target = $region48
        $region47: #{tpu_custom_call.1} parent=11 // pred_region
          _
        $region48: #{tpu_custom_call.1} parent=11 // pred_fallthru
          _
        // Predicated region
        $region49: #{tpu_custom_call.1} parent=11 // pred_check
          %p576 = pneg %p298
        $region50: #{tpu_custom_call.1} parent=11 // pred_check_branch
          %578 = sbr.rel (%p576) target = $region52
        $region51: #{tpu_custom_call.1} parent=11 // pred_region
          %s580 = ssub.s32 16, 16
          %581 = vsyncadd [#allocation12], %s580
          %s583 = sshll.u32 [#allocation13], 4
          %s584 = int_to_ptr.vmem [resolvable:$true] %s583
          %586 = dma.hbm_to_vmem [thread:$0]  %s11, 16, %s584, [#allocation12]
        $region52: #{tpu_custom_call.1} parent=11 // pred_fallthru
          _
        // Predicated region
        $region53: #{tpu_custom_call.1} parent=11 // pred_check
          %p587 = pneg %p319
        $region54: #{tpu_custom_call.1} parent=11 // pred_check_branch
          %589 = sbr.rel (%p587) target = $region56
        $region55: #{tpu_custom_call.1} parent=11 // pred_region
          %s591 = ssub.s32 16, 16
          %592 = vsyncadd [#allocation15], %s591
          %s594 = sshll.u32 [#allocation14], 4
          %s595 = int_to_ptr.vmem [resolvable:$true] %s594
          %597 = dma.hbm_to_vmem [thread:$0]  %s12, 16, %s595, [#allocation15]
        $region56: #{tpu_custom_call.1} parent=11 // pred_fallthru
          _
        // Predicated region
        $region57: #{tpu_custom_call.1} parent=11 // pred_check
          %p598 = pneg %p340
        $region58: #{tpu_custom_call.1} parent=11 // pred_check_branch
          %600 = sbr.rel (%p598) target = $region60
        $region59: #{tpu_custom_call.1} parent=11 // pred_region
          _
        $region60: #{tpu_custom_call.1} parent=11 // pred_fallthru
          _
        // Predicated region
        $region61: #{tpu_custom_call.1} parent=11 // pred_check
          %p601 = pneg %p361
        $region62: #{tpu_custom_call.1} parent=11 // pred_check_branch
          %603 = sbr.rel (%p601) target = $region64
        $region63: #{tpu_custom_call.1} parent=11 // pred_region
          _
        $region64: #{tpu_custom_call.1} parent=11 // pred_fallthru
          _
        // Predicated region
        $region65: #{tpu_custom_call.1} parent=11 // pred_check
          %p604 = pneg %p382
        $region66: #{tpu_custom_call.1} parent=11 // pred_check_branch
          %606 = sbr.rel (%p604) target = $region68
        $region67: #{tpu_custom_call.1} parent=11 // pred_region
          _
        $region68: #{tpu_custom_call.1} parent=11 // pred_fallthru
          _
        // Predicated region
        $region69: #{tpu_custom_call.1} parent=11 // pred_check
          %p607 = pneg %p403
        $region70: #{tpu_custom_call.1} parent=11 // pred_check_branch
          %609 = sbr.rel (%p607) target = $region72
        $region71: #{tpu_custom_call.1} parent=11 // pred_region
          %s611 = ssub.s32 12288, 12288
          %612 = vsyncadd [#allocation15], %s611
          %s613 = sshll.u32 [#allocation16], 4
          %s614 = int_to_ptr.vmem [resolvable:$true] %s613
          %619 = dma.hbm_to_vmem [thread:$0]  %s16, 12288, %s614, [#allocation15], 384, 384, 24
        $region72: #{tpu_custom_call.1} parent=11 // pred_fallthru
          _
        // Predicated region
        $region73: #{tpu_custom_call.1} parent=11 // pred_check
          %p620 = pneg %p424
        $region74: #{tpu_custom_call.1} parent=11 // pred_check_branch
          %622 = sbr.rel (%p620) target = $region76
        $region75: #{tpu_custom_call.1} parent=11 // pred_region
          _
        $region76: #{tpu_custom_call.1} parent=11 // pred_fallthru
          _
        // Predicated region
        $region77: #{tpu_custom_call.1} parent=11 // pred_check
          %p623 = pneg %p445
        $region78: #{tpu_custom_call.1} parent=11 // pred_check_branch
          %625 = sbr.rel (%p623) target = $region80
        $region79: #{tpu_custom_call.1} parent=11 // pred_region
          _
        $region80: #{tpu_custom_call.1} parent=11 // pred_fallthru
          _
        // Predicated region
        $region81: #{tpu_custom_call.1} parent=11 // pred_check
          %p626 = pneg %p466
        $region82: #{tpu_custom_call.1} parent=11 // pred_check_branch
          %628 = sbr.rel (%p626) target = $region84
        $region83: #{tpu_custom_call.1} parent=11 // pred_region
          _
        $region84: #{tpu_custom_call.1} parent=11 // pred_fallthru
          _
      $region12: #{tpu_custom_call.1} parent=5 // pred_fallthru
        _
      %p629 = scmp.lt.s32.totalorder %s36, 2
      // Predicated region
      $region85: #{tpu_custom_call.1} parent=5 // pred_check
        %p630 = pneg %p629
      $region86: #{tpu_custom_call.1} parent=5 // pred_check_branch
        %632 = sbr.rel (%p630) target = $region88
      $region87: #{tpu_custom_call.1} parent=5 // pred_region
        // Predicated region
        $region89: #{tpu_custom_call.1} parent=87 // pred_check
          %p633 = pneg %p56
        $region90: #{tpu_custom_call.1} parent=87 // pred_check_branch
          %635 = sbr.rel (%p633) target = $region92
        $region91: #{tpu_custom_call.1} parent=87 // pred_region
          %s636 = smul.u32 4, %s36
          %p637 = scmp.lt.s32.totalorder %s636, 7
          %s638 = scalar_select %p637, %s636, 7
          %s639 = smul.addr %s638, 8
          %s640 = scalar_lea.vmem %s0, %s639
          %s641 = smul.u32 4, %s36
        $region92: #{tpu_custom_call.1} parent=87 // pred_fallthru
          _
        // Predicated region
        $region93: #{tpu_custom_call.1} parent=87 // pred_check
          %p642 = pneg %p82
        $region94: #{tpu_custom_call.1} parent=87 // pred_check_branch
          %644 = sbr.rel (%p642) target = $region96
        $region95: #{tpu_custom_call.1} parent=87 // pred_region
          %s645 = sand.u32 %s72, 1
          %s646 = scalar_lea.sflag [#allocation3], %s645
          %s647 = sand.u32 %s72, 1
          %s648 = smul.addr %s647, 32
          %s649 = scalar_lea.vmem [#allocation2], %s648
          %s651 = ssub.s32 512, 512
          %652 = vsyncadd %s646, %s651
          %s653 = smul.addr %s36, 4
          %s654 = smul.addr %s653, 128
          %s655 = scalar_lea.hbm %s1, %s654
          %s656 = sshll.u32 %s649, 4
          %s657 = int_to_ptr.vmem [resolvable:$true] %s656
          %662 = dma.hbm_to_vmem [thread:$0]  %s655, 512, %s657, %s646, 128, 128, 8
        $region96: #{tpu_custom_call.1} parent=87 // pred_fallthru
          _
      $region88: #{tpu_custom_call.1} parent=5 // pred_fallthru
        _
      %p663 = scmp.le.s32.totalorder 1, %s36
      %p664 = scmp.lt.s32.totalorder %s36, 3
      %p665 = pnand %p663, %p664
      %p666 = pneg %p665
      // Predicated region
      $region97: #{tpu_custom_call.1} parent=5 // pred_check
        _
      $region98: #{tpu_custom_call.1} parent=5 // pred_check_branch
        %668 = sbr.rel (%p665) target = $region100
      $region99: #{tpu_custom_call.1} parent=5 // pred_region
        %s669 = ssub.s32 %s36, 1
        %s670 = sand.u32 %s75, 1
        %s671 = scalar_lea.sflag [#allocation3], %s670
        %s672 = sand.u32 %s75, 1
        %s673 = smul.addr %s672, 32
        %s674 = scalar_lea.vmem [#allocation2], %s673
        // Predicated region
        $region101: #{tpu_custom_call.1} parent=99 // pred_check
          %p675 = pneg %p88
        $region102: #{tpu_custom_call.1} parent=99 // pred_check_branch
          %677 = sbr.rel (%p675) target = $region104
        $region103: #{tpu_custom_call.1} parent=99 // pred_region
          %678 = dma.done %s671, 512
        $region104: #{tpu_custom_call.1} parent=99 // pred_fallthru
          _
        // Predicated region
        $region105: #{tpu_custom_call.1} parent=99 // pred_check
          %p679 = pneg %p109
        $region106: #{tpu_custom_call.1} parent=99 // pred_check_branch
          %681 = sbr.rel (%p679) target = $region108
        $region107: #{tpu_custom_call.1} parent=99 // pred_region
          %682 = dma.done [#allocation6], 768
        $region108: #{tpu_custom_call.1} parent=99 // pred_fallthru
          _
        // Predicated region
        $region109: #{tpu_custom_call.1} parent=99 // pred_check
          %p683 = pneg %p130
        $region110: #{tpu_custom_call.1} parent=99 // pred_check_branch
          %685 = sbr.rel (%p683) target = $region112
        $region111: #{tpu_custom_call.1} parent=99 // pred_region
          %686 = dma.done [#allocation6], 48
        $region112: #{tpu_custom_call.1} parent=99 // pred_fallthru
          _
        // Predicated region
        $region113: #{tpu_custom_call.1} parent=99 // pred_check
          %p687 = pneg %p193
        $region114: #{tpu_custom_call.1} parent=99 // pred_check_branch
          %689 = sbr.rel (%p687) target = $region116
        $region115: #{tpu_custom_call.1} parent=99 // pred_region
          %690 = dma.done [#allocation9], 16
        $region116: #{tpu_custom_call.1} parent=99 // pred_fallthru
          _
        // Predicated region
        $region117: #{tpu_custom_call.1} parent=99 // pred_check
          %p691 = pneg %p214
        $region118: #{tpu_custom_call.1} parent=99 // pred_check_branch
          %693 = sbr.rel (%p691) target = $region120
        $region119: #{tpu_custom_call.1} parent=99 // pred_region
          %694 = dma.done [#allocation9], 16
        $region120: #{tpu_custom_call.1} parent=99 // pred_fallthru
          _
        // Predicated region
        $region121: #{tpu_custom_call.1} parent=99 // pred_check
          %p695 = pneg %p256
        $region122: #{tpu_custom_call.1} parent=99 // pred_check_branch
          %697 = sbr.rel (%p695) target = $region124
        $region123: #{tpu_custom_call.1} parent=99 // pred_region
          %698 = dma.done [#allocation12], 16
        $region124: #{tpu_custom_call.1} parent=99 // pred_fallthru
          _
        // Predicated region
        $region125: #{tpu_custom_call.1} parent=99 // pred_check
          %p699 = pneg %p298
        $region126: #{tpu_custom_call.1} parent=99 // pred_check_branch
          %701 = sbr.rel (%p699) target = $region128
        $region127: #{tpu_custom_call.1} parent=99 // pred_region
          %702 = dma.done [#allocation12], 16
        $region128: #{tpu_custom_call.1} parent=99 // pred_fallthru
          _
        // Predicated region
        $region129: #{tpu_custom_call.1} parent=99 // pred_check
          %p703 = pneg %p319
        $region130: #{tpu_custom_call.1} parent=99 // pred_check_branch
          %705 = sbr.rel (%p703) target = $region132
        $region131: #{tpu_custom_call.1} parent=99 // pred_region
          %706 = dma.done [#allocation15], 16
        $region132: #{tpu_custom_call.1} parent=99 // pred_fallthru
          _
        // Predicated region
        $region133: #{tpu_custom_call.1} parent=99 // pred_check
          %p707 = pneg %p403
        $region134: #{tpu_custom_call.1} parent=99 // pred_check_branch
          %709 = sbr.rel (%p707) target = $region136
        $region135: #{tpu_custom_call.1} parent=99 // pred_region
          %710 = dma.done [#allocation15], 12288
        $region136: #{tpu_custom_call.1} parent=99 // pred_fallthru
          _
        %s711 = smul.u32 4, %s41
        %p712 = scmp.lt.s32.totalorder %s711, 7
        %s713 = scalar_select %p712, %s711, 7
        %s714 = smul.addr %s713, 8
        %s715 = scalar_lea.vmem %s0, %s714
        %p716 = pneg %p62
        %p717 = pneg %p59
        %s718 = sand.u32 %s75, 1
        %s719 = scalar_lea.sflag [#allocation3], %s718
        %s720 = sand.u32 %s75, 1
        %s721 = smul.addr %s720, 32
        %s722 = scalar_lea.vmem [#allocation2], %s721
        %p723 = pneg %p88
        %p724 = pneg %p85
        %p725 = pneg %p109
        %p726 = pneg %p106
        %p727 = pneg %p130
        %p728 = pneg %p127
        %p729 = pneg %p151
        %p730 = pneg %p148
        %p731 = pneg %p172
        %p732 = pneg %p169
        %p733 = pneg %p193
        %p734 = pneg %p190
        %p735 = pneg %p214
        %p736 = pneg %p211
        %p737 = pneg %p235
        %p738 = pneg %p232
        %p739 = pneg %p256
        %p740 = pneg %p253
        %p741 = pneg %p277
        %p742 = pneg %p274
        %p743 = pneg %p298
        %p744 = pneg %p295
        %p745 = pneg %p319
        %p746 = pneg %p316
        %p747 = pneg %p340
        %p748 = pneg %p337
        %p749 = pneg %p361
        %p750 = pneg %p358
        %p751 = pneg %p382
        %p752 = pneg %p379
        %p753 = pneg %p403
        %p754 = pneg %p400
        %p755 = pneg %p424
        %p756 = pneg %p421
        %p757 = pneg %p445
        %p758 = pneg %p442
        %p759 = pneg %p466
        %p760 = pneg %p463
        %p761 = pneg %p492
        %p762 = pneg %p489
        %s763 = sand.u32 %s479, 1
        %s764 = scalar_lea.sflag [#allocation4], %s763
        %s765 = sand.u32 %s479, 1
        %s766 = smul.addr %s765, 4
        %s767 = scalar_lea.vmem [#allocation17], %s766
        %s768 = smul.u32 4, %s41
        %p769 = scmp.lt.s32.totalorder %s768, 7
        %s770 = scalar_select %p769, %s768, 7
        %s771 = smul.addr %s770, 8
        %s772 = scalar_lea.vmem %s0, %s771
        %s773 = smul.u32 4, %s41
        %v775 = vld [vmem:[%s772] sm:$0xff]
        %v776 = vld [vmem:[%s772 + $0x8] sm:$0xff]
        %v777 = vld [vmem:[%s772 + $0x10] sm:$0xff]
        %v778 = vld [vmem:[%s772 + $0x18] sm:$0xff]
        %v779 = vld [vmem:[%s674] sm:$0xff]
        %v780 = vld [vmem:[%s674 + $0x8] sm:$0xff]
        %v781 = vld [vmem:[%s674 + $0x10] sm:$0xff]
        %v782 = vld [vmem:[%s674 + $0x18] sm:$0xff]
        %v783 = vld [vmem:[#allocation5] sm:$0xff]
        %v784 = vld [vmem:[#allocation5 + $0x8] sm:$0xf]
        %v785 = vld [vmem:[#allocation5 + $0xc] sm:$0xff]
        %v786 = vld [vmem:[#allocation5 + $0x14] sm:$0xf]
        %v787 = vld [vmem:[#allocation5 + $0x18] sm:$0xff]
        %v788 = vld [vmem:[#allocation5 + $0x20] sm:$0xf]
        %v789 = vld [vmem:[#allocation5 + $0x24] sm:$0xff]
        %v790 = vld [vmem:[#allocation5 + $0x2c] sm:$0xf]
        %v791 = vpack.c.bf16 %v776, %v775
        %v792 = vpack.c.bf16 %v778, %v777
        %v793 = vld [vmem:[#allocation7] sm:$0x7]
        %v795 = vlaneseq
        %v796 = vshrl.u32 %v795, 7
        %v797 = vsub.s32 0, %v796
        %v798 = vrot.slane %v793, %v797
        %v799 = vlaneseq
        %v800 = vshrl.u32 %v799, 7
        %v801 = vsub.s32 1, %v800
        %v802 = vrot.slane %v793, %v801
        %v803 = vlaneseq
        %v804 = vshrl.u32 %v803, 7
        %v805 = vsub.s32 2, %v804
        %v806 = vrot.slane %v793, %v805
        %v818 = vunpack.c.l.b16 %v783
        %v819 = vunpack.c.h.b16 %v783
        %v820 = vunpack.c.l.b16 %v784
        %v821 = vunpack.c.l.b16 %v785
        %v822 = vunpack.c.h.b16 %v785
        %v823 = vunpack.c.l.b16 %v786
        %v824 = vunpack.c.l.b16 %v787
        %v825 = vunpack.c.h.b16 %v787
        %v826 = vunpack.c.l.b16 %v788
        %v827 = vunpack.c.l.b16 %v789
        %v828 = vunpack.c.h.b16 %v789
        %v829 = vunpack.c.l.b16 %v790
        %v830 = vpack.c.b16 %v821, %v818
        %v831 = vpack.c.b16 %v822, %v819
        %v832 = vpack.c.b16 %v823, %v820
        %v833 = vpack.c.b16 %v827, %v824
        %v834 = vpack.c.b16 %v828, %v825
        %v835 = vpack.c.b16 %v829, %v826
        %vm842 = vcmask 261120
        %v844 = vsel %vm842, %v791, 0
        %v847 = vsel %vm842, %v792, 0
        %849 = vmatprep.subr.bf16.mxu0 %v831
        %850 = vmatpush1.bf16.msra.mxu0 %v830
        %851 = vmatprep.subr.bf16.mxu0 %v834
        %852 = vmatpush1.bf16.msra.mxu0 %v833
        %853 = vmatprep.subr.bf16.mxu0 0
        %854 = vmatpush1.bf16.msra.mxu0 0
        %855 = vmatprep.subr.bf16.mxu0 0
        %856 = vmatpush1.bf16.msra.mxu0 0
        %857 = vmatprep.subr.bf16.mxu0 0
        %858 = vmatpush1.bf16.msra.mxu0 0
        %859 = vmatprep.subr.bf16.mxu0 0
        %860 = vmatpush1.bf16.msra.mxu0 0
        %861 = vmatprep.subr.bf16.mxu0 0
        %862 = vmatpush1.bf16.msra.mxu0 0
        %863 = vmatprep.subr.bf16.mxu0 0
        %864 = vmatpush1.bf16.msra.mxu0 0
        %865 = vmatprep.subr.bf16.mxu0 0
        %866 = vmatpush1.bf16.msra.mxu0 0
        %867 = vmatprep.subr.bf16.mxu0 0
        %868 = vmatpush1.bf16.msra.mxu0 0
        %869 = vmatprep.subr.bf16.mxu0 0
        %870 = vmatpush1.bf16.msra.mxu0 0
        %871 = vmatprep.subr.bf16.mxu0 0
        %872 = vmatpush1.bf16.msra.mxu0 0
        %873 = vmatprep.subr.bf16.mxu0 0
        %874 = vmatpush1.bf16.msra.mxu0 0
        %875 = vmatprep.subr.bf16.mxu0 0
        %876 = vmatpush1.bf16.msra.mxu0 0
        %877 = vmatprep.subr.bf16.mxu0 0
        %878 = vmatpush1.bf16.msra.mxu0 0
        %879 = vmatprep.subr.bf16.mxu0 0
        %880 = vmatpush1.bf16.msra.mxu0 0
        %881 = vmatprep.mubr.bf16.mxu0 0
        %882 = vmatmul.mubr.bf16.gmra.mrb[0].mxu0 %v844
        %v883 = vpop.f32.mrb[0].mxu0
        %v884 = vadd.f32 %v798, %v883
        %v885 = vpop.f32.mrb[0].mxu0
        %v886 = vadd.f32 %v802, %v885
        %v887 = vpop.f32.mrb[0].mxu0
        %v888 = vadd.f32 %v798, %v887
        %v889 = vpop.f32.mrb[0].mxu0
        %v890 = vadd.f32 %v802, %v889
        %891 = vmatprep.mubr.bf16.mxu0 0
        %892 = vmatmul.mubr.bf16.gmra.mrb[0].mxu0 %v847
        %v893 = vpop.f32.mrb[0].mxu0
        %v894 = vadd.f32 %v798, %v893
        %v895 = vpop.f32.mrb[0].mxu0
        %v896 = vadd.f32 %v802, %v895
        %v897 = vpop.f32.mrb[0].mxu0
        %v898 = vadd.f32 %v798, %v897
        %v899 = vpop.f32.mrb[0].mxu0
        %v900 = vadd.f32 %v802, %v899
        %901 = vdwg.mxu0
        %902 = vmatprep.subr.bf16.mxu0 0
        %903 = vmatpush1.bf16.msra.mxu0 %v832
        %904 = vmatprep.subr.bf16.mxu0 0
        %905 = vmatpush1.bf16.msra.mxu0 %v835
        %906 = vmatprep.subr.bf16.mxu0 0
        %907 = vmatpush1.bf16.msra.mxu0 0
        %908 = vmatprep.subr.bf16.mxu0 0
        %909 = vmatpush1.bf16.msra.mxu0 0
        %910 = vmatprep.subr.bf16.mxu0 0
        %911 = vmatpush1.bf16.msra.mxu0 0
        %912 = vmatprep.subr.bf16.mxu0 0
        %913 = vmatpush1.bf16.msra.mxu0 0
        %914 = vmatprep.subr.bf16.mxu0 0
        %915 = vmatpush1.bf16.msra.mxu0 0
        %916 = vmatprep.subr.bf16.mxu0 0
        %917 = vmatpush1.bf16.msra.mxu0 0
        %918 = vmatprep.subr.bf16.mxu0 0
        %919 = vmatpush1.bf16.msra.mxu0 0
        %920 = vmatprep.subr.bf16.mxu0 0
        %921 = vmatpush1.bf16.msra.mxu0 0
        %922 = vmatprep.subr.bf16.mxu0 0
        %923 = vmatpush1.bf16.msra.mxu0 0
        %924 = vmatprep.subr.bf16.mxu0 0
        %925 = vmatpush1.bf16.msra.mxu0 0
        %926 = vmatprep.subr.bf16.mxu0 0
        %927 = vmatpush1.bf16.msra.mxu0 0
        %928 = vmatprep.subr.bf16.mxu0 0
        %929 = vmatpush1.bf16.msra.mxu0 0
        %930 = vmatprep.subr.bf16.mxu0 0
        %931 = vmatpush1.bf16.msra.mxu0 0
        %932 = vmatprep.subr.bf16.mxu0 0
        %933 = vmatpush1.bf16.msra.mxu0 0
        %934 = vmatprep.mubr.bf16.mxu0 0
        %935 = vmatmul.mubr.bf16.gmra.mrb[0].mxu0 %v844
        %v936 = vpop.f32.mrb[0].mxu0
        %v937 = vadd.f32 %v806, %v936
        %v938 = vpop.f32.mrb[0].mxu0
        %v939 = vpop.f32.mrb[0].mxu0
        %v940 = vadd.f32 %v806, %v939
        %v941 = vpop.f32.mrb[0].mxu0
        %942 = vmatprep.mubr.bf16.mxu0 0
        %943 = vmatmul.mubr.bf16.gmra.mrb[0].mxu0 %v847
        %v944 = vpop.f32.mrb[0].mxu0
        %v945 = vadd.f32 %v806, %v944
        %v946 = vpop.f32.mrb[0].mxu0
        %v947 = vpop.f32.mrb[0].mxu0
        %v948 = vadd.f32 %v806, %v947
        %v949 = vpop.f32.mrb[0].mxu0
        %950 = vdwg.mxu0
        %v951 = vpack.c.bf16 %v888, %v884
        %v952 = vpack.c.bf16 %v898, %v894
        %v953 = vpack.c.bf16 %v890, %v886
        %v954 = vpack.c.bf16 %v900, %v896
        %955 = vmatprep.subr.bf16.mxu0 0
        %956 = vmatpush1.bf16.xpose.msra.mxu0 %v953
        %957 = vmatprep.subr.bf16.mxu0 0
        %958 = vmatpush1.bf16.xpose.msra.mxu0 %v954
        %959 = vmatprep.subr.bf16.mxu0 0
        %960 = vmatpush1.bf16.xpose.msra.mxu0 0
        %961 = vmatprep.subr.bf16.mxu0 0
        %962 = vmatpush1.bf16.xpose.msra.mxu0 0
        %963 = vmatprep.subr.bf16.mxu0 0
        %964 = vmatpush1.bf16.xpose.msra.mxu0 0
        %965 = vmatprep.subr.bf16.mxu0 0
        %966 = vmatpush1.bf16.xpose.msra.mxu0 0
        %967 = vmatprep.subr.bf16.mxu0 0
        %968 = vmatpush1.bf16.xpose.msra.mxu0 0
        %969 = vmatprep.subr.bf16.mxu0 0
        %970 = vmatpush1.bf16.xpose.msra.mxu0 0
        %971 = vmatprep.subr.bf16.mxu0 0
        %972 = vmatpush1.bf16.xpose.msra.mxu0 0
        %973 = vmatprep.subr.bf16.mxu0 0
        %974 = vmatpush1.bf16.xpose.msra.mxu0 0
        %975 = vmatprep.subr.bf16.mxu0 0
        %976 = vmatpush1.bf16.xpose.msra.mxu0 0
        %977 = vmatprep.subr.bf16.mxu0 0
        %978 = vmatpush1.bf16.xpose.msra.mxu0 0
        %979 = vmatprep.subr.bf16.mxu0 0
        %980 = vmatpush1.bf16.xpose.msra.mxu0 0
        %981 = vmatprep.subr.bf16.mxu0 0
        %982 = vmatpush1.bf16.xpose.msra.mxu0 0
        %983 = vmatprep.subr.bf16.mxu0 0
        %984 = vmatpush1.bf16.xpose.msra.mxu0 0
        %985 = vmatprep.subr.bf16.mxu0 0
        %986 = vmatpush1.bf16.xpose.msra.mxu0 0
        %987 = vmatprep.mubr.bf16.mxu0 0
        %988 = vmatmul.mubr.bf16.gmra.mrb[0].mxu0 %v951
        %v989 = vpop.f32.mrb[0].mxu0
        %v990 = vadd.f32 %v779, %v989
        %v991 = vpop.f32.mrb[0].mxu0
        %v992 = vpop.f32.mrb[0].mxu0
        %v993 = vadd.f32 %v780, %v992
        %v994 = vpop.f32.mrb[0].mxu0
        %995 = vmatprep.mubr.bf16.mxu0 0
        %996 = vmatmul.mubr.bf16.gmra.mrb[0].mxu0 %v952
        %v997 = vpop.f32.mrb[0].mxu0
        %v998 = vadd.f32 %v781, %v997
        %v999 = vpop.f32.mrb[0].mxu0
        %v1000 = vpop.f32.mrb[0].mxu0
        %v1001 = vadd.f32 %v782, %v1000
        %v1002 = vpop.f32.mrb[0].mxu0
        %1003 = vdwg.mxu0
        %v1004 = vsel %vm842, %v990, -inf
        %1005 = vmax.xlane.f32.xlu0 %v1004
        %v1006 = vpop.xlane.xlu0 %1005
        %v1007 = vsel %vm842, %v993, -inf
        %1008 = vmax.xlane.f32.xlu0 %v1007
        %v1009 = vpop.xlane.xlu0 %1008
        %v1010 = vsel %vm842, %v998, -inf
        %1011 = vmax.xlane.f32.xlu0 %v1010
        %v1012 = vpop.xlane.xlu0 %1011
        %v1013 = vsel %vm842, %v1001, -inf
        %1014 = vmax.xlane.f32.xlu0 %v1013
        %v1015 = vpop.xlane.xlu0 %1014
        %v1016 = vsub.f32 %v990, %v1006
        %v1017 = vsub.f32 %v993, %v1009
        %v1018 = vsub.f32 %v998, %v1012
        %v1019 = vsub.f32 %v1001, %v1015
        %v1020 = vmul.f32 %v1016, 1.442695
        %v1021 = vpow.pop %v1020
        %v1022 = vmul.f32 %v1017, 1.442695
        %v1023 = vpow.pop %v1022
        %v1024 = vmul.f32 %v1018, 1.442695
        %v1025 = vpow.pop %v1024
        %v1026 = vmul.f32 %v1019, 1.442695
        %v1027 = vpow.pop %v1026
        %v1028 = vsel %vm842, %v1021, 0.0
        %1029 = vadd.xlane.f32.xlu0 %v1028
        %v1030 = vpop.xlane.xlu0 %1029
        %v1031 = vsel %vm842, %v1023, 0.0
        %1032 = vadd.xlane.f32.xlu0 %v1031
        %v1033 = vpop.xlane.xlu0 %1032
        %v1034 = vsel %vm842, %v1025, 0.0
        %1035 = vadd.xlane.f32.xlu0 %v1034
        %v1036 = vpop.xlane.xlu0 %1035
        %v1037 = vsel %vm842, %v1027, 0.0
        %1038 = vadd.xlane.f32.xlu0 %v1037
        %v1039 = vpop.xlane.xlu0 %1038
        %v1040 = vrcp.pop %v1030
        %v1041 = vrcp.pop %v1033
        %v1042 = vrcp.pop %v1036
        %v1043 = vrcp.pop %v1039
        %v1044 = vmul.f32 %v1021, %v1040
        %v1045 = vmul.f32 %v1023, %v1041
        %v1046 = vmul.f32 %v1025, %v1042
        %v1047 = vmul.f32 %v1027, %v1043
        %v1048 = vpack.c.bf16 %v1045, %v1044
        %v1049 = vpack.c.bf16 %v1047, %v1046
        %v1050 = vpack.c.bf16 %v940, %v937
        %v1051 = vpack.c.bf16 %v948, %v945
        %v1053 = vsel %vm842, %v1048, 0
        %v1056 = vsel %vm842, %v1049, 0
        %1058 = vmatprep.subr.bf16.mxu0 0
        %1059 = vmatpush1.bf16.msra.mxu0 %v1050
        %1060 = vmatprep.subr.bf16.mxu0 0
        %1061 = vmatpush1.bf16.msra.mxu0 %v1051
        %1062 = vmatprep.subr.bf16.mxu0 0
        %1063 = vmatpush1.bf16.msra.mxu0 0
        %1064 = vmatprep.subr.bf16.mxu0 0
        %1065 = vmatpush1.bf16.msra.mxu0 0
        %1066 = vmatprep.subr.bf16.mxu0 0
        %1067 = vmatpush1.bf16.msra.mxu0 0
        %1068 = vmatprep.subr.bf16.mxu0 0
        %1069 = vmatpush1.bf16.msra.mxu0 0
        %1070 = vmatprep.subr.bf16.mxu0 0
        %1071 = vmatpush1.bf16.msra.mxu0 0
        %1072 = vmatprep.subr.bf16.mxu0 0
        %1073 = vmatpush1.bf16.msra.mxu0 0
        %1074 = vmatprep.subr.bf16.mxu0 0
        %1075 = vmatpush1.bf16.msra.mxu0 0
        %1076 = vmatprep.subr.bf16.mxu0 0
        %1077 = vmatpush1.bf16.msra.mxu0 0
        %1078 = vmatprep.subr.bf16.mxu0 0
        %1079 = vmatpush1.bf16.msra.mxu0 0
        %1080 = vmatprep.subr.bf16.mxu0 0
        %1081 = vmatpush1.bf16.msra.mxu0 0
        %1082 = vmatprep.subr.bf16.mxu0 0
        %1083 = vmatpush1.bf16.msra.mxu0 0
        %1084 = vmatprep.subr.bf16.mxu0 0
        %1085 = vmatpush1.bf16.msra.mxu0 0
        %1086 = vmatprep.subr.bf16.mxu0 0
        %1087 = vmatpush1.bf16.msra.mxu0 0
        %1088 = vmatprep.subr.bf16.mxu0 0
        %1089 = vmatpush1.bf16.msra.mxu0 0
        %1090 = vmatprep.mubr.bf16.mxu0 0
        %1091 = vmatmul.mubr.bf16.gmra.mrb[0].mxu0 %v1053
        %v1092 = vpop.f32.mrb[0].mxu0
        %v1093 = vadd.f32 0.0, %v1092
        %v1094 = vpop.f32.mrb[0].mxu0
        %v1095 = vpop.f32.mrb[0].mxu0
        %v1096 = vadd.f32 0.0, %v1095
        %v1097 = vpop.f32.mrb[0].mxu0
        %1098 = vmatprep.mubr.bf16.mxu0 0
        %1099 = vmatmul.mubr.bf16.gmra.mrb[0].mxu0 %v1056
        %v1100 = vpop.f32.mrb[0].mxu0
        %v1101 = vadd.f32 0.0, %v1100
        %v1102 = vpop.f32.mrb[0].mxu0
        %v1103 = vpop.f32.mrb[0].mxu0
        %v1104 = vadd.f32 0.0, %v1103
        %v1105 = vpop.f32.mrb[0].mxu0
        %1106 = vdwg.mxu0
        %v1107 = vld [vmem:[%s4] sm:$0xf]
        %v1108 = vld [vmem:[%s4 + $0x4] sm:$0xf]
        %v1109 = vld [vmem:[%s4 + $0x8] sm:$0xf]
        %v1110 = vld [vmem:[%s4 + $0xc] sm:$0xf]
        %v1111 = vld [vmem:[%s4 + $0x10] sm:$0xf]
        %v1112 = vld [vmem:[%s4 + $0x14] sm:$0xf]
        %v1113 = vld [vmem:[%s4 + $0x18] sm:$0xf]
        %v1114 = vld [vmem:[%s4 + $0x1c] sm:$0xf]
        %v1115 = vld [vmem:[%s4 + $0x20] sm:$0xf]
        %v1116 = vld [vmem:[%s4 + $0x24] sm:$0xf]
        %v1117 = vld [vmem:[%s4 + $0x28] sm:$0xf]
        %v1118 = vld [vmem:[%s4 + $0x2c] sm:$0xf]
        %v1119 = vld [vmem:[%s4 + $0x30] sm:$0xf]
        %v1120 = vld [vmem:[%s4 + $0x34] sm:$0xf]
        %v1121 = vld [vmem:[%s4 + $0x38] sm:$0xf]
        %v1122 = vld [vmem:[%s4 + $0x3c] sm:$0xf]
        %v1123 = vpack.c.bf16 %v1096, %v1093
        %v1124 = vpack.c.bf16 %v1104, %v1101
        %v1125 = vld [vmem:[%s5] sm:$0x1]
        %v1127 = vlaneseq
        %v1128 = vshrl.u32 %v1127, 7
        %v1129 = vsub.s32 0, %v1128
        %v1130 = vrot.slane %v1125, %v1129
        %v1148 = vunpack.c.l.b16 %v1107
        %v1149 = vunpack.c.l.b16 %v1108
        %v1150 = vunpack.c.l.b16 %v1109
        %v1151 = vunpack.c.l.b16 %v1110
        %v1152 = vunpack.c.l.b16 %v1111
        %v1153 = vunpack.c.l.b16 %v1112
        %v1154 = vunpack.c.l.b16 %v1113
        %v1155 = vunpack.c.l.b16 %v1114
        %v1156 = vunpack.c.l.b16 %v1115
        %v1157 = vunpack.c.l.b16 %v1116
        %v1158 = vunpack.c.l.b16 %v1117
        %v1159 = vunpack.c.l.b16 %v1118
        %v1160 = vunpack.c.l.b16 %v1119
        %v1161 = vunpack.c.l.b16 %v1120
        %v1162 = vunpack.c.l.b16 %v1121
        %v1163 = vunpack.c.l.b16 %v1122
        %v1164 = vpack.c.b16 %v1149, %v1148
        %v1165 = vpack.c.b16 %v1151, %v1150
        %v1166 = vpack.c.b16 %v1153, %v1152
        %v1167 = vpack.c.b16 %v1155, %v1154
        %v1168 = vpack.c.b16 %v1157, %v1156
        %v1169 = vpack.c.b16 %v1159, %v1158
        %v1170 = vpack.c.b16 %v1161, %v1160
        %v1171 = vpack.c.b16 %v1163, %v1162
        %1180 = vmatprep.subr.bf16.mxu0 0
        %1181 = vmatpush1.bf16.msra.mxu0 %v1164
        %1182 = vmatprep.subr.bf16.mxu0 0
        %1183 = vmatpush1.bf16.msra.mxu0 %v1165
        %1184 = vmatprep.subr.bf16.mxu0 0
        %1185 = vmatpush1.bf16.msra.mxu0 %v1166
        %1186 = vmatprep.subr.bf16.mxu0 0
        %1187 = vmatpush1.bf16.msra.mxu0 %v1167
        %1188 = vmatprep.subr.bf16.mxu0 0
        %1189 = vmatpush1.bf16.msra.mxu0 %v1168
        %1190 = vmatprep.subr.bf16.mxu0 0
        %1191 = vmatpush1.bf16.msra.mxu0 %v1169
        %1192 = vmatprep.subr.bf16.mxu0 0
        %1193 = vmatpush1.bf16.msra.mxu0 %v1170
        %1194 = vmatprep.subr.bf16.mxu0 0
        %1195 = vmatpush1.bf16.msra.mxu0 %v1171
        %1196 = vmatprep.subr.bf16.mxu0 0
        %1197 = vmatpush1.bf16.msra.mxu0 0
        %1198 = vmatprep.subr.bf16.mxu0 0
        %1199 = vmatpush1.bf16.msra.mxu0 0
        %1200 = vmatprep.subr.bf16.mxu0 0
        %1201 = vmatpush1.bf16.msra.mxu0 0
        %1202 = vmatprep.subr.bf16.mxu0 0
        %1203 = vmatpush1.bf16.msra.mxu0 0
        %1204 = vmatprep.subr.bf16.mxu0 0
        %1205 = vmatpush1.bf16.msra.mxu0 0
        %1206 = vmatprep.subr.bf16.mxu0 0
        %1207 = vmatpush1.bf16.msra.mxu0 0
        %1208 = vmatprep.subr.bf16.mxu0 0
        %1209 = vmatpush1.bf16.msra.mxu0 0
        %1210 = vmatprep.subr.bf16.mxu0 0
        %1211 = vmatpush1.bf16.msra.mxu0 0
        %1212 = vmatprep.mubr.bf16.mxu0 0
        %1213 = vmatmul.mubr.bf16.gmra.mrb[0].mxu0 %v1123
        %v1214 = vpop.f32.mrb[0].mxu0
        %v1215 = vadd.f32 %v1130, %v1214
        %v1216 = vpop.f32.mrb[0].mxu0
        %v1217 = vpop.f32.mrb[0].mxu0
        %v1218 = vadd.f32 %v1130, %v1217
        %v1219 = vpop.f32.mrb[0].mxu0
        %1220 = vmatprep.mubr.bf16.mxu0 0
        %1221 = vmatmul.mubr.bf16.gmra.mrb[0].mxu0 %v1124
        %v1222 = vpop.f32.mrb[0].mxu0
        %v1223 = vadd.f32 %v1130, %v1222
        %v1224 = vpop.f32.mrb[0].mxu0
        %v1225 = vpop.f32.mrb[0].mxu0
        %v1226 = vadd.f32 %v1130, %v1225
        %v1227 = vpop.f32.mrb[0].mxu0
        %1228 = vdwg.mxu0
        %v1229 = vadd.f32 %v775, %v1215
        %v1230 = vadd.f32 %v776, %v1218
        %v1231 = vadd.f32 %v777, %v1223
        %v1232 = vadd.f32 %v778, %v1226
        %v1233 = vld [vmem:[#allocation8] sm:$0x1]
        %v1234 = vld [vmem:[#allocation10] sm:$0x1]
        %v1235 = vsel %vm842, %v1229, 0.0
        %1236 = vadd.xlane.f32.xlu0 %v1235
        %v1237 = vpop.xlane.xlu0 %1236
        %v1238 = vsel %vm842, %v1230, 0.0
        %1239 = vadd.xlane.f32.xlu0 %v1238
        %v1240 = vpop.xlane.xlu0 %1239
        %v1241 = vsel %vm842, %v1231, 0.0
        %1242 = vadd.xlane.f32.xlu0 %v1241
        %v1243 = vpop.xlane.xlu0 %1242
        %v1244 = vsel %vm842, %v1232, 0.0
        %1245 = vadd.xlane.f32.xlu0 %v1244
        %v1246 = vpop.xlane.xlu0 %1245
        %v1247 = vrcp.pop 32.0
        %v1248 = vmul.f32 %v1237, %v1247
        %v1249 = vmul.f32 %v1240, %v1247
        %v1250 = vmul.f32 %v1243, %v1247
        %v1251 = vmul.f32 %v1246, %v1247
        %v1252 = vsub.f32 %v1229, %v1248
        %v1253 = vsub.f32 %v1230, %v1249
        %v1254 = vsub.f32 %v1231, %v1250
        %v1255 = vsub.f32 %v1232, %v1251
        %v1256 = vmul.f32 %v1252, %v1252
        %v1257 = vmul.f32 %v1253, %v1253
        %v1258 = vmul.f32 %v1254, %v1254
        %v1259 = vmul.f32 %v1255, %v1255
        %v1260 = vsel %vm842, %v1256, 0.0
        %1261 = vadd.xlane.f32.xlu0 %v1260
        %v1262 = vpop.xlane.xlu0 %1261
        %v1263 = vsel %vm842, %v1257, 0.0
        %1264 = vadd.xlane.f32.xlu0 %v1263
        %v1265 = vpop.xlane.xlu0 %1264
        %v1266 = vsel %vm842, %v1258, 0.0
        %1267 = vadd.xlane.f32.xlu0 %v1266
        %v1268 = vpop.xlane.xlu0 %1267
        %v1269 = vsel %vm842, %v1259, 0.0
        %1270 = vadd.xlane.f32.xlu0 %v1269
        %v1271 = vpop.xlane.xlu0 %1270
        %v1272 = vmul.f32 %v1262, %v1247
        %v1273 = vmul.f32 %v1265, %v1247
        %v1274 = vmul.f32 %v1268, %v1247
        %v1275 = vmul.f32 %v1271, %v1247
        %v1276 = vadd.f32 %v1272, 1e-12
        %v1277 = vadd.f32 %v1273, 1e-12
        %v1278 = vadd.f32 %v1274, 1e-12
        %v1279 = vadd.f32 %v1275, 1e-12
        %v1280 = vrsqrt.pop %v1276
        %v1281 = vrsqrt.pop %v1277
        %v1282 = vrsqrt.pop %v1278
        %v1283 = vrsqrt.pop %v1279
        %v1284 = vmul.f32 %v1252, %v1280
        %v1285 = vmul.f32 %v1253, %v1281
        %v1286 = vmul.f32 %v1254, %v1282
        %v1287 = vmul.f32 %v1255, %v1283
        %v1289 = vlaneseq
        %v1290 = vshrl.u32 %v1289, 7
        %v1291 = vsub.s32 0, %v1290
        %v1292 = vrot.slane %v1233, %v1291
        %v1294 = vmul.f32 %v1284, %v1292
        %v1295 = vmul.f32 %v1285, %v1292
        %v1296 = vmul.f32 %v1286, %v1292
        %v1297 = vmul.f32 %v1287, %v1292
        %v1299 = vlaneseq
        %v1300 = vshrl.u32 %v1299, 7
        %v1301 = vsub.s32 0, %v1300
        %v1302 = vrot.slane %v1234, %v1301
        %v1304 = vadd.f32 %v1294, %v1302
        %v1305 = vadd.f32 %v1295, %v1302
        %v1306 = vadd.f32 %v1296, %v1302
        %v1307 = vadd.f32 %v1297, %v1302
        %v1308 = vld [vmem:[%s8] sm:$0xf]
        %v1309 = vld [vmem:[%s8 + $0x4] sm:$0xf]
        %v1310 = vld [vmem:[%s8 + $0x8] sm:$0xf]
        %v1311 = vld [vmem:[%s8 + $0xc] sm:$0xf]
        %v1312 = vpack.c.bf16 %v1305, %v1304
        %v1313 = vpack.c.bf16 %v1307, %v1306
        %v1314 = vld [vmem:[#allocation11] sm:$0x1]
        %v1316 = vlaneseq
        %v1317 = vshrl.u32 %v1316, 7
        %v1318 = vsub.s32 0, %v1317
        %v1319 = vrot.slane %v1314, %v1318
        %v1325 = vunpack.c.l.b16 %v1308
        %v1326 = vunpack.c.l.b16 %v1309
        %v1327 = vunpack.c.l.b16 %v1310
        %v1328 = vunpack.c.l.b16 %v1311
        %v1329 = vpack.c.b16 %v1326, %v1325
        %v1330 = vpack.c.b16 %v1328, %v1327
        %v1334 = vsel %vm842, %v1312, 0
        %v1337 = vsel %vm842, %v1313, 0
        %1339 = vmatprep.subr.bf16.mxu0 0
        %1340 = vmatpush1.bf16.msra.mxu0 %v1329
        %1341 = vmatprep.subr.bf16.mxu0 0
        %1342 = vmatpush1.bf16.msra.mxu0 %v1330
        %1343 = vmatprep.subr.bf16.mxu0 0
        %1344 = vmatpush1.bf16.msra.mxu0 0
        %1345 = vmatprep.subr.bf16.mxu0 0
        %1346 = vmatpush1.bf16.msra.mxu0 0
        %1347 = vmatprep.subr.bf16.mxu0 0
        %1348 = vmatpush1.bf16.msra.mxu0 0
        %1349 = vmatprep.subr.bf16.mxu0 0
        %1350 = vmatpush1.bf16.msra.mxu0 0
        %1351 = vmatprep.subr.bf16.mxu0 0
        %1352 = vmatpush1.bf16.msra.mxu0 0
        %1353 = vmatprep.subr.bf16.mxu0 0
        %1354 = vmatpush1.bf16.msra.mxu0 0
        %1355 = vmatprep.subr.bf16.mxu0 0
        %1356 = vmatpush1.bf16.msra.mxu0 0
        %1357 = vmatprep.subr.bf16.mxu0 0
        %1358 = vmatpush1.bf16.msra.mxu0 0
        %1359 = vmatprep.subr.bf16.mxu0 0
        %1360 = vmatpush1.bf16.msra.mxu0 0
        %1361 = vmatprep.subr.bf16.mxu0 0
        %1362 = vmatpush1.bf16.msra.mxu0 0
        %1363 = vmatprep.subr.bf16.mxu0 0
        %1364 = vmatpush1.bf16.msra.mxu0 0
        %1365 = vmatprep.subr.bf16.mxu0 0
        %1366 = vmatpush1.bf16.msra.mxu0 0
        %1367 = vmatprep.subr.bf16.mxu0 0
        %1368 = vmatpush1.bf16.msra.mxu0 0
        %1369 = vmatprep.subr.bf16.mxu0 0
        %1370 = vmatpush1.bf16.msra.mxu0 0
        %1371 = vmatprep.mubr.bf16.mxu0 0
        %1372 = vmatmul.mubr.bf16.gmra.mrb[0].mxu0 %v1334
        %v1373 = vpop.f32.mrb[0].mxu0
        %v1374 = vadd.f32 %v1319, %v1373
        %v1375 = vpop.f32.mrb[0].mxu0
        %v1376 = vpop.f32.mrb[0].mxu0
        %v1377 = vadd.f32 %v1319, %v1376
        %v1378 = vpop.f32.mrb[0].mxu0
        %1379 = vmatprep.mubr.bf16.mxu0 0
        %1380 = vmatmul.mubr.bf16.gmra.mrb[0].mxu0 %v1337
        %v1381 = vpop.f32.mrb[0].mxu0
        %v1382 = vadd.f32 %v1319, %v1381
        %v1383 = vpop.f32.mrb[0].mxu0
        %v1384 = vpop.f32.mrb[0].mxu0
        %v1385 = vadd.f32 %v1319, %v1384
        %v1386 = vpop.f32.mrb[0].mxu0
        %1387 = vdwg.mxu0
        %v1388 = vmul.f32 %v1374, 0.5
        %v1389 = vmul.f32 %v1377, 0.5
        %v1390 = vmul.f32 %v1382, 0.5
        %v1391 = vmul.f32 %v1385, 0.5
        %v1392 = vmul.f32 %v1374, 0.044715
        %v1393 = vmul.f32 %v1377, 0.044715
        %v1394 = vmul.f32 %v1382, 0.044715
        %v1395 = vmul.f32 %v1385, 0.044715
        %v1396 = vmul.f32 %v1392, %v1374
        %v1397 = vmul.f32 %v1393, %v1377
        %v1398 = vmul.f32 %v1394, %v1382
        %v1399 = vmul.f32 %v1395, %v1385
        %v1400 = vmul.f32 %v1396, %v1374
        %v1401 = vmul.f32 %v1397, %v1377
        %v1402 = vmul.f32 %v1398, %v1382
        %v1403 = vmul.f32 %v1399, %v1385
        %v1404 = vadd.f32 %v1374, %v1400
        %v1405 = vadd.f32 %v1377, %v1401
        %v1406 = vadd.f32 %v1382, %v1402
        %v1407 = vadd.f32 %v1385, %v1403
        %v1408 = vmul.f32 %v1404, 0.7978846
        %v1409 = vmul.f32 %v1405, 0.7978846
        %v1410 = vmul.f32 %v1406, 0.7978846
        %v1411 = vmul.f32 %v1407, 0.7978846
        %v1412 = vtanh.pop %v1408
        %v1413 = vtanh.pop %v1409
        %v1414 = vtanh.pop %v1410
        %v1415 = vtanh.pop %v1411
        %v1416 = vadd.f32 %v1412, 1.0
        %v1417 = vadd.f32 %v1413, 1.0
        %v1418 = vadd.f32 %v1414, 1.0
        %v1419 = vadd.f32 %v1415, 1.0
        %v1420 = vmul.f32 %v1388, %v1416
        %v1421 = vmul.f32 %v1389, %v1417
        %v1422 = vmul.f32 %v1390, %v1418
        %v1423 = vmul.f32 %v1391, %v1419
        %v1424 = vld [vmem:[%s10] sm:$0xf]
        %v1425 = vld [vmem:[%s10 + $0x4] sm:$0xf]
        %v1426 = vld [vmem:[%s10 + $0x8] sm:$0xf]
        %v1427 = vld [vmem:[%s10 + $0xc] sm:$0xf]
        %v1428 = vld [vmem:[%s10 + $0x10] sm:$0xf]
        %v1429 = vld [vmem:[%s10 + $0x14] sm:$0xf]
        %v1430 = vld [vmem:[%s10 + $0x18] sm:$0xf]
        %v1431 = vld [vmem:[%s10 + $0x1c] sm:$0xf]
        %v1432 = vpack.c.bf16 %v1421, %v1420
        %v1433 = vpack.c.bf16 %v1423, %v1422
        %v1434 = vld [vmem:[#allocation13] sm:$0x1]
        %v1436 = vlaneseq
        %v1437 = vshrl.u32 %v1436, 7
        %v1438 = vsub.s32 0, %v1437
        %v1439 = vrot.slane %v1434, %v1438
        %v1449 = vunpack.c.l.b16 %v1424
        %v1450 = vunpack.c.l.b16 %v1425
        %v1451 = vunpack.c.l.b16 %v1426
        %v1452 = vunpack.c.l.b16 %v1427
        %v1453 = vunpack.c.l.b16 %v1428
        %v1454 = vunpack.c.l.b16 %v1429
        %v1455 = vunpack.c.l.b16 %v1430
        %v1456 = vunpack.c.l.b16 %v1431
        %v1457 = vpack.c.b16 %v1450, %v1449
        %v1458 = vpack.c.b16 %v1452, %v1451
        %v1459 = vpack.c.b16 %v1454, %v1453
        %v1460 = vpack.c.b16 %v1456, %v1455
        %vm1465 = vcmask 523264
        %v1467 = vsel %vm1465, %v1432, 0
        %v1470 = vsel %vm1465, %v1433, 0
        %1472 = vmatprep.subr.bf16.mxu0 0
        %1473 = vmatpush1.bf16.msra.mxu0 %v1457
        %1474 = vmatprep.subr.bf16.mxu0 0
        %1475 = vmatpush1.bf16.msra.mxu0 %v1458
        %1476 = vmatprep.subr.bf16.mxu0 0
        %1477 = vmatpush1.bf16.msra.mxu0 %v1459
        %1478 = vmatprep.subr.bf16.mxu0 0
        %1479 = vmatpush1.bf16.msra.mxu0 %v1460
        %1480 = vmatprep.subr.bf16.mxu0 0
        %1481 = vmatpush1.bf16.msra.mxu0 0
        %1482 = vmatprep.subr.bf16.mxu0 0
        %1483 = vmatpush1.bf16.msra.mxu0 0
        %1484 = vmatprep.subr.bf16.mxu0 0
        %1485 = vmatpush1.bf16.msra.mxu0 0
        %1486 = vmatprep.subr.bf16.mxu0 0
        %1487 = vmatpush1.bf16.msra.mxu0 0
        %1488 = vmatprep.subr.bf16.mxu0 0
        %1489 = vmatpush1.bf16.msra.mxu0 0
        %1490 = vmatprep.subr.bf16.mxu0 0
        %1491 = vmatpush1.bf16.msra.mxu0 0
        %1492 = vmatprep.subr.bf16.mxu0 0
        %1493 = vmatpush1.bf16.msra.mxu0 0
        %1494 = vmatprep.subr.bf16.mxu0 0
        %1495 = vmatpush1.bf16.msra.mxu0 0
        %1496 = vmatprep.subr.bf16.mxu0 0
        %1497 = vmatpush1.bf16.msra.mxu0 0
        %1498 = vmatprep.subr.bf16.mxu0 0
        %1499 = vmatpush1.bf16.msra.mxu0 0
        %1500 = vmatprep.subr.bf16.mxu0 0
        %1501 = vmatpush1.bf16.msra.mxu0 0
        %1502 = vmatprep.subr.bf16.mxu0 0
        %1503 = vmatpush1.bf16.msra.mxu0 0
        %1504 = vmatprep.mubr.bf16.mxu0 0
        %1505 = vmatmul.mubr.bf16.gmra.mrb[0].mxu0 %v1467
        %v1506 = vpop.f32.mrb[0].mxu0
        %v1507 = vadd.f32 %v1439, %v1506
        %v1508 = vpop.f32.mrb[0].mxu0
        %v1509 = vpop.f32.mrb[0].mxu0
        %v1510 = vadd.f32 %v1439, %v1509
        %v1511 = vpop.f32.mrb[0].mxu0
        %1512 = vmatprep.mubr.bf16.mxu0 0
        %1513 = vmatmul.mubr.bf16.gmra.mrb[0].mxu0 %v1470
        %v1514 = vpop.f32.mrb[0].mxu0
        %v1515 = vadd.f32 %v1439, %v1514
        %v1516 = vpop.f32.mrb[0].mxu0
        %v1517 = vpop.f32.mrb[0].mxu0
        %v1518 = vadd.f32 %v1439, %v1517
        %v1519 = vpop.f32.mrb[0].mxu0
        %1520 = vdwg.mxu0
        %v1521 = vadd.f32 %v1304, %v1507
        %v1522 = vadd.f32 %v1305, %v1510
        %v1523 = vadd.f32 %v1306, %v1515
        %v1524 = vadd.f32 %v1307, %v1518
        %v1525 = vld [vmem:[#allocation14] sm:$0x1]
        %v1526 = vld [vmem:[%s13] sm:$0x1]
        %v1527 = vsel %vm842, %v1521, 0.0
        %1528 = vadd.xlane.f32.xlu0 %v1527
        %v1529 = vpop.xlane.xlu0 %1528
        %v1530 = vsel %vm842, %v1522, 0.0
        %1531 = vadd.xlane.f32.xlu0 %v1530
        %v1532 = vpop.xlane.xlu0 %1531
        %v1533 = vsel %vm842, %v1523, 0.0
        %1534 = vadd.xlane.f32.xlu0 %v1533
        %v1535 = vpop.xlane.xlu0 %1534
        %v1536 = vsel %vm842, %v1524, 0.0
        %1537 = vadd.xlane.f32.xlu0 %v1536
        %v1538 = vpop.xlane.xlu0 %1537
        %v1539 = vmul.f32 %v1529, %v1247
        %v1540 = vmul.f32 %v1532, %v1247
        %v1541 = vmul.f32 %v1535, %v1247
        %v1542 = vmul.f32 %v1538, %v1247
        %v1543 = vsub.f32 %v1521, %v1539
        %v1544 = vsub.f32 %v1522, %v1540
        %v1545 = vsub.f32 %v1523, %v1541
        %v1546 = vsub.f32 %v1524, %v1542
        %v1547 = vmul.f32 %v1543, %v1543
        %v1548 = vmul.f32 %v1544, %v1544
        %v1549 = vmul.f32 %v1545, %v1545
        %v1550 = vmul.f32 %v1546, %v1546
        %v1551 = vsel %vm842, %v1547, 0.0
        %1552 = vadd.xlane.f32.xlu0 %v1551
        %v1553 = vpop.xlane.xlu0 %1552
        %v1554 = vsel %vm842, %v1548, 0.0
        %1555 = vadd.xlane.f32.xlu0 %v1554
        %v1556 = vpop.xlane.xlu0 %1555
        %v1557 = vsel %vm842, %v1549, 0.0
        %1558 = vadd.xlane.f32.xlu0 %v1557
        %v1559 = vpop.xlane.xlu0 %1558
        %v1560 = vsel %vm842, %v1550, 0.0
        %1561 = vadd.xlane.f32.xlu0 %v1560
        %v1562 = vpop.xlane.xlu0 %1561
        %v1563 = vmul.f32 %v1553, %v1247
        %v1564 = vmul.f32 %v1556, %v1247
        %v1565 = vmul.f32 %v1559, %v1247
        %v1566 = vmul.f32 %v1562, %v1247
        %v1567 = vadd.f32 %v1563, 1e-12
        %v1568 = vadd.f32 %v1564, 1e-12
        %v1569 = vadd.f32 %v1565, 1e-12
        %v1570 = vadd.f32 %v1566, 1e-12
        %v1571 = vrsqrt.pop %v1567
        %v1572 = vrsqrt.pop %v1568
        %v1573 = vrsqrt.pop %v1569
        %v1574 = vrsqrt.pop %v1570
        %v1575 = vmul.f32 %v1543, %v1571
        %v1576 = vmul.f32 %v1544, %v1572
        %v1577 = vmul.f32 %v1545, %v1573
        %v1578 = vmul.f32 %v1546, %v1574
        %v1580 = vlaneseq
        %v1581 = vshrl.u32 %v1580, 7
        %v1582 = vsub.s32 0, %v1581
        %v1583 = vrot.slane %v1525, %v1582
        %v1585 = vmul.f32 %v1575, %v1583
        %v1586 = vmul.f32 %v1576, %v1583
        %v1587 = vmul.f32 %v1577, %v1583
        %v1588 = vmul.f32 %v1578, %v1583
        %v1590 = vlaneseq
        %v1591 = vshrl.u32 %v1590, 7
        %v1592 = vsub.s32 0, %v1591
        %v1593 = vrot.slane %v1526, %v1592
        %v1595 = vadd.f32 %v1585, %v1593
        %v1596 = vadd.f32 %v1586, %v1593
        %v1597 = vadd.f32 %v1587, %v1593
        %v1598 = vadd.f32 %v1588, %v1593
        %v1599 = vld [vmem:[%s14] sm:$0xff]
        %v1600 = vld [vmem:[%s14 + $0x8] sm:$0xff]
        %v1601 = vld [vmem:[%s14 + $0x10] sm:$0xff]
        %v1602 = vld [vmem:[%s14 + $0x18] sm:$0xff]
        %v1603 = vld [vmem:[%s14 + $0x20] sm:$0xff]
        %v1604 = vld [vmem:[%s14 + $0x28] sm:$0xff]
        %v1605 = vld [vmem:[%s14 + $0x30] sm:$0xff]
        %v1606 = vld [vmem:[%s14 + $0x38] sm:$0xff]
        %v1607 = vld [vmem:[%s14 + $0x40] sm:$0xff]
        %v1608 = vld [vmem:[%s14 + $0x48] sm:$0xff]
        %v1609 = vld [vmem:[%s14 + $0x50] sm:$0xff]
        %v1610 = vld [vmem:[%s14 + $0x58] sm:$0xff]
        %v1611 = vpack.c.bf16 %v1596, %v1595
        %v1612 = vpack.c.bf16 %v1598, %v1597
        %v1613 = vld [vmem:[%s15] sm:$0x3f]
        %v1615 = vlaneseq
        %v1616 = vshrl.u32 %v1615, 7
        %v1617 = vsub.s32 0, %v1616
        %v1618 = vrot.slane %v1613, %v1617
        %v1619 = vlaneseq
        %v1620 = vshrl.u32 %v1619, 7
        %v1621 = vsub.s32 1, %v1620
        %v1622 = vrot.slane %v1613, %v1621
        %v1623 = vlaneseq
        %v1624 = vshrl.u32 %v1623, 7
        %v1625 = vsub.s32 2, %v1624
        %v1626 = vrot.slane %v1613, %v1625
        %v1627 = vlaneseq
        %v1628 = vshrl.u32 %v1627, 7
        %v1629 = vsub.s32 3, %v1628
        %v1630 = vrot.slane %v1613, %v1629
        %v1631 = vlaneseq
        %v1632 = vshrl.u32 %v1631, 7
        %v1633 = vsub.s32 4, %v1632
        %v1634 = vrot.slane %v1613, %v1633
        %v1635 = vlaneseq
        %v1636 = vshrl.u32 %v1635, 7
        %v1637 = vsub.s32 5, %v1636
        %v1638 = vrot.slane %v1613, %v1637
        %v1657 = vunpack.c.l.b16 %v1599
        %v1658 = vunpack.c.h.b16 %v1599
        %v1659 = vunpack.c.l.b16 %v1600
        %v1660 = vunpack.c.h.b16 %v1600
        %v1661 = vunpack.c.l.b16 %v1601
        %v1662 = vunpack.c.h.b16 %v1601
        %v1663 = vunpack.c.l.b16 %v1602
        %v1664 = vunpack.c.h.b16 %v1602
        %v1665 = vunpack.c.l.b16 %v1603
        %v1666 = vunpack.c.h.b16 %v1603
        %v1667 = vunpack.c.l.b16 %v1604
        %v1668 = vunpack.c.h.b16 %v1604
        %v1669 = vunpack.c.l.b16 %v1605
        %v1670 = vunpack.c.h.b16 %v1605
        %v1671 = vunpack.c.l.b16 %v1606
        %v1672 = vunpack.c.h.b16 %v1606
        %v1673 = vunpack.c.l.b16 %v1607
        %v1674 = vunpack.c.h.b16 %v1607
        %v1675 = vunpack.c.l.b16 %v1608
        %v1676 = vunpack.c.h.b16 %v1608
        %v1677 = vunpack.c.l.b16 %v1609
        %v1678 = vunpack.c.h.b16 %v1609
        %v1679 = vunpack.c.l.b16 %v1610
        %v1680 = vunpack.c.h.b16 %v1610
        %v1681 = vpack.c.b16 %v1663, %v1657
        %v1682 = vpack.c.b16 %v1664, %v1658
        %v1683 = vpack.c.b16 %v1665, %v1659
        %v1684 = vpack.c.b16 %v1666, %v1660
        %v1685 = vpack.c.b16 %v1667, %v1661
        %v1686 = vpack.c.b16 %v1668, %v1662
        %v1687 = vpack.c.b16 %v1675, %v1669
        %v1688 = vpack.c.b16 %v1676, %v1670
        %v1689 = vpack.c.b16 %v1677, %v1671
        %v1690 = vpack.c.b16 %v1678, %v1672
        %v1691 = vpack.c.b16 %v1679, %v1673
        %v1692 = vpack.c.b16 %v1680, %v1674
        %v1706 = vsel %vm842, %v1611, 0
        %v1709 = vsel %vm842, %v1612, 0
        %1711 = vmatprep.subr.bf16.mxu0 %v1682
        %1712 = vmatpush1.bf16.msra.mxu0 %v1681
        %1713 = vmatprep.subr.bf16.mxu0 %v1688
        %1714 = vmatpush1.bf16.msra.mxu0 %v1687
        %1715 = vmatprep.subr.bf16.mxu0 0
        %1716 = vmatpush1.bf16.msra.mxu0 0
        %1717 = vmatprep.subr.bf16.mxu0 0
        %1718 = vmatpush1.bf16.msra.mxu0 0
        %1719 = vmatprep.subr.bf16.mxu0 0
        %1720 = vmatpush1.bf16.msra.mxu0 0
        %1721 = vmatprep.subr.bf16.mxu0 0
        %1722 = vmatpush1.bf16.msra.mxu0 0
        %1723 = vmatprep.subr.bf16.mxu0 0
        %1724 = vmatpush1.bf16.msra.mxu0 0
        %1725 = vmatprep.subr.bf16.mxu0 0
        %1726 = vmatpush1.bf16.msra.mxu0 0
        %1727 = vmatprep.subr.bf16.mxu0 0
        %1728 = vmatpush1.bf16.msra.mxu0 0
        %1729 = vmatprep.subr.bf16.mxu0 0
        %1730 = vmatpush1.bf16.msra.mxu0 0
        %1731 = vmatprep.subr.bf16.mxu0 0
        %1732 = vmatpush1.bf16.msra.mxu0 0
        %1733 = vmatprep.subr.bf16.mxu0 0
        %1734 = vmatpush1.bf16.msra.mxu0 0
        %1735 = vmatprep.subr.bf16.mxu0 0
        %1736 = vmatpush1.bf16.msra.mxu0 0
        %1737 = vmatprep.subr.bf16.mxu0 0
        %1738 = vmatpush1.bf16.msra.mxu0 0
        %1739 = vmatprep.subr.bf16.mxu0 0
        %1740 = vmatpush1.bf16.msra.mxu0 0
        %1741 = vmatprep.subr.bf16.mxu0 0
        %1742 = vmatpush1.bf16.msra.mxu0 0
        %1743 = vmatprep.mubr.bf16.mxu0 0
        %1744 = vmatmul.mubr.bf16.gmra.mrb[0].mxu0 %v1706
        %v1745 = vpop.f32.mrb[0].mxu0
        %v1746 = vadd.f32 %v1618, %v1745
        %v1747 = vpop.f32.mrb[0].mxu0
        %v1748 = vadd.f32 %v1622, %v1747
        %v1749 = vpop.f32.mrb[0].mxu0
        %v1750 = vadd.f32 %v1618, %v1749
        %v1751 = vpop.f32.mrb[0].mxu0
        %v1752 = vadd.f32 %v1622, %v1751
        %1753 = vmatprep.mubr.bf16.mxu0 0
        %1754 = vmatmul.mubr.bf16.gmra.mrb[0].mxu0 %v1709
        %v1755 = vpop.f32.mrb[0].mxu0
        %v1756 = vadd.f32 %v1618, %v1755
        %v1757 = vpop.f32.mrb[0].mxu0
        %v1758 = vadd.f32 %v1622, %v1757
        %v1759 = vpop.f32.mrb[0].mxu0
        %v1760 = vadd.f32 %v1618, %v1759
        %v1761 = vpop.f32.mrb[0].mxu0
        %v1762 = vadd.f32 %v1622, %v1761
        %1763 = vdwg.mxu0
        %1764 = vmatprep.subr.bf16.mxu0 %v1684
        %1765 = vmatpush1.bf16.msra.mxu0 %v1683
        %1766 = vmatprep.subr.bf16.mxu0 %v1690
        %1767 = vmatpush1.bf16.msra.mxu0 %v1689
        %1768 = vmatprep.subr.bf16.mxu0 0
        %1769 = vmatpush1.bf16.msra.mxu0 0
        %1770 = vmatprep.subr.bf16.mxu0 0
        %1771 = vmatpush1.bf16.msra.mxu0 0
        %1772 = vmatprep.subr.bf16.mxu0 0
        %1773 = vmatpush1.bf16.msra.mxu0 0
        %1774 = vmatprep.subr.bf16.mxu0 0
        %1775 = vmatpush1.bf16.msra.mxu0 0
        %1776 = vmatprep.subr.bf16.mxu0 0
        %1777 = vmatpush1.bf16.msra.mxu0 0
        %1778 = vmatprep.subr.bf16.mxu0 0
        %1779 = vmatpush1.bf16.msra.mxu0 0
        %1780 = vmatprep.subr.bf16.mxu0 0
        %1781 = vmatpush1.bf16.msra.mxu0 0
        %1782 = vmatprep.subr.bf16.mxu0 0
        %1783 = vmatpush1.bf16.msra.mxu0 0
        %1784 = vmatprep.subr.bf16.mxu0 0
        %1785 = vmatpush1.bf16.msra.mxu0 0
        %1786 = vmatprep.subr.bf16.mxu0 0
        %1787 = vmatpush1.bf16.msra.mxu0 0
        %1788 = vmatprep.subr.bf16.mxu0 0
        %1789 = vmatpush1.bf16.msra.mxu0 0
        %1790 = vmatprep.subr.bf16.mxu0 0
        %1791 = vmatpush1.bf16.msra.mxu0 0
        %1792 = vmatprep.subr.bf16.mxu0 0
        %1793 = vmatpush1.bf16.msra.mxu0 0
        %1794 = vmatprep.subr.bf16.mxu0 0
        %1795 = vmatpush1.bf16.msra.mxu0 0
        %1796 = vmatprep.mubr.bf16.mxu0 0
        %1797 = vmatmul.mubr.bf16.gmra.mrb[0].mxu0 %v1706
        %v1798 = vpop.f32.mrb[0].mxu0
        %v1799 = vadd.f32 %v1626, %v1798
        %v1800 = vpop.f32.mrb[0].mxu0
        %v1801 = vadd.f32 %v1630, %v1800
        %v1802 = vpop.f32.mrb[0].mxu0
        %v1803 = vadd.f32 %v1626, %v1802
        %v1804 = vpop.f32.mrb[0].mxu0
        %v1805 = vadd.f32 %v1630, %v1804
        %1806 = vmatprep.mubr.bf16.mxu0 0
        %1807 = vmatmul.mubr.bf16.gmra.mrb[0].mxu0 %v1709
        %v1808 = vpop.f32.mrb[0].mxu0
        %v1809 = vadd.f32 %v1626, %v1808
        %v1810 = vpop.f32.mrb[0].mxu0
        %v1811 = vadd.f32 %v1630, %v1810
        %v1812 = vpop.f32.mrb[0].mxu0
        %v1813 = vadd.f32 %v1626, %v1812
        %v1814 = vpop.f32.mrb[0].mxu0
        %v1815 = vadd.f32 %v1630, %v1814
        %1816 = vdwg.mxu0
        %1817 = vmatprep.subr.bf16.mxu0 %v1686
        %1818 = vmatpush1.bf16.msra.mxu0 %v1685
        %1819 = vmatprep.subr.bf16.mxu0 %v1692
        %1820 = vmatpush1.bf16.msra.mxu0 %v1691
        %1821 = vmatprep.subr.bf16.mxu0 0
        %1822 = vmatpush1.bf16.msra.mxu0 0
        %1823 = vmatprep.subr.bf16.mxu0 0
        %1824 = vmatpush1.bf16.msra.mxu0 0
        %1825 = vmatprep.subr.bf16.mxu0 0
        %1826 = vmatpush1.bf16.msra.mxu0 0
        %1827 = vmatprep.subr.bf16.mxu0 0
        %1828 = vmatpush1.bf16.msra.mxu0 0
        %1829 = vmatprep.subr.bf16.mxu0 0
        %1830 = vmatpush1.bf16.msra.mxu0 0
        %1831 = vmatprep.subr.bf16.mxu0 0
        %1832 = vmatpush1.bf16.msra.mxu0 0
        %1833 = vmatprep.subr.bf16.mxu0 0
        %1834 = vmatpush1.bf16.msra.mxu0 0
        %1835 = vmatprep.subr.bf16.mxu0 0
        %1836 = vmatpush1.bf16.msra.mxu0 0
        %1837 = vmatprep.subr.bf16.mxu0 0
        %1838 = vmatpush1.bf16.msra.mxu0 0
        %1839 = vmatprep.subr.bf16.mxu0 0
        %1840 = vmatpush1.bf16.msra.mxu0 0
        %1841 = vmatprep.subr.bf16.mxu0 0
        %1842 = vmatpush1.bf16.msra.mxu0 0
        %1843 = vmatprep.subr.bf16.mxu0 0
        %1844 = vmatpush1.bf16.msra.mxu0 0
        %1845 = vmatprep.subr.bf16.mxu0 0
        %1846 = vmatpush1.bf16.msra.mxu0 0
        %1847 = vmatprep.subr.bf16.mxu0 0
        %1848 = vmatpush1.bf16.msra.mxu0 0
        %1849 = vmatprep.mubr.bf16.mxu0 0
        %1850 = vmatmul.mubr.bf16.gmra.mrb[0].mxu0 %v1706
        %v1851 = vpop.f32.mrb[0].mxu0
        %v1852 = vadd.f32 %v1634, %v1851
        %v1853 = vpop.f32.mrb[0].mxu0
        %v1854 = vadd.f32 %v1638, %v1853
        %v1855 = vpop.f32.mrb[0].mxu0
        %v1856 = vadd.f32 %v1634, %v1855
        %v1857 = vpop.f32.mrb[0].mxu0
        %v1858 = vadd.f32 %v1638, %v1857
        %1859 = vmatprep.mubr.bf16.mxu0 0
        %1860 = vmatmul.mubr.bf16.gmra.mrb[0].mxu0 %v1709
        %v1861 = vpop.f32.mrb[0].mxu0
        %v1862 = vadd.f32 %v1634, %v1861
        %v1863 = vpop.f32.mrb[0].mxu0
        %v1864 = vadd.f32 %v1638, %v1863
        %v1865 = vpop.f32.mrb[0].mxu0
        %v1866 = vadd.f32 %v1634, %v1865
        %v1867 = vpop.f32.mrb[0].mxu0
        %v1868 = vadd.f32 %v1638, %v1867
        %1869 = vdwg.mxu0
        %v1876 = vrot.slane %v1750, 7
        %v1877 = vrot.slane %v1752, 7
        %v1878 = vrot.slane %v1803, 7
        %v1879 = vrot.slane %v1805, 7
        %v1880 = vrot.slane %v1856, 7
        %v1881 = vrot.slane %v1858, 7
        %v1894 = vrot.slane %v1756, 6
        %v1895 = vrot.slane %v1758, 6
        %v1896 = vrot.slane %v1809, 6
        %v1897 = vrot.slane %v1811, 6
        %v1898 = vrot.slane %v1862, 6
        %v1899 = vrot.slane %v1864, 6
        %v1912 = vrot.slane %v1760, 5
        %v1913 = vrot.slane %v1762, 5
        %v1914 = vrot.slane %v1813, 5
        %v1915 = vrot.slane %v1815, 5
        %v1916 = vrot.slane %v1866, 5
        %v1917 = vrot.slane %v1868, 5
        %vm1924 = vcmask 1040384
        %v1925 = vsel %vm1924, %v1746, %v1876
        %v1926 = vsel %vm1924, %v1748, %v1877
        %v1927 = vsel %vm1924, %v1799, %v1878
        %v1928 = vsel %vm1924, %v1801, %v1879
        %v1929 = vsel %vm1924, %v1852, %v1880
        %v1930 = vsel %vm1924, %v1854, %v1881
        %vm1931 = vcmask 1041408
        %v1932 = vsel %vm1931, %v1925, %v1894
        %v1933 = vsel %vm1931, %v1926, %v1895
        %v1934 = vsel %vm1931, %v1927, %v1896
        %v1935 = vsel %vm1931, %v1928, %v1897
        %v1936 = vsel %vm1931, %v1929, %v1898
        %v1937 = vsel %vm1931, %v1930, %v1899
        %vm1938 = vcmask 1042432
        %v1939 = vsel %vm1938, %v1932, %v1912
        %v1940 = vsel %vm1938, %v1933, %v1913
        %v1941 = vsel %vm1938, %v1934, %v1914
        %v1942 = vsel %vm1938, %v1935, %v1915
        %v1943 = vsel %vm1938, %v1936, %v1916
        %v1944 = vsel %vm1938, %v1937, %v1917
        %v1951 = vrot.slane %v1746, 1
        %v1952 = vrot.slane %v1748, 1
        %v1953 = vrot.slane %v1799, 1
        %v1954 = vrot.slane %v1801, 1
        %v1955 = vrot.slane %v1852, 1
        %v1956 = vrot.slane %v1854, 1
        %v1963 = vrot.slane %v1756, 7
        %v1964 = vrot.slane %v1758, 7
        %v1965 = vrot.slane %v1809, 7
        %v1966 = vrot.slane %v1811, 7
        %v1967 = vrot.slane %v1862, 7
        %v1968 = vrot.slane %v1864, 7
        %v1975 = vrot.slane %v1760, 6
        %v1976 = vrot.slane %v1762, 6
        %v1977 = vrot.slane %v1813, 6
        %v1978 = vrot.slane %v1815, 6
        %v1979 = vrot.slane %v1866, 6
        %v1980 = vrot.slane %v1868, 6
        %v1987 = vsel %vm1924, %v1951, %v1750
        %v1988 = vsel %vm1924, %v1952, %v1752
        %v1989 = vsel %vm1924, %v1953, %v1803
        %v1990 = vsel %vm1924, %v1954, %v1805
        %v1991 = vsel %vm1924, %v1955, %v1856
        %v1992 = vsel %vm1924, %v1956, %v1858
        %v1993 = vsel %vm1931, %v1987, %v1963
        %v1994 = vsel %vm1931, %v1988, %v1964
        %v1995 = vsel %vm1931, %v1989, %v1965
        %v1996 = vsel %vm1931, %v1990, %v1966
        %v1997 = vsel %vm1931, %v1991, %v1967
        %v1998 = vsel %vm1931, %v1992, %v1968
        %v1999 = vsel %vm1938, %v1993, %v1975
        %v2000 = vsel %vm1938, %v1994, %v1976
        %v2001 = vsel %vm1938, %v1995, %v1977
        %v2002 = vsel %vm1938, %v1996, %v1978
        %v2003 = vsel %vm1938, %v1997, %v1979
        %v2004 = vsel %vm1938, %v1998, %v1980
        %v2005 = vrot.slane %v1746, 2
        %v2006 = vrot.slane %v1748, 2
        %v2007 = vrot.slane %v1799, 2
        %v2008 = vrot.slane %v1801, 2
        %v2009 = vrot.slane %v1852, 2
        %v2010 = vrot.slane %v1854, 2
        %v2017 = vrot.slane %v1750, 1
        %v2018 = vrot.slane %v1752, 1
        %v2019 = vrot.slane %v1803, 1
        %v2020 = vrot.slane %v1805, 1
        %v2021 = vrot.slane %v1856, 1
        %v2022 = vrot.slane %v1858, 1
        %v2029 = vrot.slane %v1760, 7
        %v2030 = vrot.slane %v1762, 7
        %v2031 = vrot.slane %v1813, 7
        %v2032 = vrot.slane %v1815, 7
        %v2033 = vrot.slane %v1866, 7
        %v2034 = vrot.slane %v1868, 7
        %v2041 = vsel %vm1924, %v2005, %v2017
        %v2042 = vsel %vm1924, %v2006, %v2018
        %v2043 = vsel %vm1924, %v2007, %v2019
        %v2044 = vsel %vm1924, %v2008, %v2020
        %v2045 = vsel %vm1924, %v2009, %v2021
        %v2046 = vsel %vm1924, %v2010, %v2022
        %v2047 = vsel %vm1931, %v2041, %v1756
        %v2048 = vsel %vm1931, %v2042, %v1758
        %v2049 = vsel %vm1931, %v2043, %v1809
        %v2050 = vsel %vm1931, %v2044, %v1811
        %v2051 = vsel %vm1931, %v2045, %v1862
        %v2052 = vsel %vm1931, %v2046, %v1864
        %v2053 = vsel %vm1938, %v2047, %v2029
        %v2054 = vsel %vm1938, %v2048, %v2030
        %v2055 = vsel %vm1938, %v2049, %v2031
        %v2056 = vsel %vm1938, %v2050, %v2032
        %v2057 = vsel %vm1938, %v2051, %v2033
        %v2058 = vsel %vm1938, %v2052, %v2034
        %v2059 = vrot.slane %v1746, 3
        %v2060 = vrot.slane %v1748, 3
        %v2061 = vrot.slane %v1799, 3
        %v2062 = vrot.slane %v1801, 3
        %v2063 = vrot.slane %v1852, 3
        %v2064 = vrot.slane %v1854, 3
        %v2071 = vrot.slane %v1750, 2
        %v2072 = vrot.slane %v1752, 2
        %v2073 = vrot.slane %v1803, 2
        %v2074 = vrot.slane %v1805, 2
        %v2075 = vrot.slane %v1856, 2
        %v2076 = vrot.slane %v1858, 2
        %v2083 = vrot.slane %v1756, 1
        %v2084 = vrot.slane %v1758, 1
        %v2085 = vrot.slane %v1809, 1
        %v2086 = vrot.slane %v1811, 1
        %v2087 = vrot.slane %v1862, 1
        %v2088 = vrot.slane %v1864, 1
        %v2095 = vsel %vm1924, %v2059, %v2071
        %v2096 = vsel %vm1924, %v2060, %v2072
        %v2097 = vsel %vm1924, %v2061, %v2073
        %v2098 = vsel %vm1924, %v2062, %v2074
        %v2099 = vsel %vm1924, %v2063, %v2075
        %v2100 = vsel %vm1924, %v2064, %v2076
        %v2101 = vsel %vm1931, %v2095, %v2083
        %v2102 = vsel %vm1931, %v2096, %v2084
        %v2103 = vsel %vm1931, %v2097, %v2085
        %v2104 = vsel %vm1931, %v2098, %v2086
        %v2105 = vsel %vm1931, %v2099, %v2087
        %v2106 = vsel %vm1931, %v2100, %v2088
        %v2107 = vsel %vm1938, %v2101, %v1760
        %v2108 = vsel %vm1938, %v2102, %v1762
        %v2109 = vsel %vm1938, %v2103, %v1813
        %v2110 = vsel %vm1938, %v2104, %v1815
        %v2111 = vsel %vm1938, %v2105, %v1866
        %v2112 = vsel %vm1938, %v2106, %v1868
        %v2113 = vrot.slane %v1746, 4
        %v2114 = vrot.slane %v1748, 4
        %v2115 = vrot.slane %v1799, 4
        %v2116 = vrot.slane %v1801, 4
        %v2117 = vrot.slane %v1852, 4
        %v2118 = vrot.slane %v1854, 4
        %v2125 = vrot.slane %v1750, 3
        %v2126 = vrot.slane %v1752, 3
        %v2127 = vrot.slane %v1803, 3
        %v2128 = vrot.slane %v1805, 3
        %v2129 = vrot.slane %v1856, 3
        %v2130 = vrot.slane %v1858, 3
        %v2137 = vrot.slane %v1756, 2
        %v2138 = vrot.slane %v1758, 2
        %v2139 = vrot.slane %v1809, 2
        %v2140 = vrot.slane %v1811, 2
        %v2141 = vrot.slane %v1862, 2
        %v2142 = vrot.slane %v1864, 2
        %v2149 = vrot.slane %v1760, 1
        %v2150 = vrot.slane %v1762, 1
        %v2151 = vrot.slane %v1813, 1
        %v2152 = vrot.slane %v1815, 1
        %v2153 = vrot.slane %v1866, 1
        %v2154 = vrot.slane %v1868, 1
        %v2161 = vsel %vm1924, %v2113, %v2125
        %v2162 = vsel %vm1924, %v2114, %v2126
        %v2163 = vsel %vm1924, %v2115, %v2127
        %v2164 = vsel %vm1924, %v2116, %v2128
        %v2165 = vsel %vm1924, %v2117, %v2129
        %v2166 = vsel %vm1924, %v2118, %v2130
        %v2167 = vsel %vm1931, %v2161, %v2137
        %v2168 = vsel %vm1931, %v2162, %v2138
        %v2169 = vsel %vm1931, %v2163, %v2139
        %v2170 = vsel %vm1931, %v2164, %v2140
        %v2171 = vsel %vm1931, %v2165, %v2141
        %v2172 = vsel %vm1931, %v2166, %v2142
        %v2173 = vsel %vm1938, %v2167, %v2149
        %v2174 = vsel %vm1938, %v2168, %v2150
        %v2175 = vsel %vm1938, %v2169, %v2151
        %v2176 = vsel %vm1938, %v2170, %v2152
        %v2177 = vsel %vm1938, %v2171, %v2153
        %v2178 = vsel %vm1938, %v2172, %v2154
        %v2179 = vrot.slane %v1746, 5
        %v2180 = vrot.slane %v1748, 5
        %v2181 = vrot.slane %v1799, 5
        %v2182 = vrot.slane %v1801, 5
        %v2183 = vrot.slane %v1852, 5
        %v2184 = vrot.slane %v1854, 5
        %v2191 = vrot.slane %v1750, 4
        %v2192 = vrot.slane %v1752, 4
        %v2193 = vrot.slane %v1803, 4
        %v2194 = vrot.slane %v1805, 4
        %v2195 = vrot.slane %v1856, 4
        %v2196 = vrot.slane %v1858, 4
        %v2203 = vrot.slane %v1756, 3
        %v2204 = vrot.slane %v1758, 3
        %v2205 = vrot.slane %v1809, 3
        %v2206 = vrot.slane %v1811, 3
        %v2207 = vrot.slane %v1862, 3
        %v2208 = vrot.slane %v1864, 3
        %v2215 = vrot.slane %v1760, 2
        %v2216 = vrot.slane %v1762, 2
        %v2217 = vrot.slane %v1813, 2
        %v2218 = vrot.slane %v1815, 2
        %v2219 = vrot.slane %v1866, 2
        %v2220 = vrot.slane %v1868, 2
        %v2227 = vsel %vm1924, %v2179, %v2191
        %v2228 = vsel %vm1924, %v2180, %v2192
        %v2229 = vsel %vm1924, %v2181, %v2193
        %v2230 = vsel %vm1924, %v2182, %v2194
        %v2231 = vsel %vm1924, %v2183, %v2195
        %v2232 = vsel %vm1924, %v2184, %v2196
        %v2233 = vsel %vm1931, %v2227, %v2203
        %v2234 = vsel %vm1931, %v2228, %v2204
        %v2235 = vsel %vm1931, %v2229, %v2205
        %v2236 = vsel %vm1931, %v2230, %v2206
        %v2237 = vsel %vm1931, %v2231, %v2207
        %v2238 = vsel %vm1931, %v2232, %v2208
        %v2239 = vsel %vm1938, %v2233, %v2215
        %v2240 = vsel %vm1938, %v2234, %v2216
        %v2241 = vsel %vm1938, %v2235, %v2217
        %v2242 = vsel %vm1938, %v2236, %v2218
        %v2243 = vsel %vm1938, %v2237, %v2219
        %v2244 = vsel %vm1938, %v2238, %v2220
        %v2245 = vrot.slane %v1746, 6
        %v2246 = vrot.slane %v1748, 6
        %v2247 = vrot.slane %v1799, 6
        %v2248 = vrot.slane %v1801, 6
        %v2249 = vrot.slane %v1852, 6
        %v2250 = vrot.slane %v1854, 6
        %v2257 = vrot.slane %v1750, 5
        %v2258 = vrot.slane %v1752, 5
        %v2259 = vrot.slane %v1803, 5
        %v2260 = vrot.slane %v1805, 5
        %v2261 = vrot.slane %v1856, 5
        %v2262 = vrot.slane %v1858, 5
        %v2269 = vrot.slane %v1756, 4
        %v2270 = vrot.slane %v1758, 4
        %v2271 = vrot.slane %v1809, 4
        %v2272 = vrot.slane %v1811, 4
        %v2273 = vrot.slane %v1862, 4
        %v2274 = vrot.slane %v1864, 4
        %v2281 = vrot.slane %v1760, 3
        %v2282 = vrot.slane %v1762, 3
        %v2283 = vrot.slane %v1813, 3
        %v2284 = vrot.slane %v1815, 3
        %v2285 = vrot.slane %v1866, 3
        %v2286 = vrot.slane %v1868, 3
        %v2293 = vsel %vm1924, %v2245, %v2257
        %v2294 = vsel %vm1924, %v2246, %v2258
        %v2295 = vsel %vm1924, %v2247, %v2259
        %v2296 = vsel %vm1924, %v2248, %v2260
        %v2297 = vsel %vm1924, %v2249, %v2261
        %v2298 = vsel %vm1924, %v2250, %v2262
        %v2299 = vsel %vm1931, %v2293, %v2269
        %v2300 = vsel %vm1931, %v2294, %v2270
        %v2301 = vsel %vm1931, %v2295, %v2271
        %v2302 = vsel %vm1931, %v2296, %v2272
        %v2303 = vsel %vm1931, %v2297, %v2273
        %v2304 = vsel %vm1931, %v2298, %v2274
        %v2305 = vsel %vm1938, %v2299, %v2281
        %v2306 = vsel %vm1938, %v2300, %v2282
        %v2307 = vsel %vm1938, %v2301, %v2283
        %v2308 = vsel %vm1938, %v2302, %v2284
        %v2309 = vsel %vm1938, %v2303, %v2285
        %v2310 = vsel %vm1938, %v2304, %v2286
        %v2311 = vrot.slane %v1746, 7
        %v2312 = vrot.slane %v1748, 7
        %v2313 = vrot.slane %v1799, 7
        %v2314 = vrot.slane %v1801, 7
        %v2315 = vrot.slane %v1852, 7
        %v2316 = vrot.slane %v1854, 7
        %v2323 = vrot.slane %v1750, 6
        %v2324 = vrot.slane %v1752, 6
        %v2325 = vrot.slane %v1803, 6
        %v2326 = vrot.slane %v1805, 6
        %v2327 = vrot.slane %v1856, 6
        %v2328 = vrot.slane %v1858, 6
        %v2335 = vrot.slane %v1756, 5
        %v2336 = vrot.slane %v1758, 5
        %v2337 = vrot.slane %v1809, 5
        %v2338 = vrot.slane %v1811, 5
        %v2339 = vrot.slane %v1862, 5
        %v2340 = vrot.slane %v1864, 5
        %v2347 = vrot.slane %v1760, 4
        %v2348 = vrot.slane %v1762, 4
        %v2349 = vrot.slane %v1813, 4
        %v2350 = vrot.slane %v1815, 4
        %v2351 = vrot.slane %v1866, 4
        %v2352 = vrot.slane %v1868, 4
        %v2359 = vsel %vm1924, %v2311, %v2323
        %v2360 = vsel %vm1924, %v2312, %v2324
        %v2361 = vsel %vm1924, %v2313, %v2325
        %v2362 = vsel %vm1924, %v2314, %v2326
        %v2363 = vsel %vm1924, %v2315, %v2327
        %v2364 = vsel %vm1924, %v2316, %v2328
        %v2365 = vsel %vm1931, %v2359, %v2335
        %v2366 = vsel %vm1931, %v2360, %v2336
        %v2367 = vsel %vm1931, %v2361, %v2337
        %v2368 = vsel %vm1931, %v2362, %v2338
        %v2369 = vsel %vm1931, %v2363, %v2339
        %v2370 = vsel %vm1931, %v2364, %v2340
        %v2371 = vsel %vm1938, %v2365, %v2347
        %v2372 = vsel %vm1938, %v2366, %v2348
        %v2373 = vsel %vm1938, %v2367, %v2349
        %v2374 = vsel %vm1938, %v2368, %v2350
        %v2375 = vsel %vm1938, %v2369, %v2351
        %v2376 = vsel %vm1938, %v2370, %v2352
        %v2377 = vld [vmem:[#allocation16] sm:$0xff]
        %v2378 = vld [vmem:[#allocation16 + $0x8] sm:$0xff]
        %v2379 = vld [vmem:[#allocation16 + $0x10] sm:$0xff]
        %v2380 = vld [vmem:[#allocation16 + $0x18] sm:$0xff]
        %v2381 = vld [vmem:[#allocation16 + $0x20] sm:$0xff]
        %v2382 = vld [vmem:[#allocation16 + $0x28] sm:$0xff]
        %v2383 = vld [vmem:[#allocation16 + $0x30] sm:$0xff]
        %v2384 = vld [vmem:[#allocation16 + $0x38] sm:$0xff]
        %v2385 = vld [vmem:[#allocation16 + $0x40] sm:$0xff]
        %v2386 = vld [vmem:[#allocation16 + $0x48] sm:$0xff]
        %v2387 = vld [vmem:[#allocation16 + $0x50] sm:$0xff]
        %v2388 = vld [vmem:[#allocation16 + $0x58] sm:$0xff]
        %v2389 = vld [vmem:[#allocation16 + $0x60] sm:$0xff]
        %v2390 = vld [vmem:[#allocation16 + $0x68] sm:$0xff]
        %v2391 = vld [vmem:[#allocation16 + $0x70] sm:$0xff]
        %v2392 = vld [vmem:[#allocation16 + $0x78] sm:$0xff]
        %v2393 = vld [vmem:[#allocation16 + $0x80] sm:$0xff]
        %v2394 = vld [vmem:[#allocation16 + $0x88] sm:$0xff]
        %v2395 = vld [vmem:[#allocation16 + $0x90] sm:$0xff]
        %v2396 = vld [vmem:[#allocation16 + $0x98] sm:$0xff]
        %v2397 = vld [vmem:[#allocation16 + $0xa0] sm:$0xff]
        %v2398 = vld [vmem:[#allocation16 + $0xa8] sm:$0xff]
        %v2399 = vld [vmem:[#allocation16 + $0xb0] sm:$0xff]
        %v2400 = vld [vmem:[#allocation16 + $0xb8] sm:$0xff]
        %v2401 = vld [vmem:[#allocation16 + $0xc0] sm:$0xff]
        %v2402 = vld [vmem:[#allocation16 + $0xc8] sm:$0xff]
        %v2403 = vld [vmem:[#allocation16 + $0xd0] sm:$0xff]
        %v2404 = vld [vmem:[#allocation16 + $0xd8] sm:$0xff]
        %v2405 = vld [vmem:[#allocation16 + $0xe0] sm:$0xff]
        %v2406 = vld [vmem:[#allocation16 + $0xe8] sm:$0xff]
        %v2407 = vld [vmem:[#allocation16 + $0xf0] sm:$0xff]
        %v2408 = vld [vmem:[#allocation16 + $0xf8] sm:$0xff]
        %v2409 = vld [vmem:[#allocation16 + $0x100] sm:$0xff]
        %v2410 = vld [vmem:[#allocation16 + $0x108] sm:$0xff]
        %v2411 = vld [vmem:[#allocation16 + $0x110] sm:$0xff]
        %v2412 = vld [vmem:[#allocation16 + $0x118] sm:$0xff]
        %v2413 = vld [vmem:[#allocation16 + $0x120] sm:$0xff]
        %v2414 = vld [vmem:[#allocation16 + $0x128] sm:$0xff]
        %v2415 = vld [vmem:[#allocation16 + $0x130] sm:$0xff]
        %v2416 = vld [vmem:[#allocation16 + $0x138] sm:$0xff]
        %v2417 = vld [vmem:[#allocation16 + $0x140] sm:$0xff]
        %v2418 = vld [vmem:[#allocation16 + $0x148] sm:$0xff]
        %v2419 = vld [vmem:[#allocation16 + $0x150] sm:$0xff]
        %v2420 = vld [vmem:[#allocation16 + $0x158] sm:$0xff]
        %v2421 = vld [vmem:[#allocation16 + $0x160] sm:$0xff]
        %v2422 = vld [vmem:[#allocation16 + $0x168] sm:$0xff]
        %v2423 = vld [vmem:[#allocation16 + $0x170] sm:$0xff]
        %v2424 = vld [vmem:[#allocation16 + $0x178] sm:$0xff]
        %v2425 = vld [vmem:[#allocation16 + $0x180] sm:$0xff]
        %v2426 = vld [vmem:[#allocation16 + $0x188] sm:$0xff]
        %v2427 = vld [vmem:[#allocation16 + $0x190] sm:$0xff]
        %v2428 = vld [vmem:[#allocation16 + $0x198] sm:$0xff]
        %v2429 = vld [vmem:[#allocation16 + $0x1a0] sm:$0xff]
        %v2430 = vld [vmem:[#allocation16 + $0x1a8] sm:$0xff]
        %v2431 = vld [vmem:[#allocation16 + $0x1b0] sm:$0xff]
        %v2432 = vld [vmem:[#allocation16 + $0x1b8] sm:$0xff]
        %v2433 = vld [vmem:[#allocation16 + $0x1c0] sm:$0xff]
        %v2434 = vld [vmem:[#allocation16 + $0x1c8] sm:$0xff]
        %v2435 = vld [vmem:[#allocation16 + $0x1d0] sm:$0xff]
        %v2436 = vld [vmem:[#allocation16 + $0x1d8] sm:$0xff]
        %v2437 = vld [vmem:[#allocation16 + $0x1e0] sm:$0xff]
        %v2438 = vld [vmem:[#allocation16 + $0x1e8] sm:$0xff]
        %v2439 = vld [vmem:[#allocation16 + $0x1f0] sm:$0xff]
        %v2440 = vld [vmem:[#allocation16 + $0x1f8] sm:$0xff]
        %v2441 = vld [vmem:[#allocation16 + $0x200] sm:$0xff]
        %v2442 = vld [vmem:[#allocation16 + $0x208] sm:$0xff]
        %v2443 = vld [vmem:[#allocation16 + $0x210] sm:$0xff]
        %v2444 = vld [vmem:[#allocation16 + $0x218] sm:$0xff]
        %v2445 = vld [vmem:[#allocation16 + $0x220] sm:$0xff]
        %v2446 = vld [vmem:[#allocation16 + $0x228] sm:$0xff]
        %v2447 = vld [vmem:[#allocation16 + $0x230] sm:$0xff]
        %v2448 = vld [vmem:[#allocation16 + $0x238] sm:$0xff]
        %v2449 = vld [vmem:[#allocation16 + $0x240] sm:$0xff]
        %v2450 = vld [vmem:[#allocation16 + $0x248] sm:$0xff]
        %v2451 = vld [vmem:[#allocation16 + $0x250] sm:$0xff]
        %v2452 = vld [vmem:[#allocation16 + $0x258] sm:$0xff]
        %v2453 = vld [vmem:[#allocation16 + $0x260] sm:$0xff]
        %v2454 = vld [vmem:[#allocation16 + $0x268] sm:$0xff]
        %v2455 = vld [vmem:[#allocation16 + $0x270] sm:$0xff]
        %v2456 = vld [vmem:[#allocation16 + $0x278] sm:$0xff]
        %v2457 = vld [vmem:[#allocation16 + $0x280] sm:$0xff]
        %v2458 = vld [vmem:[#allocation16 + $0x288] sm:$0xff]
        %v2459 = vld [vmem:[#allocation16 + $0x290] sm:$0xff]
        %v2460 = vld [vmem:[#allocation16 + $0x298] sm:$0xff]
        %v2461 = vld [vmem:[#allocation16 + $0x2a0] sm:$0xff]
        %v2462 = vld [vmem:[#allocation16 + $0x2a8] sm:$0xff]
        %v2463 = vld [vmem:[#allocation16 + $0x2b0] sm:$0xff]
        %v2464 = vld [vmem:[#allocation16 + $0x2b8] sm:$0xff]
        %v2465 = vld [vmem:[#allocation16 + $0x2c0] sm:$0xff]
        %v2466 = vld [vmem:[#allocation16 + $0x2c8] sm:$0xff]
        %v2467 = vld [vmem:[#allocation16 + $0x2d0] sm:$0xff]
        %v2468 = vld [vmem:[#allocation16 + $0x2d8] sm:$0xff]
        %v2469 = vld [vmem:[#allocation16 + $0x2e0] sm:$0xff]
        %v2470 = vld [vmem:[#allocation16 + $0x2e8] sm:$0xff]
        %v2471 = vld [vmem:[#allocation16 + $0x2f0] sm:$0xff]
        %v2472 = vld [vmem:[#allocation16 + $0x2f8] sm:$0xff]
        %v2473 = vld [vmem:[%s17] sm:$0x3f]
        %v2475 = vlaneseq
        %v2476 = vshrl.u32 %v2475, 7
        %v2477 = vsub.s32 0, %v2476
        %v2478 = vrot.slane %v2473, %v2477
        %v2479 = vlaneseq
        %v2480 = vshrl.u32 %v2479, 7
        %v2481 = vsub.s32 1, %v2480
        %v2482 = vrot.slane %v2473, %v2481
        %v2483 = vlaneseq
        %v2484 = vshrl.u32 %v2483, 7
        %v2485 = vsub.s32 2, %v2484
        %v2486 = vrot.slane %v2473, %v2485
        %v2487 = vlaneseq
        %v2488 = vshrl.u32 %v2487, 7
        %v2489 = vsub.s32 3, %v2488
        %v2490 = vrot.slane %v2473, %v2489
        %v2491 = vlaneseq
        %v2492 = vshrl.u32 %v2491, 7
        %v2493 = vsub.s32 4, %v2492
        %v2494 = vrot.slane %v2473, %v2493
        %v2495 = vlaneseq
        %v2496 = vshrl.u32 %v2495, 7
        %v2497 = vsub.s32 5, %v2496
        %v2498 = vrot.slane %v2473, %v2497
        %v2601 = vunpack.c.l.b16 %v2377
        %v2602 = vunpack.c.h.b16 %v2377
        %v2603 = vunpack.c.l.b16 %v2378
        %v2604 = vunpack.c.h.b16 %v2378
        %v2605 = vunpack.c.l.b16 %v2379
        %v2606 = vunpack.c.h.b16 %v2379
        %v2607 = vunpack.c.l.b16 %v2380
        %v2608 = vunpack.c.h.b16 %v2380
        %v2609 = vunpack.c.l.b16 %v2381
        %v2610 = vunpack.c.h.b16 %v2381
        %v2611 = vunpack.c.l.b16 %v2382
        %v2612 = vunpack.c.h.b16 %v2382
        %v2613 = vunpack.c.l.b16 %v2383
        %v2614 = vunpack.c.h.b16 %v2383
        %v2615 = vunpack.c.l.b16 %v2384
        %v2616 = vunpack.c.h.b16 %v2384
        %v2617 = vunpack.c.l.b16 %v2385
        %v2618 = vunpack.c.h.b16 %v2385
        %v2619 = vunpack.c.l.b16 %v2386
        %v2620 = vunpack.c.h.b16 %v2386
        %v2621 = vunpack.c.l.b16 %v2387
        %v2622 = vunpack.c.h.b16 %v2387
        %v2623 = vunpack.c.l.b16 %v2388
        %v2624 = vunpack.c.h.b16 %v2388
        %v2625 = vunpack.c.l.b16 %v2389
        %v2626 = vunpack.c.h.b16 %v2389
        %v2627 = vunpack.c.l.b16 %v2390
        %v2628 = vunpack.c.h.b16 %v2390
        %v2629 = vunpack.c.l.b16 %v2391
        %v2630 = vunpack.c.h.b16 %v2391
        %v2631 = vunpack.c.l.b16 %v2392
        %v2632 = vunpack.c.h.b16 %v2392
        %v2633 = vunpack.c.l.b16 %v2393
        %v2634 = vunpack.c.h.b16 %v2393
        %v2635 = vunpack.c.l.b16 %v2394
        %v2636 = vunpack.c.h.b16 %v2394
        %v2637 = vunpack.c.l.b16 %v2395
        %v2638 = vunpack.c.h.b16 %v2395
        %v2639 = vunpack.c.l.b16 %v2396
        %v2640 = vunpack.c.h.b16 %v2396
        %v2641 = vunpack.c.l.b16 %v2397
        %v2642 = vunpack.c.h.b16 %v2397
        %v2643 = vunpack.c.l.b16 %v2398
        %v2644 = vunpack.c.h.b16 %v2398
        %v2645 = vunpack.c.l.b16 %v2399
        %v2646 = vunpack.c.h.b16 %v2399
        %v2647 = vunpack.c.l.b16 %v2400
        %v2648 = vunpack.c.h.b16 %v2400
        %v2649 = vunpack.c.l.b16 %v2401
        %v2650 = vunpack.c.h.b16 %v2401
        %v2651 = vunpack.c.l.b16 %v2402
        %v2652 = vunpack.c.h.b16 %v2402
        %v2653 = vunpack.c.l.b16 %v2403
        %v2654 = vunpack.c.h.b16 %v2403
        %v2655 = vunpack.c.l.b16 %v2404
        %v2656 = vunpack.c.h.b16 %v2404
        %v2657 = vunpack.c.l.b16 %v2405
        %v2658 = vunpack.c.h.b16 %v2405
        %v2659 = vunpack.c.l.b16 %v2406
        %v2660 = vunpack.c.h.b16 %v2406
        %v2661 = vunpack.c.l.b16 %v2407
        %v2662 = vunpack.c.h.b16 %v2407
        %v2663 = vunpack.c.l.b16 %v2408
        %v2664 = vunpack.c.h.b16 %v2408
        %v2665 = vunpack.c.l.b16 %v2409
        %v2666 = vunpack.c.h.b16 %v2409
        %v2667 = vunpack.c.l.b16 %v2410
        %v2668 = vunpack.c.h.b16 %v2410
        %v2669 = vunpack.c.l.b16 %v2411
        %v2670 = vunpack.c.h.b16 %v2411
        %v2671 = vunpack.c.l.b16 %v2412
        %v2672 = vunpack.c.h.b16 %v2412
        %v2673 = vunpack.c.l.b16 %v2413
        %v2674 = vunpack.c.h.b16 %v2413
        %v2675 = vunpack.c.l.b16 %v2414
        %v2676 = vunpack.c.h.b16 %v2414
        %v2677 = vunpack.c.l.b16 %v2415
        %v2678 = vunpack.c.h.b16 %v2415
        %v2679 = vunpack.c.l.b16 %v2416
        %v2680 = vunpack.c.h.b16 %v2416
        %v2681 = vunpack.c.l.b16 %v2417
        %v2682 = vunpack.c.h.b16 %v2417
        %v2683 = vunpack.c.l.b16 %v2418
        %v2684 = vunpack.c.h.b16 %v2418
        %v2685 = vunpack.c.l.b16 %v2419
        %v2686 = vunpack.c.h.b16 %v2419
        %v2687 = vunpack.c.l.b16 %v2420
        %v2688 = vunpack.c.h.b16 %v2420
        %v2689 = vunpack.c.l.b16 %v2421
        %v2690 = vunpack.c.h.b16 %v2421
        %v2691 = vunpack.c.l.b16 %v2422
        %v2692 = vunpack.c.h.b16 %v2422
        %v2693 = vunpack.c.l.b16 %v2423
        %v2694 = vunpack.c.h.b16 %v2423
        %v2695 = vunpack.c.l.b16 %v2424
        %v2696 = vunpack.c.h.b16 %v2424
        %v2697 = vunpack.c.l.b16 %v2425
        %v2698 = vunpack.c.h.b16 %v2425
        %v2699 = vunpack.c.l.b16 %v2426
        %v2700 = vunpack.c.h.b16 %v2426
        %v2701 = vunpack.c.l.b16 %v2427
        %v2702 = vunpack.c.h.b16 %v2427
        %v2703 = vunpack.c.l.b16 %v2428
        %v2704 = vunpack.c.h.b16 %v2428
        %v2705 = vunpack.c.l.b16 %v2429
        %v2706 = vunpack.c.h.b16 %v2429
        %v2707 = vunpack.c.l.b16 %v2430
        %v2708 = vunpack.c.h.b16 %v2430
        %v2709 = vunpack.c.l.b16 %v2431
        %v2710 = vunpack.c.h.b16 %v2431
        %v2711 = vunpack.c.l.b16 %v2432
        %v2712 = vunpack.c.h.b16 %v2432
        %v2713 = vunpack.c.l.b16 %v2433
        %v2714 = vunpack.c.h.b16 %v2433
        %v2715 = vunpack.c.l.b16 %v2434
        %v2716 = vunpack.c.h.b16 %v2434
        %v2717 = vunpack.c.l.b16 %v2435
        %v2718 = vunpack.c.h.b16 %v2435
        %v2719 = vunpack.c.l.b16 %v2436
        %v2720 = vunpack.c.h.b16 %v2436
        %v2721 = vunpack.c.l.b16 %v2437
        %v2722 = vunpack.c.h.b16 %v2437
        %v2723 = vunpack.c.l.b16 %v2438
        %v2724 = vunpack.c.h.b16 %v2438
        %v2725 = vunpack.c.l.b16 %v2439
        %v2726 = vunpack.c.h.b16 %v2439
        %v2727 = vunpack.c.l.b16 %v2440
        %v2728 = vunpack.c.h.b16 %v2440
        %v2729 = vunpack.c.l.b16 %v2441
        %v2730 = vunpack.c.h.b16 %v2441
        %v2731 = vunpack.c.l.b16 %v2442
        %v2732 = vunpack.c.h.b16 %v2442
        %v2733 = vunpack.c.l.b16 %v2443
        %v2734 = vunpack.c.h.b16 %v2443
        %v2735 = vunpack.c.l.b16 %v2444
        %v2736 = vunpack.c.h.b16 %v2444
        %v2737 = vunpack.c.l.b16 %v2445
        %v2738 = vunpack.c.h.b16 %v2445
        %v2739 = vunpack.c.l.b16 %v2446
        %v2740 = vunpack.c.h.b16 %v2446
        %v2741 = vunpack.c.l.b16 %v2447
        %v2742 = vunpack.c.h.b16 %v2447
        %v2743 = vunpack.c.l.b16 %v2448
        %v2744 = vunpack.c.h.b16 %v2448
        %v2745 = vunpack.c.l.b16 %v2449
        %v2746 = vunpack.c.h.b16 %v2449
        %v2747 = vunpack.c.l.b16 %v2450
        %v2748 = vunpack.c.h.b16 %v2450
        %v2749 = vunpack.c.l.b16 %v2451
        %v2750 = vunpack.c.h.b16 %v2451
        %v2751 = vunpack.c.l.b16 %v2452
        %v2752 = vunpack.c.h.b16 %v2452
        %v2753 = vunpack.c.l.b16 %v2453
        %v2754 = vunpack.c.h.b16 %v2453
        %v2755 = vunpack.c.l.b16 %v2454
        %v2756 = vunpack.c.h.b16 %v2454
        %v2757 = vunpack.c.l.b16 %v2455
        %v2758 = vunpack.c.h.b16 %v2455
        %v2759 = vunpack.c.l.b16 %v2456
        %v2760 = vunpack.c.h.b16 %v2456
        %v2761 = vunpack.c.l.b16 %v2457
        %v2762 = vunpack.c.h.b16 %v2457
        %v2763 = vunpack.c.l.b16 %v2458
        %v2764 = vunpack.c.h.b16 %v2458
        %v2765 = vunpack.c.l.b16 %v2459
        %v2766 = vunpack.c.h.b16 %v2459
        %v2767 = vunpack.c.l.b16 %v2460
        %v2768 = vunpack.c.h.b16 %v2460
        %v2769 = vunpack.c.l.b16 %v2461
        %v2770 = vunpack.c.h.b16 %v2461
        %v2771 = vunpack.c.l.b16 %v2462
        %v2772 = vunpack.c.h.b16 %v2462
        %v2773 = vunpack.c.l.b16 %v2463
        %v2774 = vunpack.c.h.b16 %v2463
        %v2775 = vunpack.c.l.b16 %v2464
        %v2776 = vunpack.c.h.b16 %v2464
        %v2777 = vunpack.c.l.b16 %v2465
        %v2778 = vunpack.c.h.b16 %v2465
        %v2779 = vunpack.c.l.b16 %v2466
        %v2780 = vunpack.c.h.b16 %v2466
        %v2781 = vunpack.c.l.b16 %v2467
        %v2782 = vunpack.c.h.b16 %v2467
        %v2783 = vunpack.c.l.b16 %v2468
        %v2784 = vunpack.c.h.b16 %v2468
        %v2785 = vunpack.c.l.b16 %v2469
        %v2786 = vunpack.c.h.b16 %v2469
        %v2787 = vunpack.c.l.b16 %v2470
        %v2788 = vunpack.c.h.b16 %v2470
        %v2789 = vunpack.c.l.b16 %v2471
        %v2790 = vunpack.c.h.b16 %v2471
        %v2791 = vunpack.c.l.b16 %v2472
        %v2792 = vunpack.c.h.b16 %v2472
        %v2793 = vpack.c.b16 %v2607, %v2601
        %v2794 = vpack.c.b16 %v2608, %v2602
        %v2795 = vpack.c.b16 %v2609, %v2603
        %v2796 = vpack.c.b16 %v2610, %v2604
        %v2797 = vpack.c.b16 %v2611, %v2605
        %v2798 = vpack.c.b16 %v2612, %v2606
        %v2799 = vpack.c.b16 %v2619, %v2613
        %v2800 = vpack.c.b16 %v2620, %v2614
        %v2801 = vpack.c.b16 %v2621, %v2615
        %v2802 = vpack.c.b16 %v2622, %v2616
        %v2803 = vpack.c.b16 %v2623, %v2617
        %v2804 = vpack.c.b16 %v2624, %v2618
        %v2805 = vpack.c.b16 %v2631, %v2625
        %v2806 = vpack.c.b16 %v2632, %v2626
        %v2807 = vpack.c.b16 %v2633, %v2627
        %v2808 = vpack.c.b16 %v2634, %v2628
        %v2809 = vpack.c.b16 %v2635, %v2629
        %v2810 = vpack.c.b16 %v2636, %v2630
        %v2811 = vpack.c.b16 %v2643, %v2637
        %v2812 = vpack.c.b16 %v2644, %v2638
        %v2813 = vpack.c.b16 %v2645, %v2639
        %v2814 = vpack.c.b16 %v2646, %v2640
        %v2815 = vpack.c.b16 %v2647, %v2641
        %v2816 = vpack.c.b16 %v2648, %v2642
        %v2817 = vpack.c.b16 %v2655, %v2649
        %v2818 = vpack.c.b16 %v2656, %v2650
        %v2819 = vpack.c.b16 %v2657, %v2651
        %v2820 = vpack.c.b16 %v2658, %v2652
        %v2821 = vpack.c.b16 %v2659, %v2653
        %v2822 = vpack.c.b16 %v2660, %v2654
        %v2823 = vpack.c.b16 %v2667, %v2661
        %v2824 = vpack.c.b16 %v2668, %v2662
        %v2825 = vpack.c.b16 %v2669, %v2663
        %v2826 = vpack.c.b16 %v2670, %v2664
        %v2827 = vpack.c.b16 %v2671, %v2665
        %v2828 = vpack.c.b16 %v2672, %v2666
        %v2829 = vpack.c.b16 %v2679, %v2673
        %v2830 = vpack.c.b16 %v2680, %v2674
        %v2831 = vpack.c.b16 %v2681, %v2675
        %v2832 = vpack.c.b16 %v2682, %v2676
        %v2833 = vpack.c.b16 %v2683, %v2677
        %v2834 = vpack.c.b16 %v2684, %v2678
        %v2835 = vpack.c.b16 %v2691, %v2685
        %v2836 = vpack.c.b16 %v2692, %v2686
        %v2837 = vpack.c.b16 %v2693, %v2687
        %v2838 = vpack.c.b16 %v2694, %v2688
        %v2839 = vpack.c.b16 %v2695, %v2689
        %v2840 = vpack.c.b16 %v2696, %v2690
        %v2841 = vpack.c.b16 %v2703, %v2697
        %v2842 = vpack.c.b16 %v2704, %v2698
        %v2843 = vpack.c.b16 %v2705, %v2699
        %v2844 = vpack.c.b16 %v2706, %v2700
        %v2845 = vpack.c.b16 %v2707, %v2701
        %v2846 = vpack.c.b16 %v2708, %v2702
        %v2847 = vpack.c.b16 %v2715, %v2709
        %v2848 = vpack.c.b16 %v2716, %v2710
        %v2849 = vpack.c.b16 %v2717, %v2711
        %v2850 = vpack.c.b16 %v2718, %v2712
        %v2851 = vpack.c.b16 %v2719, %v2713
        %v2852 = vpack.c.b16 %v2720, %v2714
        %v2853 = vpack.c.b16 %v2727, %v2721
        %v2854 = vpack.c.b16 %v2728, %v2722
        %v2855 = vpack.c.b16 %v2729, %v2723
        %v2856 = vpack.c.b16 %v2730, %v2724
        %v2857 = vpack.c.b16 %v2731, %v2725
        %v2858 = vpack.c.b16 %v2732, %v2726
        %v2859 = vpack.c.b16 %v2739, %v2733
        %v2860 = vpack.c.b16 %v2740, %v2734
        %v2861 = vpack.c.b16 %v2741, %v2735
        %v2862 = vpack.c.b16 %v2742, %v2736
        %v2863 = vpack.c.b16 %v2743, %v2737
        %v2864 = vpack.c.b16 %v2744, %v2738
        %v2865 = vpack.c.b16 %v2751, %v2745
        %v2866 = vpack.c.b16 %v2752, %v2746
        %v2867 = vpack.c.b16 %v2753, %v2747
        %v2868 = vpack.c.b16 %v2754, %v2748
        %v2869 = vpack.c.b16 %v2755, %v2749
        %v2870 = vpack.c.b16 %v2756, %v2750
        %v2871 = vpack.c.b16 %v2763, %v2757
        %v2872 = vpack.c.b16 %v2764, %v2758
        %v2873 = vpack.c.b16 %v2765, %v2759
        %v2874 = vpack.c.b16 %v2766, %v2760
        %v2875 = vpack.c.b16 %v2767, %v2761
        %v2876 = vpack.c.b16 %v2768, %v2762
        %v2877 = vpack.c.b16 %v2775, %v2769
        %v2878 = vpack.c.b16 %v2776, %v2770
        %v2879 = vpack.c.b16 %v2777, %v2771
        %v2880 = vpack.c.b16 %v2778, %v2772
        %v2881 = vpack.c.b16 %v2779, %v2773
        %v2882 = vpack.c.b16 %v2780, %v2774
        %v2883 = vpack.c.b16 %v2787, %v2781
        %v2884 = vpack.c.b16 %v2788, %v2782
        %v2885 = vpack.c.b16 %v2789, %v2783
        %v2886 = vpack.c.b16 %v2790, %v2784
        %v2887 = vpack.c.b16 %v2791, %v2785
        %v2888 = vpack.c.b16 %v2792, %v2786
        %2985 = vmatprep.subr.bf16.mxu0 %v2794
        %2986 = vmatpush1.bf16.msra.mxu0 %v2793
        %2987 = vmatprep.subr.bf16.mxu0 %v2800
        %2988 = vmatpush1.bf16.msra.mxu0 %v2799
        %2989 = vmatprep.subr.bf16.mxu0 %v2806
        %2990 = vmatpush1.bf16.msra.mxu0 %v2805
        %2991 = vmatprep.subr.bf16.mxu0 %v2812
        %2992 = vmatpush1.bf16.msra.mxu0 %v2811
        %2993 = vmatprep.subr.bf16.mxu0 %v2818
        %2994 = vmatpush1.bf16.msra.mxu0 %v2817
        %2995 = vmatprep.subr.bf16.mxu0 %v2824
        %2996 = vmatpush1.bf16.msra.mxu0 %v2823
        %2997 = vmatprep.subr.bf16.mxu0 %v2830
        %2998 = vmatpush1.bf16.msra.mxu0 %v2829
        %2999 = vmatprep.subr.bf16.mxu0 %v2836
        %3000 = vmatpush1.bf16.msra.mxu0 %v2835
        %3001 = vmatprep.subr.bf16.mxu0 %v2842
        %3002 = vmatpush1.bf16.msra.mxu0 %v2841
        %3003 = vmatprep.subr.bf16.mxu0 %v2848
        %3004 = vmatpush1.bf16.msra.mxu0 %v2847
        %3005 = vmatprep.subr.bf16.mxu0 %v2854
        %3006 = vmatpush1.bf16.msra.mxu0 %v2853
        %3007 = vmatprep.subr.bf16.mxu0 %v2860
        %3008 = vmatpush1.bf16.msra.mxu0 %v2859
        %3009 = vmatprep.subr.bf16.mxu0 %v2866
        %3010 = vmatpush1.bf16.msra.mxu0 %v2865
        %3011 = vmatprep.subr.bf16.mxu0 %v2872
        %3012 = vmatpush1.bf16.msra.mxu0 %v2871
        %3013 = vmatprep.subr.bf16.mxu0 %v2878
        %3014 = vmatpush1.bf16.msra.mxu0 %v2877
        %3015 = vmatprep.subr.bf16.mxu0 %v2884
        %3016 = vmatpush1.bf16.msra.mxu0 %v2883
        %3017 = vmatprep.mubr.bf16.mxu0 0
        %3018 = vmatmul.mubr.bf16.gmra.mrb[0].mxu0 0
        %v3019 = vpop.f32.mrb[0].mxu0
        %v3020 = vadd.f32 %v2478, %v3019
        %v3021 = vpop.f32.mrb[0].mxu0
        %v3022 = vadd.f32 %v2482, %v3021
        %v3023 = vpop.f32.mrb[0].mxu0
        %v3024 = vpop.f32.mrb[0].mxu0
        %3025 = vdwg.mxu0
        %3026 = vmatprep.subr.bf16.mxu0 %v2796
        %3027 = vmatpush1.bf16.msra.mxu0 %v2795
        %3028 = vmatprep.subr.bf16.mxu0 %v2802
        %3029 = vmatpush1.bf16.msra.mxu0 %v2801
        %3030 = vmatprep.subr.bf16.mxu0 %v2808
        %3031 = vmatpush1.bf16.msra.mxu0 %v2807
        %3032 = vmatprep.subr.bf16.mxu0 %v2814
        %3033 = vmatpush1.bf16.msra.mxu0 %v2813
        %3034 = vmatprep.subr.bf16.mxu0 %v2820
        %3035 = vmatpush1.bf16.msra.mxu0 %v2819
        %3036 = vmatprep.subr.bf16.mxu0 %v2826
        %3037 = vmatpush1.bf16.msra.mxu0 %v2825
        %3038 = vmatprep.subr.bf16.mxu0 %v2832
        %3039 = vmatpush1.bf16.msra.mxu0 %v2831
        %3040 = vmatprep.subr.bf16.mxu0 %v2838
        %3041 = vmatpush1.bf16.msra.mxu0 %v2837
        %3042 = vmatprep.subr.bf16.mxu0 %v2844
        %3043 = vmatpush1.bf16.msra.mxu0 %v2843
        %3044 = vmatprep.subr.bf16.mxu0 %v2850
        %3045 = vmatpush1.bf16.msra.mxu0 %v2849
        %3046 = vmatprep.subr.bf16.mxu0 %v2856
        %3047 = vmatpush1.bf16.msra.mxu0 %v2855
        %3048 = vmatprep.subr.bf16.mxu0 %v2862
        %3049 = vmatpush1.bf16.msra.mxu0 %v2861
        %3050 = vmatprep.subr.bf16.mxu0 %v2868
        %3051 = vmatpush1.bf16.msra.mxu0 %v2867
        %3052 = vmatprep.subr.bf16.mxu0 %v2874
        %3053 = vmatpush1.bf16.msra.mxu0 %v2873
        %3054 = vmatprep.subr.bf16.mxu0 %v2880
        %3055 = vmatpush1.bf16.msra.mxu0 %v2879
        %3056 = vmatprep.subr.bf16.mxu0 %v2886
        %3057 = vmatpush1.bf16.msra.mxu0 %v2885
        %3058 = vmatprep.mubr.bf16.mxu0 0
        %3059 = vmatmul.mubr.bf16.gmra.mrb[0].mxu0 0
        %v3060 = vpop.f32.mrb[0].mxu0
        %v3061 = vadd.f32 %v2486, %v3060
        %v3062 = vpop.f32.mrb[0].mxu0
        %v3063 = vadd.f32 %v2490, %v3062
        %v3064 = vpop.f32.mrb[0].mxu0
        %v3065 = vpop.f32.mrb[0].mxu0
        %3066 = vdwg.mxu0
        %3067 = vmatprep.subr.bf16.mxu0 %v2798
        %3068 = vmatpush1.bf16.msra.mxu0 %v2797
        %3069 = vmatprep.subr.bf16.mxu0 %v2804
        %3070 = vmatpush1.bf16.msra.mxu0 %v2803
        %3071 = vmatprep.subr.bf16.mxu0 %v2810
        %3072 = vmatpush1.bf16.msra.mxu0 %v2809
        %3073 = vmatprep.subr.bf16.mxu0 %v2816
        %3074 = vmatpush1.bf16.msra.mxu0 %v2815
        %3075 = vmatprep.subr.bf16.mxu0 %v2822
        %3076 = vmatpush1.bf16.msra.mxu0 %v2821
        %3077 = vmatprep.subr.bf16.mxu0 %v2828
        %3078 = vmatpush1.bf16.msra.mxu0 %v2827
        %3079 = vmatprep.subr.bf16.mxu0 %v2834
        %3080 = vmatpush1.bf16.msra.mxu0 %v2833
        %3081 = vmatprep.subr.bf16.mxu0 %v2840
        %3082 = vmatpush1.bf16.msra.mxu0 %v2839
        %3083 = vmatprep.subr.bf16.mxu0 %v2846
        %3084 = vmatpush1.bf16.msra.mxu0 %v2845
        %3085 = vmatprep.subr.bf16.mxu0 %v2852
        %3086 = vmatpush1.bf16.msra.mxu0 %v2851
        %3087 = vmatprep.subr.bf16.mxu0 %v2858
        %3088 = vmatpush1.bf16.msra.mxu0 %v2857
        %3089 = vmatprep.subr.bf16.mxu0 %v2864
        %3090 = vmatpush1.bf16.msra.mxu0 %v2863
        %3091 = vmatprep.subr.bf16.mxu0 %v2870
        %3092 = vmatpush1.bf16.msra.mxu0 %v2869
        %3093 = vmatprep.subr.bf16.mxu0 %v2876
        %3094 = vmatpush1.bf16.msra.mxu0 %v2875
        %3095 = vmatprep.subr.bf16.mxu0 %v2882
        %3096 = vmatpush1.bf16.msra.mxu0 %v2881
        %3097 = vmatprep.subr.bf16.mxu0 %v2888
        %3098 = vmatpush1.bf16.msra.mxu0 %v2887
        %3099 = vmatprep.mubr.bf16.mxu0 0
        %3100 = vmatmul.mubr.bf16.gmra.mrb[0].mxu0 0
        %v3101 = vpop.f32.mrb[0].mxu0
        %v3102 = vadd.f32 %v2494, %v3101
        %v3103 = vpop.f32.mrb[0].mxu0
        %v3104 = vadd.f32 %v2498, %v3103
        %v3105 = vpop.f32.mrb[0].mxu0
        %v3106 = vpop.f32.mrb[0].mxu0
        %3107 = vdwg.mxu0
        %v3108 = vadd.f32 %v1939, %v3020
        %v3109 = vxor.u32 %v3108, 2147483648
        %v3110 = vmul.f32 %v3109, 1.442695
        %v3111 = vpow.pop %v3110
        %v3112 = vadd.f32 %v3111, 1.0
        %v3113 = vrcp.pop %v3112
        %v3114 = vmul.f32 1.0, %v3113
        %v3115 = vadd.f32 %v1940, %v3022
        %v3116 = vxor.u32 %v3115, 2147483648
        %v3117 = vmul.f32 %v3116, 1.442695
        %v3118 = vpow.pop %v3117
        %v3119 = vadd.f32 %v3118, 1.0
        %v3120 = vrcp.pop %v3119
        %v3121 = vmul.f32 1.0, %v3120
        %v3122 = vmul.f32 %v3114, %v3061
        %v3123 = vadd.f32 %v1941, %v3122
        %v3124 = vtanh.pop %v3123
        %v3125 = vadd.f32 %v2374, %v3063
        %v3126 = vxor.u32 %v3125, 2147483648
        %v3127 = vmul.f32 %v3126, 1.442695
        %v3128 = vpow.pop %v3127
        %v3129 = vadd.f32 %v3128, 1.0
        %v3130 = vrcp.pop %v3129
        %v3131 = vmul.f32 1.0, %v3130
        %v3132 = vadd.f32 %v2375, %v3102
        %v3133 = vxor.u32 %v3132, 2147483648
        %v3134 = vmul.f32 %v3133, 1.442695
        %v3135 = vpow.pop %v3134
        %v3136 = vadd.f32 %v3135, 1.0
        %v3137 = vrcp.pop %v3136
        %v3138 = vmul.f32 1.0, %v3137
        %v3139 = vmul.f32 %v3131, %v3104
        %v3140 = vadd.f32 %v2376, %v3139
        %v3141 = vtanh.pop %v3140
        %v3142 = vsub.f32 1.0, %v3121
        %v3143 = vmul.f32 %v3142, %v3124
        %v3144 = vmul.f32 %v3121, 0.0
        %v3145 = vadd.f32 %v3143, %v3144
        %v3146 = vsub.f32 1.0, %v3138
        %v3147 = vmul.f32 %v3146, %v3141
        %v3148 = vmul.f32 %v3138, 0.0
        %v3149 = vadd.f32 %v3147, %v3148
        %v3150 = vpack.c.bf16 %v3145, %v3145
        %v3151 = vpack.c.bf16 %v3149, %v3149
        %3152 = vmatprep.subr.bf16.mxu0 %v2794
        %3153 = vmatpush1.bf16.msra.mxu0 %v2793
        %3154 = vmatprep.subr.bf16.mxu0 %v2800
        %3155 = vmatpush1.bf16.msra.mxu0 %v2799
        %3156 = vmatprep.subr.bf16.mxu0 %v2806
        %3157 = vmatpush1.bf16.msra.mxu0 %v2805
        %3158 = vmatprep.subr.bf16.mxu0 %v2812
        %3159 = vmatpush1.bf16.msra.mxu0 %v2811
        %3160 = vmatprep.subr.bf16.mxu0 %v2818
        %3161 = vmatpush1.bf16.msra.mxu0 %v2817
        %3162 = vmatprep.subr.bf16.mxu0 %v2824
        %3163 = vmatpush1.bf16.msra.mxu0 %v2823
        %3164 = vmatprep.subr.bf16.mxu0 %v2830
        %3165 = vmatpush1.bf16.msra.mxu0 %v2829
        %3166 = vmatprep.subr.bf16.mxu0 %v2836
        %3167 = vmatpush1.bf16.msra.mxu0 %v2835
        %3168 = vmatprep.subr.bf16.mxu0 %v2842
        %3169 = vmatpush1.bf16.msra.mxu0 %v2841
        %3170 = vmatprep.subr.bf16.mxu0 %v2848
        %3171 = vmatpush1.bf16.msra.mxu0 %v2847
        %3172 = vmatprep.subr.bf16.mxu0 %v2854
        %3173 = vmatpush1.bf16.msra.mxu0 %v2853
        %3174 = vmatprep.subr.bf16.mxu0 %v2860
        %3175 = vmatpush1.bf16.msra.mxu0 %v2859
        %3176 = vmatprep.subr.bf16.mxu0 %v2866
        %3177 = vmatpush1.bf16.msra.mxu0 %v2865
        %3178 = vmatprep.subr.bf16.mxu0 %v2872
        %3179 = vmatpush1.bf16.msra.mxu0 %v2871
        %3180 = vmatprep.subr.bf16.mxu0 %v2878
        %3181 = vmatpush1.bf16.msra.mxu0 %v2877
        %3182 = vmatprep.subr.bf16.mxu0 %v2884
        %3183 = vmatpush1.bf16.msra.mxu0 %v2883
        %3184 = vmatprep.mubr.bf16.mxu0 %v3151
        %3185 = vmatmul.mubr.bf16.gmra.mrb[0].mxu0 %v3150
        %v3186 = vpop.f32.mrb[0].mxu0
        %v3187 = vadd.f32 %v2478, %v3186
        %v3188 = vpop.f32.mrb[0].mxu0
        %v3189 = vadd.f32 %v2482, %v3188
        %v3190 = vpop.f32.mrb[0].mxu0
        %v3191 = vpop.f32.mrb[0].mxu0
        %3192 = vdwg.mxu0
        %3193 = vmatprep.subr.bf16.mxu0 %v2796
        %3194 = vmatpush1.bf16.msra.mxu0 %v2795
        %3195 = vmatprep.subr.bf16.mxu0 %v2802
        %3196 = vmatpush1.bf16.msra.mxu0 %v2801
        %3197 = vmatprep.subr.bf16.mxu0 %v2808
        %3198 = vmatpush1.bf16.msra.mxu0 %v2807
        %3199 = vmatprep.subr.bf16.mxu0 %v2814
        %3200 = vmatpush1.bf16.msra.mxu0 %v2813
        %3201 = vmatprep.subr.bf16.mxu0 %v2820
        %3202 = vmatpush1.bf16.msra.mxu0 %v2819
        %3203 = vmatprep.subr.bf16.mxu0 %v2826
        %3204 = vmatpush1.bf16.msra.mxu0 %v2825
        %3205 = vmatprep.subr.bf16.mxu0 %v2832
        %3206 = vmatpush1.bf16.msra.mxu0 %v2831
        %3207 = vmatprep.subr.bf16.mxu0 %v2838
        %3208 = vmatpush1.bf16.msra.mxu0 %v2837
        %3209 = vmatprep.subr.bf16.mxu0 %v2844
        %3210 = vmatpush1.bf16.msra.mxu0 %v2843
        %3211 = vmatprep.subr.bf16.mxu0 %v2850
        %3212 = vmatpush1.bf16.msra.mxu0 %v2849
        %3213 = vmatprep.subr.bf16.mxu0 %v2856
        %3214 = vmatpush1.bf16.msra.mxu0 %v2855
        %3215 = vmatprep.subr.bf16.mxu0 %v2862
        %3216 = vmatpush1.bf16.msra.mxu0 %v2861
        %3217 = vmatprep.subr.bf16.mxu0 %v2868
        %3218 = vmatpush1.bf16.msra.mxu0 %v2867
        %3219 = vmatprep.subr.bf16.mxu0 %v2874
        %3220 = vmatpush1.bf16.msra.mxu0 %v2873
        %3221 = vmatprep.subr.bf16.mxu0 %v2880
        %3222 = vmatpush1.bf16.msra.mxu0 %v2879
        %3223 = vmatprep.subr.bf16.mxu0 %v2886
        %3224 = vmatpush1.bf16.msra.mxu0 %v2885
        %3225 = vmatprep.mubr.bf16.mxu0 %v3151
        %3226 = vmatmul.mubr.bf16.gmra.mrb[0].mxu0 %v3150
        %v3227 = vpop.f32.mrb[0].mxu0
        %v3228 = vadd.f32 %v2486, %v3227
        %v3229 = vpop.f32.mrb[0].mxu0
        %v3230 = vadd.f32 %v2490, %v3229
        %v3231 = vpop.f32.mrb[0].mxu0
        %v3232 = vpop.f32.mrb[0].mxu0
        %3233 = vdwg.mxu0
        %3234 = vmatprep.subr.bf16.mxu0 %v2798
        %3235 = vmatpush1.bf16.msra.mxu0 %v2797
        %3236 = vmatprep.subr.bf16.mxu0 %v2804
        %3237 = vmatpush1.bf16.msra.mxu0 %v2803
        %3238 = vmatprep.subr.bf16.mxu0 %v2810
        %3239 = vmatpush1.bf16.msra.mxu0 %v2809
        %3240 = vmatprep.subr.bf16.mxu0 %v2816
        %3241 = vmatpush1.bf16.msra.mxu0 %v2815
        %3242 = vmatprep.subr.bf16.mxu0 %v2822
        %3243 = vmatpush1.bf16.msra.mxu0 %v2821
        %3244 = vmatprep.subr.bf16.mxu0 %v2828
        %3245 = vmatpush1.bf16.msra.mxu0 %v2827
        %3246 = vmatprep.subr.bf16.mxu0 %v2834
        %3247 = vmatpush1.bf16.msra.mxu0 %v2833
        %3248 = vmatprep.subr.bf16.mxu0 %v2840
        %3249 = vmatpush1.bf16.msra.mxu0 %v2839
        %3250 = vmatprep.subr.bf16.mxu0 %v2846
        %3251 = vmatpush1.bf16.msra.mxu0 %v2845
        %3252 = vmatprep.subr.bf16.mxu0 %v2852
        %3253 = vmatpush1.bf16.msra.mxu0 %v2851
        %3254 = vmatprep.subr.bf16.mxu0 %v2858
        %3255 = vmatpush1.bf16.msra.mxu0 %v2857
        %3256 = vmatprep.subr.bf16.mxu0 %v2864
        %3257 = vmatpush1.bf16.msra.mxu0 %v2863
        %3258 = vmatprep.subr.bf16.mxu0 %v2870
        %3259 = vmatpush1.bf16.msra.mxu0 %v2869
        %3260 = vmatprep.subr.bf16.mxu0 %v2876
        %3261 = vmatpush1.bf16.msra.mxu0 %v2875
        %3262 = vmatprep.subr.bf16.mxu0 %v2882
        %3263 = vmatpush1.bf16.msra.mxu0 %v2881
        %3264 = vmatprep.subr.bf16.mxu0 %v2888
        %3265 = vmatpush1.bf16.msra.mxu0 %v2887
        %3266 = vmatprep.mubr.bf16.mxu0 %v3151
        %3267 = vmatmul.mubr.bf16.gmra.mrb[0].mxu0 %v3150
        %v3268 = vpop.f32.mrb[0].mxu0
        %v3269 = vadd.f32 %v2494, %v3268
        %v3270 = vpop.f32.mrb[0].mxu0
        %v3271 = vadd.f32 %v2498, %v3270
        %v3272 = vpop.f32.mrb[0].mxu0
        %v3273 = vpop.f32.mrb[0].mxu0
        %3274 = vdwg.mxu0
        %v3275 = vadd.f32 %v1999, %v3187
        %v3276 = vxor.u32 %v3275, 2147483648
        %v3277 = vmul.f32 %v3276, 1.442695
        %v3278 = vpow.pop %v3277
        %v3279 = vadd.f32 %v3278, 1.0
        %v3280 = vrcp.pop %v3279
        %v3281 = vmul.f32 1.0, %v3280
        %v3282 = vadd.f32 %v2000, %v3189
        %v3283 = vxor.u32 %v3282, 2147483648
        %v3284 = vmul.f32 %v3283, 1.442695
        %v3285 = vpow.pop %v3284
        %v3286 = vadd.f32 %v3285, 1.0
        %v3287 = vrcp.pop %v3286
        %v3288 = vmul.f32 1.0, %v3287
        %v3289 = vmul.f32 %v3281, %v3228
        %v3290 = vadd.f32 %v2001, %v3289
        %v3291 = vtanh.pop %v3290
        %v3292 = vadd.f32 %v2308, %v3230
        %v3293 = vxor.u32 %v3292, 2147483648
        %v3294 = vmul.f32 %v3293, 1.442695
        %v3295 = vpow.pop %v3294
        %v3296 = vadd.f32 %v3295, 1.0
        %v3297 = vrcp.pop %v3296
        %v3298 = vmul.f32 1.0, %v3297
        %v3299 = vadd.f32 %v2309, %v3269
        %v3300 = vxor.u32 %v3299, 2147483648
        %v3301 = vmul.f32 %v3300, 1.442695
        %v3302 = vpow.pop %v3301
        %v3303 = vadd.f32 %v3302, 1.0
        %v3304 = vrcp.pop %v3303
        %v3305 = vmul.f32 1.0, %v3304
        %v3306 = vmul.f32 %v3298, %v3271
        %v3307 = vadd.f32 %v2310, %v3306
        %v3308 = vtanh.pop %v3307
        %v3309 = vsub.f32 1.0, %v3288
        %v3310 = vmul.f32 %v3309, %v3291
        %v3311 = vmul.f32 %v3288, %v3145
        %v3312 = vadd.f32 %v3310, %v3311
        %v3313 = vsub.f32 1.0, %v3305
        %v3314 = vmul.f32 %v3313, %v3308
        %v3315 = vmul.f32 %v3305, %v3149
        %v3316 = vadd.f32 %v3314, %v3315
        %v3317 = vpack.c.bf16 %v3312, %v3312
        %v3318 = vpack.c.bf16 %v3316, %v3316
        %3319 = vmatprep.subr.bf16.mxu0 %v2794
        %3320 = vmatpush1.bf16.msra.mxu0 %v2793
        %3321 = vmatprep.subr.bf16.mxu0 %v2800
        %3322 = vmatpush1.bf16.msra.mxu0 %v2799
        %3323 = vmatprep.subr.bf16.mxu0 %v2806
        %3324 = vmatpush1.bf16.msra.mxu0 %v2805
        %3325 = vmatprep.subr.bf16.mxu0 %v2812
        %3326 = vmatpush1.bf16.msra.mxu0 %v2811
        %3327 = vmatprep.subr.bf16.mxu0 %v2818
        %3328 = vmatpush1.bf16.msra.mxu0 %v2817
        %3329 = vmatprep.subr.bf16.mxu0 %v2824
        %3330 = vmatpush1.bf16.msra.mxu0 %v2823
        %3331 = vmatprep.subr.bf16.mxu0 %v2830
        %3332 = vmatpush1.bf16.msra.mxu0 %v2829
        %3333 = vmatprep.subr.bf16.mxu0 %v2836
        %3334 = vmatpush1.bf16.msra.mxu0 %v2835
        %3335 = vmatprep.subr.bf16.mxu0 %v2842
        %3336 = vmatpush1.bf16.msra.mxu0 %v2841
        %3337 = vmatprep.subr.bf16.mxu0 %v2848
        %3338 = vmatpush1.bf16.msra.mxu0 %v2847
        %3339 = vmatprep.subr.bf16.mxu0 %v2854
        %3340 = vmatpush1.bf16.msra.mxu0 %v2853
        %3341 = vmatprep.subr.bf16.mxu0 %v2860
        %3342 = vmatpush1.bf16.msra.mxu0 %v2859
        %3343 = vmatprep.subr.bf16.mxu0 %v2866
        %3344 = vmatpush1.bf16.msra.mxu0 %v2865
        %3345 = vmatprep.subr.bf16.mxu0 %v2872
        %3346 = vmatpush1.bf16.msra.mxu0 %v2871
        %3347 = vmatprep.subr.bf16.mxu0 %v2878
        %3348 = vmatpush1.bf16.msra.mxu0 %v2877
        %3349 = vmatprep.subr.bf16.mxu0 %v2884
        %3350 = vmatpush1.bf16.msra.mxu0 %v2883
        %3351 = vmatprep.mubr.bf16.mxu0 %v3318
        %3352 = vmatmul.mubr.bf16.gmra.mrb[0].mxu0 %v3317
        %v3353 = vpop.f32.mrb[0].mxu0
        %v3354 = vadd.f32 %v2478, %v3353
        %v3355 = vpop.f32.mrb[0].mxu0
        %v3356 = vadd.f32 %v2482, %v3355
        %v3357 = vpop.f32.mrb[0].mxu0
        %v3358 = vpop.f32.mrb[0].mxu0
        %3359 = vdwg.mxu0
        %3360 = vmatprep.subr.bf16.mxu0 %v2796
        %3361 = vmatpush1.bf16.msra.mxu0 %v2795
        %3362 = vmatprep.subr.bf16.mxu0 %v2802
        %3363 = vmatpush1.bf16.msra.mxu0 %v2801
        %3364 = vmatprep.subr.bf16.mxu0 %v2808
        %3365 = vmatpush1.bf16.msra.mxu0 %v2807
        %3366 = vmatprep.subr.bf16.mxu0 %v2814
        %3367 = vmatpush1.bf16.msra.mxu0 %v2813
        %3368 = vmatprep.subr.bf16.mxu0 %v2820
        %3369 = vmatpush1.bf16.msra.mxu0 %v2819
        %3370 = vmatprep.subr.bf16.mxu0 %v2826
        %3371 = vmatpush1.bf16.msra.mxu0 %v2825
        %3372 = vmatprep.subr.bf16.mxu0 %v2832
        %3373 = vmatpush1.bf16.msra.mxu0 %v2831
        %3374 = vmatprep.subr.bf16.mxu0 %v2838
        %3375 = vmatpush1.bf16.msra.mxu0 %v2837
        %3376 = vmatprep.subr.bf16.mxu0 %v2844
        %3377 = vmatpush1.bf16.msra.mxu0 %v2843
        %3378 = vmatprep.subr.bf16.mxu0 %v2850
        %3379 = vmatpush1.bf16.msra.mxu0 %v2849
        %3380 = vmatprep.subr.bf16.mxu0 %v2856
        %3381 = vmatpush1.bf16.msra.mxu0 %v2855
        %3382 = vmatprep.subr.bf16.mxu0 %v2862
        %3383 = vmatpush1.bf16.msra.mxu0 %v2861
        %3384 = vmatprep.subr.bf16.mxu0 %v2868
        %3385 = vmatpush1.bf16.msra.mxu0 %v2867
        %3386 = vmatprep.subr.bf16.mxu0 %v2874
        %3387 = vmatpush1.bf16.msra.mxu0 %v2873
        %3388 = vmatprep.subr.bf16.mxu0 %v2880
        %3389 = vmatpush1.bf16.msra.mxu0 %v2879
        %3390 = vmatprep.subr.bf16.mxu0 %v2886
        %3391 = vmatpush1.bf16.msra.mxu0 %v2885
        %3392 = vmatprep.mubr.bf16.mxu0 %v3318
        %3393 = vmatmul.mubr.bf16.gmra.mrb[0].mxu0 %v3317
        %v3394 = vpop.f32.mrb[0].mxu0
        %v3395 = vadd.f32 %v2486, %v3394
        %v3396 = vpop.f32.mrb[0].mxu0
        %v3397 = vadd.f32 %v2490, %v3396
        %v3398 = vpop.f32.mrb[0].mxu0
        %v3399 = vpop.f32.mrb[0].mxu0
        %3400 = vdwg.mxu0
        %3401 = vmatprep.subr.bf16.mxu0 %v2798
        %3402 = vmatpush1.bf16.msra.mxu0 %v2797
        %3403 = vmatprep.subr.bf16.mxu0 %v2804
        %3404 = vmatpush1.bf16.msra.mxu0 %v2803
        %3405 = vmatprep.subr.bf16.mxu0 %v2810
        %3406 = vmatpush1.bf16.msra.mxu0 %v2809
        %3407 = vmatprep.subr.bf16.mxu0 %v2816
        %3408 = vmatpush1.bf16.msra.mxu0 %v2815
        %3409 = vmatprep.subr.bf16.mxu0 %v2822
        %3410 = vmatpush1.bf16.msra.mxu0 %v2821
        %3411 = vmatprep.subr.bf16.mxu0 %v2828
        %3412 = vmatpush1.bf16.msra.mxu0 %v2827
        %3413 = vmatprep.subr.bf16.mxu0 %v2834
        %3414 = vmatpush1.bf16.msra.mxu0 %v2833
        %3415 = vmatprep.subr.bf16.mxu0 %v2840
        %3416 = vmatpush1.bf16.msra.mxu0 %v2839
        %3417 = vmatprep.subr.bf16.mxu0 %v2846
        %3418 = vmatpush1.bf16.msra.mxu0 %v2845
        %3419 = vmatprep.subr.bf16.mxu0 %v2852
        %3420 = vmatpush1.bf16.msra.mxu0 %v2851
        %3421 = vmatprep.subr.bf16.mxu0 %v2858
        %3422 = vmatpush1.bf16.msra.mxu0 %v2857
        %3423 = vmatprep.subr.bf16.mxu0 %v2864
        %3424 = vmatpush1.bf16.msra.mxu0 %v2863
        %3425 = vmatprep.subr.bf16.mxu0 %v2870
        %3426 = vmatpush1.bf16.msra.mxu0 %v2869
        %3427 = vmatprep.subr.bf16.mxu0 %v2876
        %3428 = vmatpush1.bf16.msra.mxu0 %v2875
        %3429 = vmatprep.subr.bf16.mxu0 %v2882
        %3430 = vmatpush1.bf16.msra.mxu0 %v2881
        %3431 = vmatprep.subr.bf16.mxu0 %v2888
        %3432 = vmatpush1.bf16.msra.mxu0 %v2887
        %3433 = vmatprep.mubr.bf16.mxu0 %v3318
        %3434 = vmatmul.mubr.bf16.gmra.mrb[0].mxu0 %v3317
        %v3435 = vpop.f32.mrb[0].mxu0
        %v3436 = vadd.f32 %v2494, %v3435
        %v3437 = vpop.f32.mrb[0].mxu0
        %v3438 = vadd.f32 %v2498, %v3437
        %v3439 = vpop.f32.mrb[0].mxu0
        %v3440 = vpop.f32.mrb[0].mxu0
        %3441 = vdwg.mxu0
        %v3442 = vadd.f32 %v2053, %v3354
        %v3443 = vxor.u32 %v3442, 2147483648
        %v3444 = vmul.f32 %v3443, 1.442695
        %v3445 = vpow.pop %v3444
        %v3446 = vadd.f32 %v3445, 1.0
        %v3447 = vrcp.pop %v3446
        %v3448 = vmul.f32 1.0, %v3447
        %v3449 = vadd.f32 %v2054, %v3356
        %v3450 = vxor.u32 %v3449, 2147483648
        %v3451 = vmul.f32 %v3450, 1.442695
        %v3452 = vpow.pop %v3451
        %v3453 = vadd.f32 %v3452, 1.0
        %v3454 = vrcp.pop %v3453
        %v3455 = vmul.f32 1.0, %v3454
        %v3456 = vmul.f32 %v3448, %v3395
        %v3457 = vadd.f32 %v2055, %v3456
        %v3458 = vtanh.pop %v3457
        %v3459 = vadd.f32 %v2242, %v3397
        %v3460 = vxor.u32 %v3459, 2147483648
        %v3461 = vmul.f32 %v3460, 1.442695
        %v3462 = vpow.pop %v3461
        %v3463 = vadd.f32 %v3462, 1.0
        %v3464 = vrcp.pop %v3463
        %v3465 = vmul.f32 1.0, %v3464
        %v3466 = vadd.f32 %v2243, %v3436
        %v3467 = vxor.u32 %v3466, 2147483648
        %v3468 = vmul.f32 %v3467, 1.442695
        %v3469 = vpow.pop %v3468
        %v3470 = vadd.f32 %v3469, 1.0
        %v3471 = vrcp.pop %v3470
        %v3472 = vmul.f32 1.0, %v3471
        %v3473 = vmul.f32 %v3465, %v3438
        %v3474 = vadd.f32 %v2244, %v3473
        %v3475 = vtanh.pop %v3474
        %v3476 = vsub.f32 1.0, %v3455
        %v3477 = vmul.f32 %v3476, %v3458
        %v3478 = vmul.f32 %v3455, %v3312
        %v3479 = vadd.f32 %v3477, %v3478
        %v3480 = vsub.f32 1.0, %v3472
        %v3481 = vmul.f32 %v3480, %v3475
        %v3482 = vmul.f32 %v3472, %v3316
        %v3483 = vadd.f32 %v3481, %v3482
        %v3484 = vpack.c.bf16 %v3479, %v3479
        %v3485 = vpack.c.bf16 %v3483, %v3483
        %3486 = vmatprep.subr.bf16.mxu0 %v2794
        %3487 = vmatpush1.bf16.msra.mxu0 %v2793
        %3488 = vmatprep.subr.bf16.mxu0 %v2800
        %3489 = vmatpush1.bf16.msra.mxu0 %v2799
        %3490 = vmatprep.subr.bf16.mxu0 %v2806
        %3491 = vmatpush1.bf16.msra.mxu0 %v2805
        %3492 = vmatprep.subr.bf16.mxu0 %v2812
        %3493 = vmatpush1.bf16.msra.mxu0 %v2811
        %3494 = vmatprep.subr.bf16.mxu0 %v2818
        %3495 = vmatpush1.bf16.msra.mxu0 %v2817
        %3496 = vmatprep.subr.bf16.mxu0 %v2824
        %3497 = vmatpush1.bf16.msra.mxu0 %v2823
        %3498 = vmatprep.subr.bf16.mxu0 %v2830
        %3499 = vmatpush1.bf16.msra.mxu0 %v2829
        %3500 = vmatprep.subr.bf16.mxu0 %v2836
        %3501 = vmatpush1.bf16.msra.mxu0 %v2835
        %3502 = vmatprep.subr.bf16.mxu0 %v2842
        %3503 = vmatpush1.bf16.msra.mxu0 %v2841
        %3504 = vmatprep.subr.bf16.mxu0 %v2848
        %3505 = vmatpush1.bf16.msra.mxu0 %v2847
        %3506 = vmatprep.subr.bf16.mxu0 %v2854
        %3507 = vmatpush1.bf16.msra.mxu0 %v2853
        %3508 = vmatprep.subr.bf16.mxu0 %v2860
        %3509 = vmatpush1.bf16.msra.mxu0 %v2859
        %3510 = vmatprep.subr.bf16.mxu0 %v2866
        %3511 = vmatpush1.bf16.msra.mxu0 %v2865
        %3512 = vmatprep.subr.bf16.mxu0 %v2872
        %3513 = vmatpush1.bf16.msra.mxu0 %v2871
        %3514 = vmatprep.subr.bf16.mxu0 %v2878
        %3515 = vmatpush1.bf16.msra.mxu0 %v2877
        %3516 = vmatprep.subr.bf16.mxu0 %v2884
        %3517 = vmatpush1.bf16.msra.mxu0 %v2883
        %3518 = vmatprep.mubr.bf16.mxu0 %v3485
        %3519 = vmatmul.mubr.bf16.gmra.mrb[0].mxu0 %v3484
        %v3520 = vpop.f32.mrb[0].mxu0
        %v3521 = vadd.f32 %v2478, %v3520
        %v3522 = vpop.f32.mrb[0].mxu0
        %v3523 = vadd.f32 %v2482, %v3522
        %v3524 = vpop.f32.mrb[0].mxu0
        %v3525 = vpop.f32.mrb[0].mxu0
        %3526 = vdwg.mxu0
        %3527 = vmatprep.subr.bf16.mxu0 %v2796
        %3528 = vmatpush1.bf16.msra.mxu0 %v2795
        %3529 = vmatprep.subr.bf16.mxu0 %v2802
        %3530 = vmatpush1.bf16.msra.mxu0 %v2801
        %3531 = vmatprep.subr.bf16.mxu0 %v2808
        %3532 = vmatpush1.bf16.msra.mxu0 %v2807
        %3533 = vmatprep.subr.bf16.mxu0 %v2814
        %3534 = vmatpush1.bf16.msra.mxu0 %v2813
        %3535 = vmatprep.subr.bf16.mxu0 %v2820
        %3536 = vmatpush1.bf16.msra.mxu0 %v2819
        %3537 = vmatprep.subr.bf16.mxu0 %v2826
        %3538 = vmatpush1.bf16.msra.mxu0 %v2825
        %3539 = vmatprep.subr.bf16.mxu0 %v2832
        %3540 = vmatpush1.bf16.msra.mxu0 %v2831
        %3541 = vmatprep.subr.bf16.mxu0 %v2838
        %3542 = vmatpush1.bf16.msra.mxu0 %v2837
        %3543 = vmatprep.subr.bf16.mxu0 %v2844
        %3544 = vmatpush1.bf16.msra.mxu0 %v2843
        %3545 = vmatprep.subr.bf16.mxu0 %v2850
        %3546 = vmatpush1.bf16.msra.mxu0 %v2849
        %3547 = vmatprep.subr.bf16.mxu0 %v2856
        %3548 = vmatpush1.bf16.msra.mxu0 %v2855
        %3549 = vmatprep.subr.bf16.mxu0 %v2862
        %3550 = vmatpush1.bf16.msra.mxu0 %v2861
        %3551 = vmatprep.subr.bf16.mxu0 %v2868
        %3552 = vmatpush1.bf16.msra.mxu0 %v2867
        %3553 = vmatprep.subr.bf16.mxu0 %v2874
        %3554 = vmatpush1.bf16.msra.mxu0 %v2873
        %3555 = vmatprep.subr.bf16.mxu0 %v2880
        %3556 = vmatpush1.bf16.msra.mxu0 %v2879
        %3557 = vmatprep.subr.bf16.mxu0 %v2886
        %3558 = vmatpush1.bf16.msra.mxu0 %v2885
        %3559 = vmatprep.mubr.bf16.mxu0 %v3485
        %3560 = vmatmul.mubr.bf16.gmra.mrb[0].mxu0 %v3484
        %v3561 = vpop.f32.mrb[0].mxu0
        %v3562 = vadd.f32 %v2486, %v3561
        %v3563 = vpop.f32.mrb[0].mxu0
        %v3564 = vadd.f32 %v2490, %v3563
        %v3565 = vpop.f32.mrb[0].mxu0
        %v3566 = vpop.f32.mrb[0].mxu0
        %3567 = vdwg.mxu0
        %3568 = vmatprep.subr.bf16.mxu0 %v2798
        %3569 = vmatpush1.bf16.msra.mxu0 %v2797
        %3570 = vmatprep.subr.bf16.mxu0 %v2804
        %3571 = vmatpush1.bf16.msra.mxu0 %v2803
        %3572 = vmatprep.subr.bf16.mxu0 %v2810
        %3573 = vmatpush1.bf16.msra.mxu0 %v2809
        %3574 = vmatprep.subr.bf16.mxu0 %v2816
        %3575 = vmatpush1.bf16.msra.mxu0 %v2815
        %3576 = vmatprep.subr.bf16.mxu0 %v2822
        %3577 = vmatpush1.bf16.msra.mxu0 %v2821
        %3578 = vmatprep.subr.bf16.mxu0 %v2828
        %3579 = vmatpush1.bf16.msra.mxu0 %v2827
        %3580 = vmatprep.subr.bf16.mxu0 %v2834
        %3581 = vmatpush1.bf16.msra.mxu0 %v2833
        %3582 = vmatprep.subr.bf16.mxu0 %v2840
        %3583 = vmatpush1.bf16.msra.mxu0 %v2839
        %3584 = vmatprep.subr.bf16.mxu0 %v2846
        %3585 = vmatpush1.bf16.msra.mxu0 %v2845
        %3586 = vmatprep.subr.bf16.mxu0 %v2852
        %3587 = vmatpush1.bf16.msra.mxu0 %v2851
        %3588 = vmatprep.subr.bf16.mxu0 %v2858
        %3589 = vmatpush1.bf16.msra.mxu0 %v2857
        %3590 = vmatprep.subr.bf16.mxu0 %v2864
        %3591 = vmatpush1.bf16.msra.mxu0 %v2863
        %3592 = vmatprep.subr.bf16.mxu0 %v2870
        %3593 = vmatpush1.bf16.msra.mxu0 %v2869
        %3594 = vmatprep.subr.bf16.mxu0 %v2876
        %3595 = vmatpush1.bf16.msra.mxu0 %v2875
        %3596 = vmatprep.subr.bf16.mxu0 %v2882
        %3597 = vmatpush1.bf16.msra.mxu0 %v2881
        %3598 = vmatprep.subr.bf16.mxu0 %v2888
        %3599 = vmatpush1.bf16.msra.mxu0 %v2887
        %3600 = vmatprep.mubr.bf16.mxu0 %v3485
        %3601 = vmatmul.mubr.bf16.gmra.mrb[0].mxu0 %v3484
        %v3602 = vpop.f32.mrb[0].mxu0
        %v3603 = vadd.f32 %v2494, %v3602
        %v3604 = vpop.f32.mrb[0].mxu0
        %v3605 = vadd.f32 %v2498, %v3604
        %v3606 = vpop.f32.mrb[0].mxu0
        %v3607 = vpop.f32.mrb[0].mxu0
        %3608 = vdwg.mxu0
        %v3609 = vadd.f32 %v2107, %v3521
        %v3610 = vxor.u32 %v3609, 2147483648
        %v3611 = vmul.f32 %v3610, 1.442695
        %v3612 = vpow.pop %v3611
        %v3613 = vadd.f32 %v3612, 1.0
        %v3614 = vrcp.pop %v3613
        %v3615 = vmul.f32 1.0, %v3614
        %v3616 = vadd.f32 %v2108, %v3523
        %v3617 = vxor.u32 %v3616, 2147483648
        %v3618 = vmul.f32 %v3617, 1.442695
        %v3619 = vpow.pop %v3618
        %v3620 = vadd.f32 %v3619, 1.0
        %v3621 = vrcp.pop %v3620
        %v3622 = vmul.f32 1.0, %v3621
        %v3623 = vmul.f32 %v3615, %v3562
        %v3624 = vadd.f32 %v2109, %v3623
        %v3625 = vtanh.pop %v3624
        %v3626 = vadd.f32 %v2176, %v3564
        %v3627 = vxor.u32 %v3626, 2147483648
        %v3628 = vmul.f32 %v3627, 1.442695
        %v3629 = vpow.pop %v3628
        %v3630 = vadd.f32 %v3629, 1.0
        %v3631 = vrcp.pop %v3630
        %v3632 = vmul.f32 1.0, %v3631
        %v3633 = vadd.f32 %v2177, %v3603
        %v3634 = vxor.u32 %v3633, 2147483648
        %v3635 = vmul.f32 %v3634, 1.442695
        %v3636 = vpow.pop %v3635
        %v3637 = vadd.f32 %v3636, 1.0
        %v3638 = vrcp.pop %v3637
        %v3639 = vmul.f32 1.0, %v3638
        %v3640 = vmul.f32 %v3632, %v3605
        %v3641 = vadd.f32 %v2178, %v3640
        %v3642 = vtanh.pop %v3641
        %v3643 = vsub.f32 1.0, %v3622
        %v3644 = vmul.f32 %v3643, %v3625
        %v3645 = vmul.f32 %v3622, %v3479
        %v3646 = vadd.f32 %v3644, %v3645
        %v3647 = vsub.f32 1.0, %v3639
        %v3648 = vmul.f32 %v3647, %v3642
        %v3649 = vmul.f32 %v3639, %v3483
        %v3650 = vadd.f32 %v3648, %v3649
        %v3651 = vpack.c.bf16 %v3646, %v3646
        %v3652 = vpack.c.bf16 %v3650, %v3650
        %3653 = vmatprep.subr.bf16.mxu0 %v2794
        %3654 = vmatpush1.bf16.msra.mxu0 %v2793
        %3655 = vmatprep.subr.bf16.mxu0 %v2800
        %3656 = vmatpush1.bf16.msra.mxu0 %v2799
        %3657 = vmatprep.subr.bf16.mxu0 %v2806
        %3658 = vmatpush1.bf16.msra.mxu0 %v2805
        %3659 = vmatprep.subr.bf16.mxu0 %v2812
        %3660 = vmatpush1.bf16.msra.mxu0 %v2811
        %3661 = vmatprep.subr.bf16.mxu0 %v2818
        %3662 = vmatpush1.bf16.msra.mxu0 %v2817
        %3663 = vmatprep.subr.bf16.mxu0 %v2824
        %3664 = vmatpush1.bf16.msra.mxu0 %v2823
        %3665 = vmatprep.subr.bf16.mxu0 %v2830
        %3666 = vmatpush1.bf16.msra.mxu0 %v2829
        %3667 = vmatprep.subr.bf16.mxu0 %v2836
        %3668 = vmatpush1.bf16.msra.mxu0 %v2835
        %3669 = vmatprep.subr.bf16.mxu0 %v2842
        %3670 = vmatpush1.bf16.msra.mxu0 %v2841
        %3671 = vmatprep.subr.bf16.mxu0 %v2848
        %3672 = vmatpush1.bf16.msra.mxu0 %v2847
        %3673 = vmatprep.subr.bf16.mxu0 %v2854
        %3674 = vmatpush1.bf16.msra.mxu0 %v2853
        %3675 = vmatprep.subr.bf16.mxu0 %v2860
        %3676 = vmatpush1.bf16.msra.mxu0 %v2859
        %3677 = vmatprep.subr.bf16.mxu0 %v2866
        %3678 = vmatpush1.bf16.msra.mxu0 %v2865
        %3679 = vmatprep.subr.bf16.mxu0 %v2872
        %3680 = vmatpush1.bf16.msra.mxu0 %v2871
        %3681 = vmatprep.subr.bf16.mxu0 %v2878
        %3682 = vmatpush1.bf16.msra.mxu0 %v2877
        %3683 = vmatprep.subr.bf16.mxu0 %v2884
        %3684 = vmatpush1.bf16.msra.mxu0 %v2883
        %3685 = vmatprep.mubr.bf16.mxu0 %v3652
        %3686 = vmatmul.mubr.bf16.gmra.mrb[0].mxu0 %v3651
        %v3687 = vpop.f32.mrb[0].mxu0
        %v3688 = vadd.f32 %v2478, %v3687
        %v3689 = vpop.f32.mrb[0].mxu0
        %v3690 = vadd.f32 %v2482, %v3689
        %v3691 = vpop.f32.mrb[0].mxu0
        %v3692 = vpop.f32.mrb[0].mxu0
        %3693 = vdwg.mxu0
        %3694 = vmatprep.subr.bf16.mxu0 %v2796
        %3695 = vmatpush1.bf16.msra.mxu0 %v2795
        %3696 = vmatprep.subr.bf16.mxu0 %v2802
        %3697 = vmatpush1.bf16.msra.mxu0 %v2801
        %3698 = vmatprep.subr.bf16.mxu0 %v2808
        %3699 = vmatpush1.bf16.msra.mxu0 %v2807
        %3700 = vmatprep.subr.bf16.mxu0 %v2814
        %3701 = vmatpush1.bf16.msra.mxu0 %v2813
        %3702 = vmatprep.subr.bf16.mxu0 %v2820
        %3703 = vmatpush1.bf16.msra.mxu0 %v2819
        %3704 = vmatprep.subr.bf16.mxu0 %v2826
        %3705 = vmatpush1.bf16.msra.mxu0 %v2825
        %3706 = vmatprep.subr.bf16.mxu0 %v2832
        %3707 = vmatpush1.bf16.msra.mxu0 %v2831
        %3708 = vmatprep.subr.bf16.mxu0 %v2838
        %3709 = vmatpush1.bf16.msra.mxu0 %v2837
        %3710 = vmatprep.subr.bf16.mxu0 %v2844
        %3711 = vmatpush1.bf16.msra.mxu0 %v2843
        %3712 = vmatprep.subr.bf16.mxu0 %v2850
        %3713 = vmatpush1.bf16.msra.mxu0 %v2849
        %3714 = vmatprep.subr.bf16.mxu0 %v2856
        %3715 = vmatpush1.bf16.msra.mxu0 %v2855
        %3716 = vmatprep.subr.bf16.mxu0 %v2862
        %3717 = vmatpush1.bf16.msra.mxu0 %v2861
        %3718 = vmatprep.subr.bf16.mxu0 %v2868
        %3719 = vmatpush1.bf16.msra.mxu0 %v2867
        %3720 = vmatprep.subr.bf16.mxu0 %v2874
        %3721 = vmatpush1.bf16.msra.mxu0 %v2873
        %3722 = vmatprep.subr.bf16.mxu0 %v2880
        %3723 = vmatpush1.bf16.msra.mxu0 %v2879
        %3724 = vmatprep.subr.bf16.mxu0 %v2886
        %3725 = vmatpush1.bf16.msra.mxu0 %v2885
        %3726 = vmatprep.mubr.bf16.mxu0 %v3652
        %3727 = vmatmul.mubr.bf16.gmra.mrb[0].mxu0 %v3651
        %v3728 = vpop.f32.mrb[0].mxu0
        %v3729 = vadd.f32 %v2486, %v3728
        %v3730 = vpop.f32.mrb[0].mxu0
        %v3731 = vadd.f32 %v2490, %v3730
        %v3732 = vpop.f32.mrb[0].mxu0
        %v3733 = vpop.f32.mrb[0].mxu0
        %3734 = vdwg.mxu0
        %3735 = vmatprep.subr.bf16.mxu0 %v2798
        %3736 = vmatpush1.bf16.msra.mxu0 %v2797
        %3737 = vmatprep.subr.bf16.mxu0 %v2804
        %3738 = vmatpush1.bf16.msra.mxu0 %v2803
        %3739 = vmatprep.subr.bf16.mxu0 %v2810
        %3740 = vmatpush1.bf16.msra.mxu0 %v2809
        %3741 = vmatprep.subr.bf16.mxu0 %v2816
        %3742 = vmatpush1.bf16.msra.mxu0 %v2815
        %3743 = vmatprep.subr.bf16.mxu0 %v2822
        %3744 = vmatpush1.bf16.msra.mxu0 %v2821
        %3745 = vmatprep.subr.bf16.mxu0 %v2828
        %3746 = vmatpush1.bf16.msra.mxu0 %v2827
        %3747 = vmatprep.subr.bf16.mxu0 %v2834
        %3748 = vmatpush1.bf16.msra.mxu0 %v2833
        %3749 = vmatprep.subr.bf16.mxu0 %v2840
        %3750 = vmatpush1.bf16.msra.mxu0 %v2839
        %3751 = vmatprep.subr.bf16.mxu0 %v2846
        %3752 = vmatpush1.bf16.msra.mxu0 %v2845
        %3753 = vmatprep.subr.bf16.mxu0 %v2852
        %3754 = vmatpush1.bf16.msra.mxu0 %v2851
        %3755 = vmatprep.subr.bf16.mxu0 %v2858
        %3756 = vmatpush1.bf16.msra.mxu0 %v2857
        %3757 = vmatprep.subr.bf16.mxu0 %v2864
        %3758 = vmatpush1.bf16.msra.mxu0 %v2863
        %3759 = vmatprep.subr.bf16.mxu0 %v2870
        %3760 = vmatpush1.bf16.msra.mxu0 %v2869
        %3761 = vmatprep.subr.bf16.mxu0 %v2876
        %3762 = vmatpush1.bf16.msra.mxu0 %v2875
        %3763 = vmatprep.subr.bf16.mxu0 %v2882
        %3764 = vmatpush1.bf16.msra.mxu0 %v2881
        %3765 = vmatprep.subr.bf16.mxu0 %v2888
        %3766 = vmatpush1.bf16.msra.mxu0 %v2887
        %3767 = vmatprep.mubr.bf16.mxu0 %v3652
        %3768 = vmatmul.mubr.bf16.gmra.mrb[0].mxu0 %v3651
        %v3769 = vpop.f32.mrb[0].mxu0
        %v3770 = vadd.f32 %v2494, %v3769
        %v3771 = vpop.f32.mrb[0].mxu0
        %v3772 = vadd.f32 %v2498, %v3771
        %v3773 = vpop.f32.mrb[0].mxu0
        %v3774 = vpop.f32.mrb[0].mxu0
        %3775 = vdwg.mxu0
        %v3776 = vadd.f32 %v2173, %v3688
        %v3777 = vxor.u32 %v3776, 2147483648
        %v3778 = vmul.f32 %v3777, 1.442695
        %v3779 = vpow.pop %v3778
        %v3780 = vadd.f32 %v3779, 1.0
        %v3781 = vrcp.pop %v3780
        %v3782 = vmul.f32 1.0, %v3781
        %v3783 = vadd.f32 %v2174, %v3690
        %v3784 = vxor.u32 %v3783, 2147483648
        %v3785 = vmul.f32 %v3784, 1.442695
        %v3786 = vpow.pop %v3785
        %v3787 = vadd.f32 %v3786, 1.0
        %v3788 = vrcp.pop %v3787
        %v3789 = vmul.f32 1.0, %v3788
        %v3790 = vmul.f32 %v3782, %v3729
        %v3791 = vadd.f32 %v2175, %v3790
        %v3792 = vtanh.pop %v3791
        %v3793 = vadd.f32 %v2110, %v3731
        %v3794 = vxor.u32 %v3793, 2147483648
        %v3795 = vmul.f32 %v3794, 1.442695
        %v3796 = vpow.pop %v3795
        %v3797 = vadd.f32 %v3796, 1.0
        %v3798 = vrcp.pop %v3797
        %v3799 = vmul.f32 1.0, %v3798
        %v3800 = vadd.f32 %v2111, %v3770
        %v3801 = vxor.u32 %v3800, 2147483648
        %v3802 = vmul.f32 %v3801, 1.442695
        %v3803 = vpow.pop %v3802
        %v3804 = vadd.f32 %v3803, 1.0
        %v3805 = vrcp.pop %v3804
        %v3806 = vmul.f32 1.0, %v3805
        %v3807 = vmul.f32 %v3799, %v3772
        %v3808 = vadd.f32 %v2112, %v3807
        %v3809 = vtanh.pop %v3808
        %v3810 = vsub.f32 1.0, %v3789
        %v3811 = vmul.f32 %v3810, %v3792
        %v3812 = vmul.f32 %v3789, %v3646
        %v3813 = vadd.f32 %v3811, %v3812
        %v3814 = vsub.f32 1.0, %v3806
        %v3815 = vmul.f32 %v3814, %v3809
        %v3816 = vmul.f32 %v3806, %v3650
        %v3817 = vadd.f32 %v3815, %v3816
        %v3818 = vpack.c.bf16 %v3813, %v3813
        %v3819 = vpack.c.bf16 %v3817, %v3817
        %3820 = vmatprep.subr.bf16.mxu0 %v2794
        %3821 = vmatpush1.bf16.msra.mxu0 %v2793
        %3822 = vmatprep.subr.bf16.mxu0 %v2800
        %3823 = vmatpush1.bf16.msra.mxu0 %v2799
        %3824 = vmatprep.subr.bf16.mxu0 %v2806
        %3825 = vmatpush1.bf16.msra.mxu0 %v2805
        %3826 = vmatprep.subr.bf16.mxu0 %v2812
        %3827 = vmatpush1.bf16.msra.mxu0 %v2811
        %3828 = vmatprep.subr.bf16.mxu0 %v2818
        %3829 = vmatpush1.bf16.msra.mxu0 %v2817
        %3830 = vmatprep.subr.bf16.mxu0 %v2824
        %3831 = vmatpush1.bf16.msra.mxu0 %v2823
        %3832 = vmatprep.subr.bf16.mxu0 %v2830
        %3833 = vmatpush1.bf16.msra.mxu0 %v2829
        %3834 = vmatprep.subr.bf16.mxu0 %v2836
        %3835 = vmatpush1.bf16.msra.mxu0 %v2835
        %3836 = vmatprep.subr.bf16.mxu0 %v2842
        %3837 = vmatpush1.bf16.msra.mxu0 %v2841
        %3838 = vmatprep.subr.bf16.mxu0 %v2848
        %3839 = vmatpush1.bf16.msra.mxu0 %v2847
        %3840 = vmatprep.subr.bf16.mxu0 %v2854
        %3841 = vmatpush1.bf16.msra.mxu0 %v2853
        %3842 = vmatprep.subr.bf16.mxu0 %v2860
        %3843 = vmatpush1.bf16.msra.mxu0 %v2859
        %3844 = vmatprep.subr.bf16.mxu0 %v2866
        %3845 = vmatpush1.bf16.msra.mxu0 %v2865
        %3846 = vmatprep.subr.bf16.mxu0 %v2872
        %3847 = vmatpush1.bf16.msra.mxu0 %v2871
        %3848 = vmatprep.subr.bf16.mxu0 %v2878
        %3849 = vmatpush1.bf16.msra.mxu0 %v2877
        %3850 = vmatprep.subr.bf16.mxu0 %v2884
        %3851 = vmatpush1.bf16.msra.mxu0 %v2883
        %3852 = vmatprep.mubr.bf16.mxu0 %v3819
        %3853 = vmatmul.mubr.bf16.gmra.mrb[0].mxu0 %v3818
        %v3854 = vpop.f32.mrb[0].mxu0
        %v3855 = vadd.f32 %v2478, %v3854
        %v3856 = vpop.f32.mrb[0].mxu0
        %v3857 = vadd.f32 %v2482, %v3856
        %v3858 = vpop.f32.mrb[0].mxu0
        %v3859 = vpop.f32.mrb[0].mxu0
        %3860 = vdwg.mxu0
        %3861 = vmatprep.subr.bf16.mxu0 %v2796
        %3862 = vmatpush1.bf16.msra.mxu0 %v2795
        %3863 = vmatprep.subr.bf16.mxu0 %v2802
        %3864 = vmatpush1.bf16.msra.mxu0 %v2801
        %3865 = vmatprep.subr.bf16.mxu0 %v2808
        %3866 = vmatpush1.bf16.msra.mxu0 %v2807
        %3867 = vmatprep.subr.bf16.mxu0 %v2814
        %3868 = vmatpush1.bf16.msra.mxu0 %v2813
        %3869 = vmatprep.subr.bf16.mxu0 %v2820
        %3870 = vmatpush1.bf16.msra.mxu0 %v2819
        %3871 = vmatprep.subr.bf16.mxu0 %v2826
        %3872 = vmatpush1.bf16.msra.mxu0 %v2825
        %3873 = vmatprep.subr.bf16.mxu0 %v2832
        %3874 = vmatpush1.bf16.msra.mxu0 %v2831
        %3875 = vmatprep.subr.bf16.mxu0 %v2838
        %3876 = vmatpush1.bf16.msra.mxu0 %v2837
        %3877 = vmatprep.subr.bf16.mxu0 %v2844
        %3878 = vmatpush1.bf16.msra.mxu0 %v2843
        %3879 = vmatprep.subr.bf16.mxu0 %v2850
        %3880 = vmatpush1.bf16.msra.mxu0 %v2849
        %3881 = vmatprep.subr.bf16.mxu0 %v2856
        %3882 = vmatpush1.bf16.msra.mxu0 %v2855
        %3883 = vmatprep.subr.bf16.mxu0 %v2862
        %3884 = vmatpush1.bf16.msra.mxu0 %v2861
        %3885 = vmatprep.subr.bf16.mxu0 %v2868
        %3886 = vmatpush1.bf16.msra.mxu0 %v2867
        %3887 = vmatprep.subr.bf16.mxu0 %v2874
        %3888 = vmatpush1.bf16.msra.mxu0 %v2873
        %3889 = vmatprep.subr.bf16.mxu0 %v2880
        %3890 = vmatpush1.bf16.msra.mxu0 %v2879
        %3891 = vmatprep.subr.bf16.mxu0 %v2886
        %3892 = vmatpush1.bf16.msra.mxu0 %v2885
        %3893 = vmatprep.mubr.bf16.mxu0 %v3819
        %3894 = vmatmul.mubr.bf16.gmra.mrb[0].mxu0 %v3818
        %v3895 = vpop.f32.mrb[0].mxu0
        %v3896 = vadd.f32 %v2486, %v3895
        %v3897 = vpop.f32.mrb[0].mxu0
        %v3898 = vadd.f32 %v2490, %v3897
        %v3899 = vpop.f32.mrb[0].mxu0
        %v3900 = vpop.f32.mrb[0].mxu0
        %3901 = vdwg.mxu0
        %3902 = vmatprep.subr.bf16.mxu0 %v2798
        %3903 = vmatpush1.bf16.msra.mxu0 %v2797
        %3904 = vmatprep.subr.bf16.mxu0 %v2804
        %3905 = vmatpush1.bf16.msra.mxu0 %v2803
        %3906 = vmatprep.subr.bf16.mxu0 %v2810
        %3907 = vmatpush1.bf16.msra.mxu0 %v2809
        %3908 = vmatprep.subr.bf16.mxu0 %v2816
        %3909 = vmatpush1.bf16.msra.mxu0 %v2815
        %3910 = vmatprep.subr.bf16.mxu0 %v2822
        %3911 = vmatpush1.bf16.msra.mxu0 %v2821
        %3912 = vmatprep.subr.bf16.mxu0 %v2828
        %3913 = vmatpush1.bf16.msra.mxu0 %v2827
        %3914 = vmatprep.subr.bf16.mxu0 %v2834
        %3915 = vmatpush1.bf16.msra.mxu0 %v2833
        %3916 = vmatprep.subr.bf16.mxu0 %v2840
        %3917 = vmatpush1.bf16.msra.mxu0 %v2839
        %3918 = vmatprep.subr.bf16.mxu0 %v2846
        %3919 = vmatpush1.bf16.msra.mxu0 %v2845
        %3920 = vmatprep.subr.bf16.mxu0 %v2852
        %3921 = vmatpush1.bf16.msra.mxu0 %v2851
        %3922 = vmatprep.subr.bf16.mxu0 %v2858
        %3923 = vmatpush1.bf16.msra.mxu0 %v2857
        %3924 = vmatprep.subr.bf16.mxu0 %v2864
        %3925 = vmatpush1.bf16.msra.mxu0 %v2863
        %3926 = vmatprep.subr.bf16.mxu0 %v2870
        %3927 = vmatpush1.bf16.msra.mxu0 %v2869
        %3928 = vmatprep.subr.bf16.mxu0 %v2876
        %3929 = vmatpush1.bf16.msra.mxu0 %v2875
        %3930 = vmatprep.subr.bf16.mxu0 %v2882
        %3931 = vmatpush1.bf16.msra.mxu0 %v2881
        %3932 = vmatprep.subr.bf16.mxu0 %v2888
        %3933 = vmatpush1.bf16.msra.mxu0 %v2887
        %3934 = vmatprep.mubr.bf16.mxu0 %v3819
        %3935 = vmatmul.mubr.bf16.gmra.mrb[0].mxu0 %v3818
        %v3936 = vpop.f32.mrb[0].mxu0
        %v3937 = vadd.f32 %v2494, %v3936
        %v3938 = vpop.f32.mrb[0].mxu0
        %v3939 = vadd.f32 %v2498, %v3938
        %v3940 = vpop.f32.mrb[0].mxu0
        %v3941 = vpop.f32.mrb[0].mxu0
        %3942 = vdwg.mxu0
        %v3943 = vadd.f32 %v2239, %v3855
        %v3944 = vxor.u32 %v3943, 2147483648
        %v3945 = vmul.f32 %v3944, 1.442695
        %v3946 = vpow.pop %v3945
        %v3947 = vadd.f32 %v3946, 1.0
        %v3948 = vrcp.pop %v3947
        %v3949 = vmul.f32 1.0, %v3948
        %v3950 = vadd.f32 %v2240, %v3857
        %v3951 = vxor.u32 %v3950, 2147483648
        %v3952 = vmul.f32 %v3951, 1.442695
        %v3953 = vpow.pop %v3952
        %v3954 = vadd.f32 %v3953, 1.0
        %v3955 = vrcp.pop %v3954
        %v3956 = vmul.f32 1.0, %v3955
        %v3957 = vmul.f32 %v3949, %v3896
        %v3958 = vadd.f32 %v2241, %v3957
        %v3959 = vtanh.pop %v3958
        %v3960 = vadd.f32 %v2056, %v3898
        %v3961 = vxor.u32 %v3960, 2147483648
        %v3962 = vmul.f32 %v3961, 1.442695
        %v3963 = vpow.pop %v3962
        %v3964 = vadd.f32 %v3963, 1.0
        %v3965 = vrcp.pop %v3964
        %v3966 = vmul.f32 1.0, %v3965
        %v3967 = vadd.f32 %v2057, %v3937
        %v3968 = vxor.u32 %v3967, 2147483648
        %v3969 = vmul.f32 %v3968, 1.442695
        %v3970 = vpow.pop %v3969
        %v3971 = vadd.f32 %v3970, 1.0
        %v3972 = vrcp.pop %v3971
        %v3973 = vmul.f32 1.0, %v3972
        %v3974 = vmul.f32 %v3966, %v3939
        %v3975 = vadd.f32 %v2058, %v3974
        %v3976 = vtanh.pop %v3975
        %v3977 = vsub.f32 1.0, %v3956
        %v3978 = vmul.f32 %v3977, %v3959
        %v3979 = vmul.f32 %v3956, %v3813
        %v3980 = vadd.f32 %v3978, %v3979
        %v3981 = vsub.f32 1.0, %v3973
        %v3982 = vmul.f32 %v3981, %v3976
        %v3983 = vmul.f32 %v3973, %v3817
        %v3984 = vadd.f32 %v3982, %v3983
        %v3985 = vpack.c.bf16 %v3980, %v3980
        %v3986 = vpack.c.bf16 %v3984, %v3984
        %3987 = vmatprep.subr.bf16.mxu0 %v2794
        %3988 = vmatpush1.bf16.msra.mxu0 %v2793
        %3989 = vmatprep.subr.bf16.mxu0 %v2800
        %3990 = vmatpush1.bf16.msra.mxu0 %v2799
        %3991 = vmatprep.subr.bf16.mxu0 %v2806
        %3992 = vmatpush1.bf16.msra.mxu0 %v2805
        %3993 = vmatprep.subr.bf16.mxu0 %v2812
        %3994 = vmatpush1.bf16.msra.mxu0 %v2811
        %3995 = vmatprep.subr.bf16.mxu0 %v2818
        %3996 = vmatpush1.bf16.msra.mxu0 %v2817
        %3997 = vmatprep.subr.bf16.mxu0 %v2824
        %3998 = vmatpush1.bf16.msra.mxu0 %v2823
        %3999 = vmatprep.subr.bf16.mxu0 %v2830
        %4000 = vmatpush1.bf16.msra.mxu0 %v2829
        %4001 = vmatprep.subr.bf16.mxu0 %v2836
        %4002 = vmatpush1.bf16.msra.mxu0 %v2835
        %4003 = vmatprep.subr.bf16.mxu0 %v2842
        %4004 = vmatpush1.bf16.msra.mxu0 %v2841
        %4005 = vmatprep.subr.bf16.mxu0 %v2848
        %4006 = vmatpush1.bf16.msra.mxu0 %v2847
        %4007 = vmatprep.subr.bf16.mxu0 %v2854
        %4008 = vmatpush1.bf16.msra.mxu0 %v2853
        %4009 = vmatprep.subr.bf16.mxu0 %v2860
        %4010 = vmatpush1.bf16.msra.mxu0 %v2859
        %4011 = vmatprep.subr.bf16.mxu0 %v2866
        %4012 = vmatpush1.bf16.msra.mxu0 %v2865
        %4013 = vmatprep.subr.bf16.mxu0 %v2872
        %4014 = vmatpush1.bf16.msra.mxu0 %v2871
        %4015 = vmatprep.subr.bf16.mxu0 %v2878
        %4016 = vmatpush1.bf16.msra.mxu0 %v2877
        %4017 = vmatprep.subr.bf16.mxu0 %v2884
        %4018 = vmatpush1.bf16.msra.mxu0 %v2883
        %4019 = vmatprep.mubr.bf16.mxu0 %v3986
        %4020 = vmatmul.mubr.bf16.gmra.mrb[0].mxu0 %v3985
        %v4021 = vpop.f32.mrb[0].mxu0
        %v4022 = vadd.f32 %v2478, %v4021
        %v4023 = vpop.f32.mrb[0].mxu0
        %v4024 = vadd.f32 %v2482, %v4023
        %v4025 = vpop.f32.mrb[0].mxu0
        %v4026 = vpop.f32.mrb[0].mxu0
        %4027 = vdwg.mxu0
        %4028 = vmatprep.subr.bf16.mxu0 %v2796
        %4029 = vmatpush1.bf16.msra.mxu0 %v2795
        %4030 = vmatprep.subr.bf16.mxu0 %v2802
        %4031 = vmatpush1.bf16.msra.mxu0 %v2801
        %4032 = vmatprep.subr.bf16.mxu0 %v2808
        %4033 = vmatpush1.bf16.msra.mxu0 %v2807
        %4034 = vmatprep.subr.bf16.mxu0 %v2814
        %4035 = vmatpush1.bf16.msra.mxu0 %v2813
        %4036 = vmatprep.subr.bf16.mxu0 %v2820
        %4037 = vmatpush1.bf16.msra.mxu0 %v2819
        %4038 = vmatprep.subr.bf16.mxu0 %v2826
        %4039 = vmatpush1.bf16.msra.mxu0 %v2825
        %4040 = vmatprep.subr.bf16.mxu0 %v2832
        %4041 = vmatpush1.bf16.msra.mxu0 %v2831
        %4042 = vmatprep.subr.bf16.mxu0 %v2838
        %4043 = vmatpush1.bf16.msra.mxu0 %v2837
        %4044 = vmatprep.subr.bf16.mxu0 %v2844
        %4045 = vmatpush1.bf16.msra.mxu0 %v2843
        %4046 = vmatprep.subr.bf16.mxu0 %v2850
        %4047 = vmatpush1.bf16.msra.mxu0 %v2849
        %4048 = vmatprep.subr.bf16.mxu0 %v2856
        %4049 = vmatpush1.bf16.msra.mxu0 %v2855
        %4050 = vmatprep.subr.bf16.mxu0 %v2862
        %4051 = vmatpush1.bf16.msra.mxu0 %v2861
        %4052 = vmatprep.subr.bf16.mxu0 %v2868
        %4053 = vmatpush1.bf16.msra.mxu0 %v2867
        %4054 = vmatprep.subr.bf16.mxu0 %v2874
        %4055 = vmatpush1.bf16.msra.mxu0 %v2873
        %4056 = vmatprep.subr.bf16.mxu0 %v2880
        %4057 = vmatpush1.bf16.msra.mxu0 %v2879
        %4058 = vmatprep.subr.bf16.mxu0 %v2886
        %4059 = vmatpush1.bf16.msra.mxu0 %v2885
        %4060 = vmatprep.mubr.bf16.mxu0 %v3986
        %4061 = vmatmul.mubr.bf16.gmra.mrb[0].mxu0 %v3985
        %v4062 = vpop.f32.mrb[0].mxu0
        %v4063 = vadd.f32 %v2486, %v4062
        %v4064 = vpop.f32.mrb[0].mxu0
        %v4065 = vadd.f32 %v2490, %v4064
        %v4066 = vpop.f32.mrb[0].mxu0
        %v4067 = vpop.f32.mrb[0].mxu0
        %4068 = vdwg.mxu0
        %4069 = vmatprep.subr.bf16.mxu0 %v2798
        %4070 = vmatpush1.bf16.msra.mxu0 %v2797
        %4071 = vmatprep.subr.bf16.mxu0 %v2804
        %4072 = vmatpush1.bf16.msra.mxu0 %v2803
        %4073 = vmatprep.subr.bf16.mxu0 %v2810
        %4074 = vmatpush1.bf16.msra.mxu0 %v2809
        %4075 = vmatprep.subr.bf16.mxu0 %v2816
        %4076 = vmatpush1.bf16.msra.mxu0 %v2815
        %4077 = vmatprep.subr.bf16.mxu0 %v2822
        %4078 = vmatpush1.bf16.msra.mxu0 %v2821
        %4079 = vmatprep.subr.bf16.mxu0 %v2828
        %4080 = vmatpush1.bf16.msra.mxu0 %v2827
        %4081 = vmatprep.subr.bf16.mxu0 %v2834
        %4082 = vmatpush1.bf16.msra.mxu0 %v2833
        %4083 = vmatprep.subr.bf16.mxu0 %v2840
        %4084 = vmatpush1.bf16.msra.mxu0 %v2839
        %4085 = vmatprep.subr.bf16.mxu0 %v2846
        %4086 = vmatpush1.bf16.msra.mxu0 %v2845
        %4087 = vmatprep.subr.bf16.mxu0 %v2852
        %4088 = vmatpush1.bf16.msra.mxu0 %v2851
        %4089 = vmatprep.subr.bf16.mxu0 %v2858
        %4090 = vmatpush1.bf16.msra.mxu0 %v2857
        %4091 = vmatprep.subr.bf16.mxu0 %v2864
        %4092 = vmatpush1.bf16.msra.mxu0 %v2863
        %4093 = vmatprep.subr.bf16.mxu0 %v2870
        %4094 = vmatpush1.bf16.msra.mxu0 %v2869
        %4095 = vmatprep.subr.bf16.mxu0 %v2876
        %4096 = vmatpush1.bf16.msra.mxu0 %v2875
        %4097 = vmatprep.subr.bf16.mxu0 %v2882
        %4098 = vmatpush1.bf16.msra.mxu0 %v2881
        %4099 = vmatprep.subr.bf16.mxu0 %v2888
        %4100 = vmatpush1.bf16.msra.mxu0 %v2887
        %4101 = vmatprep.mubr.bf16.mxu0 %v3986
        %4102 = vmatmul.mubr.bf16.gmra.mrb[0].mxu0 %v3985
        %v4103 = vpop.f32.mrb[0].mxu0
        %v4104 = vadd.f32 %v2494, %v4103
        %v4105 = vpop.f32.mrb[0].mxu0
        %v4106 = vadd.f32 %v2498, %v4105
        %v4107 = vpop.f32.mrb[0].mxu0
        %v4108 = vpop.f32.mrb[0].mxu0
        %4109 = vdwg.mxu0
        %v4110 = vadd.f32 %v2305, %v4022
        %v4111 = vxor.u32 %v4110, 2147483648
        %v4112 = vmul.f32 %v4111, 1.442695
        %v4113 = vpow.pop %v4112
        %v4114 = vadd.f32 %v4113, 1.0
        %v4115 = vrcp.pop %v4114
        %v4116 = vmul.f32 1.0, %v4115
        %v4117 = vadd.f32 %v2306, %v4024
        %v4118 = vxor.u32 %v4117, 2147483648
        %v4119 = vmul.f32 %v4118, 1.442695
        %v4120 = vpow.pop %v4119
        %v4121 = vadd.f32 %v4120, 1.0
        %v4122 = vrcp.pop %v4121
        %v4123 = vmul.f32 1.0, %v4122
        %v4124 = vmul.f32 %v4116, %v4063
        %v4125 = vadd.f32 %v2307, %v4124
        %v4126 = vtanh.pop %v4125
        %v4127 = vadd.f32 %v2002, %v4065
        %v4128 = vxor.u32 %v4127, 2147483648
        %v4129 = vmul.f32 %v4128, 1.442695
        %v4130 = vpow.pop %v4129
        %v4131 = vadd.f32 %v4130, 1.0
        %v4132 = vrcp.pop %v4131
        %v4133 = vmul.f32 1.0, %v4132
        %v4134 = vadd.f32 %v2003, %v4104
        %v4135 = vxor.u32 %v4134, 2147483648
        %v4136 = vmul.f32 %v4135, 1.442695
        %v4137 = vpow.pop %v4136
        %v4138 = vadd.f32 %v4137, 1.0
        %v4139 = vrcp.pop %v4138
        %v4140 = vmul.f32 1.0, %v4139
        %v4141 = vmul.f32 %v4133, %v4106
        %v4142 = vadd.f32 %v2004, %v4141
        %v4143 = vtanh.pop %v4142
        %v4144 = vsub.f32 1.0, %v4123
        %v4145 = vmul.f32 %v4144, %v4126
        %v4146 = vmul.f32 %v4123, %v3980
        %v4147 = vadd.f32 %v4145, %v4146
        %v4148 = vsub.f32 1.0, %v4140
        %v4149 = vmul.f32 %v4148, %v4143
        %v4150 = vmul.f32 %v4140, %v3984
        %v4151 = vadd.f32 %v4149, %v4150
        %v4152 = vpack.c.bf16 %v4147, %v4147
        %v4153 = vpack.c.bf16 %v4151, %v4151
        %4154 = vmatprep.subr.bf16.mxu0 %v2794
        %4155 = vmatpush1.bf16.msra.mxu0 %v2793
        %4156 = vmatprep.subr.bf16.mxu0 %v2800
        %4157 = vmatpush1.bf16.msra.mxu0 %v2799
        %4158 = vmatprep.subr.bf16.mxu0 %v2806
        %4159 = vmatpush1.bf16.msra.mxu0 %v2805
        %4160 = vmatprep.subr.bf16.mxu0 %v2812
        %4161 = vmatpush1.bf16.msra.mxu0 %v2811
        %4162 = vmatprep.subr.bf16.mxu0 %v2818
        %4163 = vmatpush1.bf16.msra.mxu0 %v2817
        %4164 = vmatprep.subr.bf16.mxu0 %v2824
        %4165 = vmatpush1.bf16.msra.mxu0 %v2823
        %4166 = vmatprep.subr.bf16.mxu0 %v2830
        %4167 = vmatpush1.bf16.msra.mxu0 %v2829
        %4168 = vmatprep.subr.bf16.mxu0 %v2836
        %4169 = vmatpush1.bf16.msra.mxu0 %v2835
        %4170 = vmatprep.subr.bf16.mxu0 %v2842
        %4171 = vmatpush1.bf16.msra.mxu0 %v2841
        %4172 = vmatprep.subr.bf16.mxu0 %v2848
        %4173 = vmatpush1.bf16.msra.mxu0 %v2847
        %4174 = vmatprep.subr.bf16.mxu0 %v2854
        %4175 = vmatpush1.bf16.msra.mxu0 %v2853
        %4176 = vmatprep.subr.bf16.mxu0 %v2860
        %4177 = vmatpush1.bf16.msra.mxu0 %v2859
        %4178 = vmatprep.subr.bf16.mxu0 %v2866
        %4179 = vmatpush1.bf16.msra.mxu0 %v2865
        %4180 = vmatprep.subr.bf16.mxu0 %v2872
        %4181 = vmatpush1.bf16.msra.mxu0 %v2871
        %4182 = vmatprep.subr.bf16.mxu0 %v2878
        %4183 = vmatpush1.bf16.msra.mxu0 %v2877
        %4184 = vmatprep.subr.bf16.mxu0 %v2884
        %4185 = vmatpush1.bf16.msra.mxu0 %v2883
        %4186 = vmatprep.mubr.bf16.mxu0 %v4153
        %4187 = vmatmul.mubr.bf16.gmra.mrb[0].mxu0 %v4152
        %v4188 = vpop.f32.mrb[0].mxu0
        %v4189 = vadd.f32 %v2478, %v4188
        %v4190 = vpop.f32.mrb[0].mxu0
        %v4191 = vadd.f32 %v2482, %v4190
        %v4192 = vpop.f32.mrb[0].mxu0
        %v4193 = vpop.f32.mrb[0].mxu0
        %4194 = vdwg.mxu0
        %4195 = vmatprep.subr.bf16.mxu0 %v2796
        %4196 = vmatpush1.bf16.msra.mxu0 %v2795
        %4197 = vmatprep.subr.bf16.mxu0 %v2802
        %4198 = vmatpush1.bf16.msra.mxu0 %v2801
        %4199 = vmatprep.subr.bf16.mxu0 %v2808
        %4200 = vmatpush1.bf16.msra.mxu0 %v2807
        %4201 = vmatprep.subr.bf16.mxu0 %v2814
        %4202 = vmatpush1.bf16.msra.mxu0 %v2813
        %4203 = vmatprep.subr.bf16.mxu0 %v2820
        %4204 = vmatpush1.bf16.msra.mxu0 %v2819
        %4205 = vmatprep.subr.bf16.mxu0 %v2826
        %4206 = vmatpush1.bf16.msra.mxu0 %v2825
        %4207 = vmatprep.subr.bf16.mxu0 %v2832
        %4208 = vmatpush1.bf16.msra.mxu0 %v2831
        %4209 = vmatprep.subr.bf16.mxu0 %v2838
        %4210 = vmatpush1.bf16.msra.mxu0 %v2837
        %4211 = vmatprep.subr.bf16.mxu0 %v2844
        %4212 = vmatpush1.bf16.msra.mxu0 %v2843
        %4213 = vmatprep.subr.bf16.mxu0 %v2850
        %4214 = vmatpush1.bf16.msra.mxu0 %v2849
        %4215 = vmatprep.subr.bf16.mxu0 %v2856
        %4216 = vmatpush1.bf16.msra.mxu0 %v2855
        %4217 = vmatprep.subr.bf16.mxu0 %v2862
        %4218 = vmatpush1.bf16.msra.mxu0 %v2861
        %4219 = vmatprep.subr.bf16.mxu0 %v2868
        %4220 = vmatpush1.bf16.msra.mxu0 %v2867
        %4221 = vmatprep.subr.bf16.mxu0 %v2874
        %4222 = vmatpush1.bf16.msra.mxu0 %v2873
        %4223 = vmatprep.subr.bf16.mxu0 %v2880
        %4224 = vmatpush1.bf16.msra.mxu0 %v2879
        %4225 = vmatprep.subr.bf16.mxu0 %v2886
        %4226 = vmatpush1.bf16.msra.mxu0 %v2885
        %4227 = vmatprep.mubr.bf16.mxu0 %v4153
        %4228 = vmatmul.mubr.bf16.gmra.mrb[0].mxu0 %v4152
        %v4229 = vpop.f32.mrb[0].mxu0
        %v4230 = vadd.f32 %v2486, %v4229
        %v4231 = vpop.f32.mrb[0].mxu0
        %v4232 = vadd.f32 %v2490, %v4231
        %v4233 = vpop.f32.mrb[0].mxu0
        %v4234 = vpop.f32.mrb[0].mxu0
        %4235 = vdwg.mxu0
        %4236 = vmatprep.subr.bf16.mxu0 %v2798
        %4237 = vmatpush1.bf16.msra.mxu0 %v2797
        %4238 = vmatprep.subr.bf16.mxu0 %v2804
        %4239 = vmatpush1.bf16.msra.mxu0 %v2803
        %4240 = vmatprep.subr.bf16.mxu0 %v2810
        %4241 = vmatpush1.bf16.msra.mxu0 %v2809
        %4242 = vmatprep.subr.bf16.mxu0 %v2816
        %4243 = vmatpush1.bf16.msra.mxu0 %v2815
        %4244 = vmatprep.subr.bf16.mxu0 %v2822
        %4245 = vmatpush1.bf16.msra.mxu0 %v2821
        %4246 = vmatprep.subr.bf16.mxu0 %v2828
        %4247 = vmatpush1.bf16.msra.mxu0 %v2827
        %4248 = vmatprep.subr.bf16.mxu0 %v2834
        %4249 = vmatpush1.bf16.msra.mxu0 %v2833
        %4250 = vmatprep.subr.bf16.mxu0 %v2840
        %4251 = vmatpush1.bf16.msra.mxu0 %v2839
        %4252 = vmatprep.subr.bf16.mxu0 %v2846
        %4253 = vmatpush1.bf16.msra.mxu0 %v2845
        %4254 = vmatprep.subr.bf16.mxu0 %v2852
        %4255 = vmatpush1.bf16.msra.mxu0 %v2851
        %4256 = vmatprep.subr.bf16.mxu0 %v2858
        %4257 = vmatpush1.bf16.msra.mxu0 %v2857
        %4258 = vmatprep.subr.bf16.mxu0 %v2864
        %4259 = vmatpush1.bf16.msra.mxu0 %v2863
        %4260 = vmatprep.subr.bf16.mxu0 %v2870
        %4261 = vmatpush1.bf16.msra.mxu0 %v2869
        %4262 = vmatprep.subr.bf16.mxu0 %v2876
        %4263 = vmatpush1.bf16.msra.mxu0 %v2875
        %4264 = vmatprep.subr.bf16.mxu0 %v2882
        %4265 = vmatpush1.bf16.msra.mxu0 %v2881
        %4266 = vmatprep.subr.bf16.mxu0 %v2888
        %4267 = vmatpush1.bf16.msra.mxu0 %v2887
        %4268 = vmatprep.mubr.bf16.mxu0 %v4153
        %4269 = vmatmul.mubr.bf16.gmra.mrb[0].mxu0 %v4152
        %v4270 = vpop.f32.mrb[0].mxu0
        %v4271 = vadd.f32 %v2494, %v4270
        %v4272 = vpop.f32.mrb[0].mxu0
        %v4273 = vadd.f32 %v2498, %v4272
        %v4274 = vpop.f32.mrb[0].mxu0
        %v4275 = vpop.f32.mrb[0].mxu0
        %4276 = vdwg.mxu0
        %v4277 = vadd.f32 %v2371, %v4189
        %v4278 = vxor.u32 %v4277, 2147483648
        %v4279 = vmul.f32 %v4278, 1.442695
        %v4280 = vpow.pop %v4279
        %v4281 = vadd.f32 %v4280, 1.0
        %v4282 = vrcp.pop %v4281
        %v4283 = vmul.f32 1.0, %v4282
        %v4284 = vadd.f32 %v2372, %v4191
        %v4285 = vxor.u32 %v4284, 2147483648
        %v4286 = vmul.f32 %v4285, 1.442695
        %v4287 = vpow.pop %v4286
        %v4288 = vadd.f32 %v4287, 1.0
        %v4289 = vrcp.pop %v4288
        %v4290 = vmul.f32 1.0, %v4289
        %v4291 = vmul.f32 %v4283, %v4230
        %v4292 = vadd.f32 %v2373, %v4291
        %v4293 = vtanh.pop %v4292
        %v4294 = vadd.f32 %v1942, %v4232
        %v4295 = vxor.u32 %v4294, 2147483648
        %v4296 = vmul.f32 %v4295, 1.442695
        %v4297 = vpow.pop %v4296
        %v4298 = vadd.f32 %v4297, 1.0
        %v4299 = vrcp.pop %v4298
        %v4300 = vmul.f32 1.0, %v4299
        %v4301 = vadd.f32 %v1943, %v4271
        %v4302 = vxor.u32 %v4301, 2147483648
        %v4303 = vmul.f32 %v4302, 1.442695
        %v4304 = vpow.pop %v4303
        %v4305 = vadd.f32 %v4304, 1.0
        %v4306 = vrcp.pop %v4305
        %v4307 = vmul.f32 1.0, %v4306
        %v4308 = vmul.f32 %v4300, %v4273
        %v4309 = vadd.f32 %v1944, %v4308
        %v4310 = vtanh.pop %v4309
        %v4311 = vsub.f32 1.0, %v4290
        %v4312 = vmul.f32 %v4311, %v4293
        %v4313 = vmul.f32 %v4290, %v4147
        %v4314 = vadd.f32 %v4312, %v4313
        %v4315 = vsub.f32 1.0, %v4307
        %v4316 = vmul.f32 %v4315, %v4310
        %v4317 = vmul.f32 %v4307, %v4151
        %v4318 = vadd.f32 %v4316, %v4317
        %v4319 = vld [vmem:[%s18] sm:$0xf]
        %v4320 = vld [vmem:[%s18 + $0x4] sm:$0xf]
        %v4321 = vld [vmem:[%s18 + $0x8] sm:$0xf]
        %v4322 = vld [vmem:[%s18 + $0xc] sm:$0xf]
        %v4323 = vld [vmem:[%s18 + $0x10] sm:$0xf]
        %v4324 = vld [vmem:[%s18 + $0x14] sm:$0xf]
        %v4325 = vld [vmem:[%s18 + $0x18] sm:$0xf]
        %v4326 = vld [vmem:[%s18 + $0x1c] sm:$0xf]
        %v4327 = vld [vmem:[%s18 + $0x20] sm:$0xf]
        %v4328 = vld [vmem:[%s18 + $0x24] sm:$0xf]
        %v4329 = vld [vmem:[%s18 + $0x28] sm:$0xf]
        %v4330 = vld [vmem:[%s18 + $0x2c] sm:$0xf]
        %v4331 = vld [vmem:[%s18 + $0x30] sm:$0xf]
        %v4332 = vld [vmem:[%s18 + $0x34] sm:$0xf]
        %v4333 = vld [vmem:[%s18 + $0x38] sm:$0xf]
        %v4334 = vld [vmem:[%s18 + $0x3c] sm:$0xf]
        %v4335 = vld [vmem:[%s18 + $0x40] sm:$0xf]
        %v4336 = vld [vmem:[%s18 + $0x44] sm:$0xf]
        %v4337 = vld [vmem:[%s18 + $0x48] sm:$0xf]
        %v4338 = vld [vmem:[%s18 + $0x4c] sm:$0xf]
        %v4339 = vld [vmem:[%s18 + $0x50] sm:$0xf]
        %v4340 = vld [vmem:[%s18 + $0x54] sm:$0xf]
        %v4341 = vld [vmem:[%s18 + $0x58] sm:$0xf]
        %v4342 = vld [vmem:[%s18 + $0x5c] sm:$0xf]
        %v4343 = vld [vmem:[%s18 + $0x60] sm:$0xf]
        %v4344 = vld [vmem:[%s18 + $0x64] sm:$0xf]
        %v4345 = vld [vmem:[%s18 + $0x68] sm:$0xf]
        %v4346 = vld [vmem:[%s18 + $0x6c] sm:$0xf]
        %v4347 = vld [vmem:[%s18 + $0x70] sm:$0xf]
        %v4348 = vld [vmem:[%s18 + $0x74] sm:$0xf]
        %v4349 = vld [vmem:[%s18 + $0x78] sm:$0xf]
        %v4350 = vld [vmem:[%s18 + $0x7c] sm:$0xf]
        %v4351 = vpack.c.bf16 %v4314, %v4314
        %v4352 = vpack.c.bf16 %v4318, %v4318
        %v4353 = vld [vmem:[%s19] sm:$0x1]
        %v4355 = vlaneseq
        %v4356 = vshrl.u32 %v4355, 7
        %v4357 = vsub.s32 0, %v4356
        %v4358 = vrot.slane %v4353, %v4357
        %v4392 = vunpack.c.l.b16 %v4319
        %v4393 = vunpack.c.l.b16 %v4320
        %v4394 = vunpack.c.l.b16 %v4321
        %v4395 = vunpack.c.l.b16 %v4322
        %v4396 = vunpack.c.l.b16 %v4323
        %v4397 = vunpack.c.l.b16 %v4324
        %v4398 = vunpack.c.l.b16 %v4325
        %v4399 = vunpack.c.l.b16 %v4326
        %v4400 = vunpack.c.l.b16 %v4327
        %v4401 = vunpack.c.l.b16 %v4328
        %v4402 = vunpack.c.l.b16 %v4329
        %v4403 = vunpack.c.l.b16 %v4330
        %v4404 = vunpack.c.l.b16 %v4331
        %v4405 = vunpack.c.l.b16 %v4332
        %v4406 = vunpack.c.l.b16 %v4333
        %v4407 = vunpack.c.l.b16 %v4334
        %v4408 = vunpack.c.l.b16 %v4335
        %v4409 = vunpack.c.l.b16 %v4336
        %v4410 = vunpack.c.l.b16 %v4337
        %v4411 = vunpack.c.l.b16 %v4338
        %v4412 = vunpack.c.l.b16 %v4339
        %v4413 = vunpack.c.l.b16 %v4340
        %v4414 = vunpack.c.l.b16 %v4341
        %v4415 = vunpack.c.l.b16 %v4342
        %v4416 = vunpack.c.l.b16 %v4343
        %v4417 = vunpack.c.l.b16 %v4344
        %v4418 = vunpack.c.l.b16 %v4345
        %v4419 = vunpack.c.l.b16 %v4346
        %v4420 = vunpack.c.l.b16 %v4347
        %v4421 = vunpack.c.l.b16 %v4348
        %v4422 = vunpack.c.l.b16 %v4349
        %v4423 = vunpack.c.l.b16 %v4350
        %v4424 = vpack.c.b16 %v4393, %v4392
        %v4425 = vpack.c.b16 %v4395, %v4394
        %v4426 = vpack.c.b16 %v4397, %v4396
        %v4427 = vpack.c.b16 %v4399, %v4398
        %v4428 = vpack.c.b16 %v4401, %v4400
        %v4429 = vpack.c.b16 %v4403, %v4402
        %v4430 = vpack.c.b16 %v4405, %v4404
        %v4431 = vpack.c.b16 %v4407, %v4406
        %v4432 = vpack.c.b16 %v4409, %v4408
        %v4433 = vpack.c.b16 %v4411, %v4410
        %v4434 = vpack.c.b16 %v4413, %v4412
        %v4435 = vpack.c.b16 %v4415, %v4414
        %v4436 = vpack.c.b16 %v4417, %v4416
        %v4437 = vpack.c.b16 %v4419, %v4418
        %v4438 = vpack.c.b16 %v4421, %v4420
        %v4439 = vpack.c.b16 %v4423, %v4422
        %4456 = vmatprep.subr.bf16.mxu0 0
        %4457 = vmatpush1.bf16.msra.mxu0 %v4424
        %4458 = vmatprep.subr.bf16.mxu0 0
        %4459 = vmatpush1.bf16.msra.mxu0 %v4425
        %4460 = vmatprep.subr.bf16.mxu0 0
        %4461 = vmatpush1.bf16.msra.mxu0 %v4426
        %4462 = vmatprep.subr.bf16.mxu0 0
        %4463 = vmatpush1.bf16.msra.mxu0 %v4427
        %4464 = vmatprep.subr.bf16.mxu0 0
        %4465 = vmatpush1.bf16.msra.mxu0 %v4428
        %4466 = vmatprep.subr.bf16.mxu0 0
        %4467 = vmatpush1.bf16.msra.mxu0 %v4429
        %4468 = vmatprep.subr.bf16.mxu0 0
        %4469 = vmatpush1.bf16.msra.mxu0 %v4430
        %4470 = vmatprep.subr.bf16.mxu0 0
        %4471 = vmatpush1.bf16.msra.mxu0 %v4431
        %4472 = vmatprep.subr.bf16.mxu0 0
        %4473 = vmatpush1.bf16.msra.mxu0 %v4432
        %4474 = vmatprep.subr.bf16.mxu0 0
        %4475 = vmatpush1.bf16.msra.mxu0 %v4433
        %4476 = vmatprep.subr.bf16.mxu0 0
        %4477 = vmatpush1.bf16.msra.mxu0 %v4434
        %4478 = vmatprep.subr.bf16.mxu0 0
        %4479 = vmatpush1.bf16.msra.mxu0 %v4435
        %4480 = vmatprep.subr.bf16.mxu0 0
        %4481 = vmatpush1.bf16.msra.mxu0 %v4436
        %4482 = vmatprep.subr.bf16.mxu0 0
        %4483 = vmatpush1.bf16.msra.mxu0 %v4437
        %4484 = vmatprep.subr.bf16.mxu0 0
        %4485 = vmatpush1.bf16.msra.mxu0 %v4438
        %4486 = vmatprep.subr.bf16.mxu0 0
        %4487 = vmatpush1.bf16.msra.mxu0 %v4439
        %4488 = vmatprep.mubr.bf16.mxu0 %v4352
        %4489 = vmatmul.mubr.bf16.gmra.mrb[0].mxu0 %v4351
        %v4490 = vpop.f32.mrb[0].mxu0
        %v4491 = vadd.f32 %v4358, %v4490
        %v4492 = vpop.f32.mrb[0].mxu0
        %v4493 = vpop.f32.mrb[0].mxu0
        %v4494 = vpop.f32.mrb[0].mxu0
        %4495 = vdwg.mxu0
        %4496 = vst [vmem:[%s767] sm:$0xf] %v4491
        %s4497 = sand.u32 %s479, 1
        %s4498 = scalar_lea.sflag [#allocation4], %s4497
        %s4499 = sand.u32 %s479, 1
        %s4500 = smul.addr %s4499, 4
        %s4501 = scalar_lea.vmem [#allocation17], %s4500
        // Predicated region
        $region137: #{tpu_custom_call.1} parent=99 // pred_check
          %p4502 = pneg %p489
        $region138: #{tpu_custom_call.1} parent=99 // pred_check_branch
          %4504 = sbr.rel (%p4502) target = $region140
        $region139: #{tpu_custom_call.1} parent=99 // pred_region
          %s4506 = ssub.s32 64, 64
          %4507 = vsyncadd %s4498, %s4506
          %s4508 = smul.addr %s41, 64
          %s4509 = scalar_lea.hbm %s20, %s4508
          %s4511 = sshll.u32 %s4501, 4
          %s4512 = int_to_ptr.vmem [resolvable:$true] %s4511
          %4514 = dma.vmem_to_hbm [thread:$0]  %s4512, 64, %s4509, %s4498
        $region140: #{tpu_custom_call.1} parent=99 // pred_fallthru
          _
      $region100: #{tpu_custom_call.1} parent=5 // pred_fallthru
        _
      %p4515 = scmp.le.s32.totalorder 2, %s36
      // Predicated region
      $region141: #{tpu_custom_call.1} parent=5 // pred_check
        %p4516 = pneg %p4515
      $region142: #{tpu_custom_call.1} parent=5 // pred_check_branch
        %4518 = sbr.rel (%p4516) target = $region144
      $region143: #{tpu_custom_call.1} parent=5 // pred_region
        %s4519 = ssub.s32 %s36, 2
        // Predicated region
        $region145: #{tpu_custom_call.1} parent=143 // pred_check
          %p4520 = pneg %p495
        $region146: #{tpu_custom_call.1} parent=143 // pred_check_branch
          %4522 = sbr.rel (%p4520) target = $region148
        $region147: #{tpu_custom_call.1} parent=143 // pred_region
          %s4523 = sand.u32 %s480, 1
          %s4524 = scalar_lea.sflag [#allocation4], %s4523
          %s4525 = sand.u32 %s480, 1
          %s4526 = smul.addr %s4525, 4
          %s4527 = scalar_lea.vmem [#allocation17], %s4526
          %4528 = dma.done %s4524, 64
        $region148: #{tpu_custom_call.1} parent=143 // pred_fallthru
          _
      $region144: #{tpu_custom_call.1} parent=5 // pred_fallthru
        _
    $region6: #{tpu_custom_call.1} parent=1 // loop_footer
      %s40 = sadd.s32 1, %s36
    $region7: #{tpu_custom_call.1} parent=1 // loop_footer_branch
      %35 = sbr.rel target = $region3
    $region8: #{tpu_custom_call.1} parent=1 // loop_exit
      _
    %4529 = vsyncpa [#allocation3], 1
    %s4530 = scalar_lea.sflag [#allocation3], 1
    %4531 = vsyncpa %s4530, 1
    %4532 = vsyncpa [#allocation6], 1
    %4533 = vsyncpa [#allocation9], 1
    %4534 = vsyncpa [#allocation12], 1
    %4535 = vsyncpa [#allocation15], 1
    %4536 = vsyncpa [#allocation4], 1
    %s4537 = scalar_lea.sflag [#allocation4], 1
    %4538 = vsyncpa %s4537, 1

</llo_original>
